<compile_context>
chip_gen: v5e
topology: v5e:2x2
jax: 0.10.0
libtpu: 0.0.40
codegen_flags: <defaults>
</compile_context>

<pallas_src>
import jax
import jax.numpy as jnp
from jax.experimental import pallas as pl
from jax.experimental.pallas import tpu as pltpu

# ----------------------------- config (small) -------------------------------
B, C, IMG, PATCH = 2, 3, 16, 8
HIDDEN, HEADS, INTER, LAYERS, PROJ = 64, 2, 128, 2, 64
HEAD_DIM = HIDDEN // HEADS
GRID_HW = IMG // PATCH
NUM_PATCHES = GRID_HW * GRID_HW
SEQ = NUM_PATCHES + 1
CPP = C * PATCH * PATCH
LN_EPS = 1e-5
SCALE = HEAD_DIM ** -0.5


# ----------------------------- kernel helpers -------------------------------

def _dot(a, b):
    """MXU matmul: bf16 inputs, f32 accumulate (matches fp16 reference precision)."""
    return jnp.dot(a.astype(jnp.bfloat16), b.astype(jnp.bfloat16),
                   preferred_element_type=jnp.float32)


def _ln(x, g, b):
    mu = jnp.mean(x, axis=-1, keepdims=True)
    var = jnp.mean(jnp.square(x - mu), axis=-1, keepdims=True)
    return (x - mu) * jax.lax.rsqrt(var + LN_EPS) * g + b


# ----------------------------- fused kernel ---------------------------------

def _clip_vision_kernel(
    patches_ref, patchw_ref, poscls_ref, preg_ref, preb_ref,
    ln1g_ref, ln1b_ref, wq_ref, bq_ref, wk_ref, bk_ref, wv_ref, bv_ref,
    wo_ref, ob_ref, ln2g_ref, ln2b_ref,
    fc1w_ref, fc1b_ref, fc2w_ref, fc2b_ref,
    postg_ref, postb_ref, projw_ref, out_ref,
):
    """Whole CLIPVisionModelWithProjection forward for one image, all in VMEM."""
    # Patch embedding.  Row 0 of `patches` is zero and the class embedding is
    # folded into row 0 of `poscls`, so this reproduces [CLS ; patches] + pos.
    hidden = _dot(patches_ref[0], patchw_ref[...]) + poscls_ref[...]     # (SEQ, H)
    hidden = _ln(hidden, preg_ref[...], preb_ref[...])                   # pre_layrnorm

    for l in range(LAYERS):   # static unroll (LAYERS=2): all ref indices static
        # ---------------- self-attention block ----------------
        residual = hidden
        hn = _ln(hidden, ln1g_ref[l], ln1b_ref[l])
        attn = jnp.zeros((SEQ, HIDDEN), jnp.float32)
        for hd in range(HEADS):   # heads = separate weight slabs -> no lane slicing
            i = l * HEADS + hd
            q = (_dot(hn, wq_ref[i]) + bq_ref[i]) * SCALE                # (SEQ, Dh)
            k = _dot(hn, wk_ref[i]) + bk_ref[i]
            v = _dot(hn, wv_ref[i]) + bv_ref[i]
            s = _dot(q, k.T)                                             # (SEQ, SEQ)
            s = s - jnp.max(s, axis=-1, keepdims=True)
            p = jnp.exp(s)
            p = p * pl.reciprocal(jnp.sum(p, axis=-1, keepdims=True), approx=True)
            ho = _dot(p, v)                                              # (SEQ, Dh)
            # out_proj(concat(heads)) == sum_h head_h @ o_w[h*Dh:(h+1)*Dh, :]
            attn = attn + _dot(ho, wo_ref[i])
        hidden = residual + attn + ob_ref[l]

        # ---------------- MLP block: fc1 -> quick_gelu -> fc2 ----------------
        residual = hidden
        hn = _ln(hidden, ln2g_ref[l], ln2b_ref[l])
        m = _dot(hn, fc1w_ref[l]) + fc1b_ref[l]
        m = m * jax.nn.sigmoid(1.702 * m)          # CLIP "quick_gelu"
        m = _dot(m, fc2w_ref[l]) + fc2b_ref[l]
        hidden = residual + m

    # pooled = CLS token -> post layernorm -> visual projection (no bias)
    pooled = _ln(hidden[0:1, :], postg_ref[...], postb_ref[...])         # (1, H)
    out_ref[0] = _dot(pooled, projw_ref[...])                            # (1, PROJ)


# ----------------------------- parameters -----------------------------------

def init_params(key):
    def nrm(k, shape, scale=0.02):
        return scale * jax.random.normal(k, shape, jnp.float32)

    keys = iter(jax.random.split(key, 256))
    p = {
        # conv2d(3, HIDDEN, kernel=PATCH, stride=PATCH, bias=False)
        "patch_w": nrm(next(keys), (HIDDEN, C, PATCH, PATCH)),
        "class_emb": nrm(next(keys), (HIDDEN,)),
        "pos_emb": nrm(next(keys), (SEQ, HIDDEN)),
        "pre_ln_g": jnp.ones((HIDDEN,), jnp.float32),
        "pre_ln_b": jnp.zeros((HIDDEN,), jnp.float32),
        "post_ln_g": jnp.ones((HIDDEN,), jnp.float32),
        "post_ln_b": jnp.zeros((HIDDEN,), jnp.float32),
        # visual_projection: Linear(HIDDEN, PROJ, bias=False) stored as (in, out)
        "proj_w": nrm(next(keys), (HIDDEN, PROJ)),
        "layers": [],
    }
    for _ in range(LAYERS):
        lyr = {
            "ln1_g": jnp.ones((HIDDEN,), jnp.float32),
            "ln1_b": jnp.zeros((HIDDEN,), jnp.float32),
            "q_w": nrm(next(keys), (HIDDEN, HIDDEN)),
            "q_b": jnp.zeros((HIDDEN,), jnp.float32),
            "k_w": nrm(next(keys), (HIDDEN, HIDDEN)),
            "k_b": jnp.zeros((HIDDEN,), jnp.float32),
            "v_w": nrm(next(keys), (HIDDEN, HIDDEN)),
            "v_b": jnp.zeros((HIDDEN,), jnp.float32),
            "o_w": nrm(next(keys), (HIDDEN, HIDDEN)),
            "o_b": jnp.zeros((HIDDEN,), jnp.float32),
            "ln2_g": jnp.ones((HIDDEN,), jnp.float32),
            "ln2_b": jnp.zeros((HIDDEN,), jnp.float32),
            "fc1_w": nrm(next(keys), (HIDDEN, INTER)),
            "fc1_b": jnp.zeros((INTER,), jnp.float32),
            "fc2_w": nrm(next(keys), (INTER, HIDDEN)),
            "fc2_b": jnp.zeros((HIDDEN,), jnp.float32),
        }
        p["layers"].append(lyr)
    return p


# ----------------------------- forward ---------------------------------------

def clip_image_encoder_forward(params, pixel_values):
    x = pixel_values.astype(jnp.float32)   # NCHW
    B_, C_, H_, W_ = x.shape
    gh, gw = H_ // PATCH, W_ // PATCH

    # Patch extraction (pure layout, stays in XLA): stride-PATCH conv with no
    # bias == matmul over (C, kh, kw)-flattened patches.
    patches = x.reshape(B_, C_, gh, PATCH, gw, PATCH)
    patches = patches.transpose(0, 2, 4, 1, 3, 5).reshape(B_, gh * gw, CPP)
    # Zero row in front = CLS slot (contributes 0 to the patch matmul).
    patches = jnp.pad(patches, ((0, 0), (1, 0), (0, 0)))          # (B, SEQ, CPP)

    w_patch = params["patch_w"].reshape(HIDDEN, CPP).T            # (CPP, HIDDEN)
    pos_cls = params["pos_emb"].at[0].add(params["class_emb"])    # (SEQ, HIDDEN)

    stk = lambda name: jnp.stack([lyr[name] for lyr in params["layers"]])
    ln1_g = stk("ln1_g")[:, None, :]
    ln1_b = stk("ln1_b")[:, None, :]
    ln2_g = stk("ln2_g")[:, None, :]
    ln2_b = stk("ln2_b")[:, None, :]
    o_b = stk("o_b")[:, None, :]
    fc1_w = stk("fc1_w")
    fc1_b = stk("fc1_b")[:, None, :]
    fc2_w = stk("fc2_w")
    fc2_b = stk("fc2_b")[:, None, :]

    def per_head_in(name):   # (L, H, H) (in,out) -> (L*HEADS, H, Dh)
        w = stk(name)
        return (w.reshape(LAYERS, HIDDEN, HEADS, HEAD_DIM)
                 .transpose(0, 2, 1, 3)
                 .reshape(LAYERS * HEADS, HIDDEN, HEAD_DIM))

    def per_head_bias(name):
        return stk(name).reshape(LAYERS * HEADS, 1, HEAD_DIM)

    wq, bq = per_head_in("q_w"), per_head_bias("q_b")
    wk, bk = per_head_in("k_w"), per_head_bias("k_b")
    wv, bv = per_head_in("v_w"), per_head_bias("v_b")
    wo = stk("o_w").reshape(LAYERS * HEADS, HEAD_DIM, HIDDEN)

    full2 = lambda shape: pl.BlockSpec(shape, lambda b: (0, 0))
    full3 = lambda shape: pl.BlockSpec(shape, lambda b: (0, 0, 0))

    out = pl.pallas_call(
        _clip_vision_kernel,
        grid=(B_,),
        in_specs=[
            pl.BlockSpec((1, SEQ, CPP), lambda b: (b, 0, 0)),     # per-image patches
            full2((CPP, HIDDEN)),                                 # patch_w
            full2((SEQ, HIDDEN)),                                 # pos + cls
            full2((1, HIDDEN)), full2((1, HIDDEN)),               # pre-LN g,b
            full3((LAYERS, 1, HIDDEN)), full3((LAYERS, 1, HIDDEN)),          # ln1
            full3((LAYERS * HEADS, HIDDEN, HEAD_DIM)), full3((LAYERS * HEADS, 1, HEAD_DIM)),  # q
            full3((LAYERS * HEADS, HIDDEN, HEAD_DIM)), full3((LAYERS * HEADS, 1, HEAD_DIM)),  # k
            full3((LAYERS * HEADS, HIDDEN, HEAD_DIM)), full3((LAYERS * HEADS, 1, HEAD_DIM)),  # v
            full3((LAYERS * HEADS, HEAD_DIM, HIDDEN)), full3((LAYERS, 1, HIDDEN)),            # o
            full3((LAYERS, 1, HIDDEN)), full3((LAYERS, 1, HIDDEN)),          # ln2
            full3((LAYERS, HIDDEN, INTER)), full3((LAYERS, 1, INTER)),       # fc1
            full3((LAYERS, INTER, HIDDEN)), full3((LAYERS, 1, HIDDEN)),      # fc2
            full2((1, HIDDEN)), full2((1, HIDDEN)),               # post-LN g,b
            full2((HIDDEN, PROJ)),                                # visual projection
        ],
        out_specs=pl.BlockSpec((1, 1, PROJ), lambda b: (b, 0, 0)),
        out_shape=jax.ShapeDtypeStruct((B_, 1, PROJ), jnp.float32),
        compiler_params=pltpu.CompilerParams(dimension_semantics=("parallel",)),
    )(
        patches, w_patch, pos_cls,
        params["pre_ln_g"].reshape(1, HIDDEN), params["pre_ln_b"].reshape(1, HIDDEN),
        ln1_g, ln1_b, wq, bq, wk, bk, wv, bv, wo, o_b, ln2_g, ln2_b,
        fc1_w, fc1_b, fc2_w, fc2_b,
        params["post_ln_g"].reshape(1, HIDDEN), params["post_ln_b"].reshape(1, HIDDEN),
        params["proj_w"],
    )
    # torch module runs the vision model in .half(); match output dtype.
    return out.reshape(B_, PROJ).astype(jnp.float16)


# ----------------------------- f32 reference ---------------------------------

def _reference_forward(params, pixel_values):
    x = pixel_values.astype(jnp.float32)
    B_, C_, H_, W_ = x.shape
    gh, gw = H_ // PATCH, W_ // PATCH
    patches = x.reshape(B_, C_, gh, PATCH, gw, PATCH)
    patches = patches.transpose(0, 2, 4, 1, 3, 5).reshape(B_, gh * gw, CPP)
    patch_emb = patches @ params["patch_w"].reshape(HIDDEN, CPP).T
    cls = jnp.broadcast_to(params["class_emb"][None, None, :], (B_, 1, HIDDEN))
    h = jnp.concatenate([cls, patch_emb], axis=1) + params["pos_emb"][None]

    def ln(x, g, b):
        mu = x.mean(-1, keepdims=True)
        var = ((x - mu) ** 2).mean(-1, keepdims=True)
        return (x - mu) * jax.lax.rsqrt(var + LN_EPS) * g + b

    h = ln(h, params["pre_ln_g"], params["pre_ln_b"])
    for lyr in params["layers"]:
        res = h
        hn = ln(h, lyr["ln1_g"], lyr["ln1_b"])
        q = (hn @ lyr["q_w"] + lyr["q_b"]) * SCALE
        k = hn @ lyr["k_w"] + lyr["k_b"]
        v = hn @ lyr["v_w"] + lyr["v_b"]
        split = lambda t: t.reshape(B_, SEQ, HEADS, HEAD_DIM).transpose(0, 2, 1, 3)
        q, k, v = split(q), split(k), split(v)
        s = jnp.einsum("bhqd,bhkd->bhqk", q, k)
        p = jax.nn.softmax(s, axis=-1)
        o = jnp.einsum("bhqk,bhkd->bhqd", p, v)
        o = o.transpose(0, 2, 1, 3).reshape(B_, SEQ, HIDDEN)
        h = res + (o @ lyr["o_w"] + lyr["o_b"])
        res = h
        hn = ln(h, lyr["ln2_g"], lyr["ln2_b"])
        m = hn @ lyr["fc1_w"] + lyr["fc1_b"]
        m = m * jax.nn.sigmoid(1.702 * m)
        h = res + (m @ lyr["fc2_w"] + lyr["fc2_b"])
    pooled = ln(h[:, 0, :], params["post_ln_g"], params["post_ln_b"])
    return pooled @ params["proj_w"]


# TODO(synk): PIL / CLIPImageProcessor preprocessing and checkpoint loading
# (load_submodels / unload_submodels) are host-side I/O with no Pallas
# equivalent; only the tensor forward path is implemented.

if __name__ == "__main__":
    key = jax.random.PRNGKey(0)
    pkey, xkey = jax.random.split(key)
    params = init_params(pkey)
    pixel_values = jax.random.normal(xkey, (B, C, IMG, IMG), jnp.float32)

    fwd = jax.jit(clip_image_encoder_forward)
    out = jax.block_until_ready(fwd(params, pixel_values))

    assert out.shape == (B, PROJ), out.shape
    assert out.dtype == jnp.float16, out.dtype
    assert bool(jnp.all(jnp.isfinite(out.astype(jnp.float32))))

    ref = _reference_forward(params, pixel_values)
    err = float(jnp.max(jnp.abs(out.astype(jnp.float32) - ref)))
    assert err < 5e-2, f"max abs err vs f32 reference: {err}"
    print("KERNEL_OK")
</pallas_src>

<mosaic_0001>
module attributes {stable_mosaic.version = 11 : i64} {
  func.func @_clip_vision_kernel(%arg0: i32, %arg1: memref<1x5x192xf32, #tpu.memory_space<vmem>>, %arg2: memref<192x64xf32, #tpu.memory_space<vmem>>, %arg3: memref<5x64xf32, #tpu.memory_space<vmem>>, %arg4: memref<1x64xf32, #tpu.memory_space<vmem>>, %arg5: memref<1x64xf32, #tpu.memory_space<vmem>>, %arg6: memref<2x1x64xf32, #tpu.memory_space<vmem>>, %arg7: memref<2x1x64xf32, #tpu.memory_space<vmem>>, %arg8: memref<4x64x32xf32, #tpu.memory_space<vmem>>, %arg9: memref<4x1x32xf32, #tpu.memory_space<vmem>>, %arg10: memref<4x64x32xf32, #tpu.memory_space<vmem>>, %arg11: memref<4x1x32xf32, #tpu.memory_space<vmem>>, %arg12: memref<4x64x32xf32, #tpu.memory_space<vmem>>, %arg13: memref<4x1x32xf32, #tpu.memory_space<vmem>>, %arg14: memref<4x32x64xf32, #tpu.memory_space<vmem>>, %arg15: memref<2x1x64xf32, #tpu.memory_space<vmem>>, %arg16: memref<2x1x64xf32, #tpu.memory_space<vmem>>, %arg17: memref<2x1x64xf32, #tpu.memory_space<vmem>>, %arg18: memref<2x64x128xf32, #tpu.memory_space<vmem>>, %arg19: memref<2x1x128xf32, #tpu.memory_space<vmem>>, %arg20: memref<2x128x64xf32, #tpu.memory_space<vmem>>, %arg21: memref<2x1x64xf32, #tpu.memory_space<vmem>>, %arg22: memref<1x64xf32, #tpu.memory_space<vmem>>, %arg23: memref<1x64xf32, #tpu.memory_space<vmem>>, %arg24: memref<64x64xf32, #tpu.memory_space<vmem>>, %arg25: memref<1x1x64xf32, #tpu.memory_space<vmem>>) attributes {dimension_semantics = [#tpu.dimension_semantics<parallel>], iteration_bounds = array<i64: 2>, scalar_prefetch = 0 : i64, scratch_operands = 0 : i64, tpu.core_type = #tpu.core_type<tc>, window_params = [{transform_indices = @transform_0, window_bounds = array<i64: 1, 5, 192>}, {pipeline_mode = #tpu.pipeline_mode<synchronous>, transform_indices = @transform_1, window_bounds = array<i64: 192, 64>}, {pipeline_mode = #tpu.pipeline_mode<synchronous>, transform_indices = @transform_2, window_bounds = array<i64: 5, 64>}, {pipeline_mode = #tpu.pipeline_mode<synchronous>, transform_indices = @transform_3, window_bounds = array<i64: 1, 64>}, {pipeline_mode = #tpu.pipeline_mode<synchronous>, transform_indices = @transform_4, window_bounds = array<i64: 1, 64>}, {pipeline_mode = #tpu.pipeline_mode<synchronous>, transform_indices = @transform_5, window_bounds = array<i64: 2, 1, 64>}, {pipeline_mode = #tpu.pipeline_mode<synchronous>, transform_indices = @transform_6, window_bounds = array<i64: 2, 1, 64>}, {pipeline_mode = #tpu.pipeline_mode<synchronous>, transform_indices = @transform_7, window_bounds = array<i64: 4, 64, 32>}, {pipeline_mode = #tpu.pipeline_mode<synchronous>, transform_indices = @transform_8, window_bounds = array<i64: 4, 1, 32>}, {pipeline_mode = #tpu.pipeline_mode<synchronous>, transform_indices = @transform_9, window_bounds = array<i64: 4, 64, 32>}, {pipeline_mode = #tpu.pipeline_mode<synchronous>, transform_indices = @transform_10, window_bounds = array<i64: 4, 1, 32>}, {pipeline_mode = #tpu.pipeline_mode<synchronous>, transform_indices = @transform_11, window_bounds = array<i64: 4, 64, 32>}, {pipeline_mode = #tpu.pipeline_mode<synchronous>, transform_indices = @transform_12, window_bounds = array<i64: 4, 1, 32>}, {pipeline_mode = #tpu.pipeline_mode<synchronous>, transform_indices = @transform_13, window_bounds = array<i64: 4, 32, 64>}, {pipeline_mode = #tpu.pipeline_mode<synchronous>, transform_indices = @transform_14, window_bounds = array<i64: 2, 1, 64>}, {pipeline_mode = #tpu.pipeline_mode<synchronous>, transform_indices = @transform_15, window_bounds = array<i64: 2, 1, 64>}, {pipeline_mode = #tpu.pipeline_mode<synchronous>, transform_indices = @transform_16, window_bounds = array<i64: 2, 1, 64>}, {pipeline_mode = #tpu.pipeline_mode<synchronous>, transform_indices = @transform_17, window_bounds = array<i64: 2, 64, 128>}, {pipeline_mode = #tpu.pipeline_mode<synchronous>, transform_indices = @transform_18, window_bounds = array<i64: 2, 1, 128>}, {pipeline_mode = #tpu.pipeline_mode<synchronous>, transform_indices = @transform_19, window_bounds = array<i64: 2, 128, 64>}, {pipeline_mode = #tpu.pipeline_mode<synchronous>, transform_indices = @transform_20, window_bounds = array<i64: 2, 1, 64>}, {pipeline_mode = #tpu.pipeline_mode<synchronous>, transform_indices = @transform_21, window_bounds = array<i64: 1, 64>}, {pipeline_mode = #tpu.pipeline_mode<synchronous>, transform_indices = @transform_22, window_bounds = array<i64: 1, 64>}, {pipeline_mode = #tpu.pipeline_mode<synchronous>, transform_indices = @transform_23, window_bounds = array<i64: 64, 64>}, {transform_indices = @transform_24, window_bounds = array<i64: 1, 1, 64>}]} {
    %c0 = arith.constant 0 : index
    %c0_0 = arith.constant 0 : index
    %c0_1 = arith.constant 0 : index
    %0 = vector.load %arg1[%c0, %c0_0, %c0_1] : memref<1x5x192xf32, #tpu.memory_space<vmem>>, vector<1x5x192xf32>
    %1 = vector.shape_cast %0 : vector<1x5x192xf32> to vector<5x192xf32>
    %c0_2 = arith.constant 0 : index
    %c0_3 = arith.constant 0 : index
    %2 = vector.load %arg2[%c0_2, %c0_3] : memref<192x64xf32, #tpu.memory_space<vmem>>, vector<192x64xf32>
    %3 = arith.truncf %1 : vector<5x192xf32> to vector<5x192xbf16>
    %4 = arith.truncf %2 : vector<192x64xf32> to vector<192x64xbf16>
    %cst = arith.constant dense<0.000000e+00> : vector<5x64xf32>
    %5 = tpu.matmul %3, %4, %cst {dimension_numbers = #tpu.dot_dimension_numbers<[1], [0], [0], [1], [0, 0, 1, 1], [], []>} : vector<5x192xbf16>, vector<192x64xbf16>, vector<5x64xf32> -> vector<5x64xf32>
    %c0_4 = arith.constant 0 : index
    %c0_5 = arith.constant 0 : index
    %6 = vector.load %arg3[%c0_4, %c0_5] : memref<5x64xf32, #tpu.memory_space<vmem>>, vector<5x64xf32>
    %7 = arith.addf %5, %6 : vector<5x64xf32>
    %c0_6 = arith.constant 0 : index
    %c0_7 = arith.constant 0 : index
    %8 = vector.load %arg4[%c0_6, %c0_7] : memref<1x64xf32, #tpu.memory_space<vmem>>, vector<1x64xf32>
    %c0_8 = arith.constant 0 : index
    %c0_9 = arith.constant 0 : index
    %9 = vector.load %arg5[%c0_8, %c0_9] : memref<1x64xf32, #tpu.memory_space<vmem>>, vector<1x64xf32>
    %cst_10 = arith.constant dense<0.000000e+00> : vector<5xf32>
    %10 = vector.multi_reduction <add>, %7, %cst_10 [1] : vector<5x64xf32> to vector<5xf32>
    %11 = vector.shape_cast %10 : vector<5xf32> to vector<5x1xf32>
    %cst_11 = arith.constant 6.400000e+01 : f32
    %12 = vector.broadcast %cst_11 : f32 to vector<5x1xf32>
    %13 = arith.divf %11, %12 : vector<5x1xf32>
    %14 = vector.broadcast %13 : vector<5x1xf32> to vector<5x64xf32>
    %15 = arith.subf %7, %14 : vector<5x64xf32>
    %16 = arith.mulf %15, %15 : vector<5x64xf32>
    %cst_12 = arith.constant dense<0.000000e+00> : vector<5xf32>
    %17 = vector.multi_reduction <add>, %16, %cst_12 [1] : vector<5x64xf32> to vector<5xf32>
    %18 = vector.shape_cast %17 : vector<5xf32> to vector<5x1xf32>
    %cst_13 = arith.constant 6.400000e+01 : f32
    %19 = vector.broadcast %cst_13 : f32 to vector<5x1xf32>
    %20 = arith.divf %18, %19 : vector<5x1xf32>
    %21 = vector.broadcast %13 : vector<5x1xf32> to vector<5x64xf32>
    %22 = arith.subf %7, %21 : vector<5x64xf32>
    %cst_14 = arith.constant 9.99999974E-6 : f32
    %23 = vector.broadcast %cst_14 : f32 to vector<5x1xf32>
    %24 = arith.addf %20, %23 : vector<5x1xf32>
    %25 = math.rsqrt %24 : vector<5x1xf32>
    %26 = vector.broadcast %25 : vector<5x1xf32> to vector<5x64xf32>
    %27 = arith.mulf %22, %26 : vector<5x64xf32>
    %28 = vector.broadcast %8 : vector<1x64xf32> to vector<5x64xf32>
    %29 = arith.mulf %27, %28 : vector<5x64xf32>
    %30 = vector.broadcast %9 : vector<1x64xf32> to vector<5x64xf32>
    %31 = arith.addf %29, %30 : vector<5x64xf32>
    %c0_15 = arith.constant 0 : index
    %c0_16 = arith.constant 0 : index
    %c0_17 = arith.constant 0 : index
    %32 = vector.load %arg6[%c0_15, %c0_16, %c0_17] : memref<2x1x64xf32, #tpu.memory_space<vmem>>, vector<1x1x64xf32>
    %33 = vector.shape_cast %32 : vector<1x1x64xf32> to vector<1x64xf32>
    %c0_18 = arith.constant 0 : index
    %c0_19 = arith.constant 0 : index
    %c0_20 = arith.constant 0 : index
    %34 = vector.load %arg7[%c0_18, %c0_19, %c0_20] : memref<2x1x64xf32, #tpu.memory_space<vmem>>, vector<1x1x64xf32>
    %35 = vector.shape_cast %34 : vector<1x1x64xf32> to vector<1x64xf32>
    %cst_21 = arith.constant dense<0.000000e+00> : vector<5xf32>
    %36 = vector.multi_reduction <add>, %31, %cst_21 [1] : vector<5x64xf32> to vector<5xf32>
    %37 = vector.shape_cast %36 : vector<5xf32> to vector<5x1xf32>
    %cst_22 = arith.constant 6.400000e+01 : f32
    %38 = vector.broadcast %cst_22 : f32 to vector<5x1xf32>
    %39 = arith.divf %37, %38 : vector<5x1xf32>
    %40 = vector.broadcast %39 : vector<5x1xf32> to vector<5x64xf32>
    %41 = arith.subf %31, %40 : vector<5x64xf32>
    %42 = arith.mulf %41, %41 : vector<5x64xf32>
    %cst_23 = arith.constant dense<0.000000e+00> : vector<5xf32>
    %43 = vector.multi_reduction <add>, %42, %cst_23 [1] : vector<5x64xf32> to vector<5xf32>
    %44 = vector.shape_cast %43 : vector<5xf32> to vector<5x1xf32>
    %cst_24 = arith.constant 6.400000e+01 : f32
    %45 = vector.broadcast %cst_24 : f32 to vector<5x1xf32>
    %46 = arith.divf %44, %45 : vector<5x1xf32>
    %47 = vector.broadcast %39 : vector<5x1xf32> to vector<5x64xf32>
    %48 = arith.subf %31, %47 : vector<5x64xf32>
    %cst_25 = arith.constant 9.99999974E-6 : f32
    %49 = vector.broadcast %cst_25 : f32 to vector<5x1xf32>
    %50 = arith.addf %46, %49 : vector<5x1xf32>
    %51 = math.rsqrt %50 : vector<5x1xf32>
    %52 = vector.broadcast %51 : vector<5x1xf32> to vector<5x64xf32>
    %53 = arith.mulf %48, %52 : vector<5x64xf32>
    %54 = vector.broadcast %33 : vector<1x64xf32> to vector<5x64xf32>
    %55 = arith.mulf %53, %54 : vector<5x64xf32>
    %56 = vector.broadcast %35 : vector<1x64xf32> to vector<5x64xf32>
    %57 = arith.addf %55, %56 : vector<5x64xf32>
    %cst_26 = arith.constant 0.000000e+00 : f32
    %58 = vector.broadcast %cst_26 : f32 to vector<5x64xf32>
    %c0_27 = arith.constant 0 : index
    %c0_28 = arith.constant 0 : index
    %c0_29 = arith.constant 0 : index
    %59 = vector.load %arg8[%c0_27, %c0_28, %c0_29] : memref<4x64x32xf32, #tpu.memory_space<vmem>>, vector<1x64x32xf32>
    %60 = vector.shape_cast %59 : vector<1x64x32xf32> to vector<64x32xf32>
    %61 = arith.truncf %57 : vector<5x64xf32> to vector<5x64xbf16>
    %62 = arith.truncf %60 : vector<64x32xf32> to vector<64x32xbf16>
    %cst_30 = arith.constant dense<0.000000e+00> : vector<5x32xf32>
    %63 = tpu.matmul %61, %62, %cst_30 {dimension_numbers = #tpu.dot_dimension_numbers<[1], [0], [0], [1], [0, 0, 1, 1], [], []>} : vector<5x64xbf16>, vector<64x32xbf16>, vector<5x32xf32> -> vector<5x32xf32>
    %c0_31 = arith.constant 0 : index
    %c0_32 = arith.constant 0 : index
    %c0_33 = arith.constant 0 : index
    %64 = vector.load %arg9[%c0_31, %c0_32, %c0_33] : memref<4x1x32xf32, #tpu.memory_space<vmem>>, vector<1x1x32xf32>
    %65 = vector.shape_cast %64 : vector<1x1x32xf32> to vector<1x32xf32>
    %66 = vector.broadcast %65 : vector<1x32xf32> to vector<5x32xf32>
    %67 = arith.addf %63, %66 : vector<5x32xf32>
    %cst_34 = arith.constant 0.176776692 : f32
    %68 = vector.broadcast %cst_34 : f32 to vector<5x32xf32>
    %69 = arith.mulf %67, %68 : vector<5x32xf32>
    %c0_35 = arith.constant 0 : index
    %c0_36 = arith.constant 0 : index
    %c0_37 = arith.constant 0 : index
    %70 = vector.load %arg10[%c0_35, %c0_36, %c0_37] : memref<4x64x32xf32, #tpu.memory_space<vmem>>, vector<1x64x32xf32>
    %71 = vector.shape_cast %70 : vector<1x64x32xf32> to vector<64x32xf32>
    %72 = arith.truncf %57 : vector<5x64xf32> to vector<5x64xbf16>
    %73 = arith.truncf %71 : vector<64x32xf32> to vector<64x32xbf16>
    %cst_38 = arith.constant dense<0.000000e+00> : vector<5x32xf32>
    %74 = tpu.matmul %72, %73, %cst_38 {dimension_numbers = #tpu.dot_dimension_numbers<[1], [0], [0], [1], [0, 0, 1, 1], [], []>} : vector<5x64xbf16>, vector<64x32xbf16>, vector<5x32xf32> -> vector<5x32xf32>
    %c0_39 = arith.constant 0 : index
    %c0_40 = arith.constant 0 : index
    %c0_41 = arith.constant 0 : index
    %75 = vector.load %arg11[%c0_39, %c0_40, %c0_41] : memref<4x1x32xf32, #tpu.memory_space<vmem>>, vector<1x1x32xf32>
    %76 = vector.shape_cast %75 : vector<1x1x32xf32> to vector<1x32xf32>
    %77 = vector.broadcast %76 : vector<1x32xf32> to vector<5x32xf32>
    %78 = arith.addf %74, %77 : vector<5x32xf32>
    %c0_42 = arith.constant 0 : index
    %c0_43 = arith.constant 0 : index
    %c0_44 = arith.constant 0 : index
    %79 = vector.load %arg12[%c0_42, %c0_43, %c0_44] : memref<4x64x32xf32, #tpu.memory_space<vmem>>, vector<1x64x32xf32>
    %80 = vector.shape_cast %79 : vector<1x64x32xf32> to vector<64x32xf32>
    %81 = arith.truncf %57 : vector<5x64xf32> to vector<5x64xbf16>
    %82 = arith.truncf %80 : vector<64x32xf32> to vector<64x32xbf16>
    %cst_45 = arith.constant dense<0.000000e+00> : vector<5x32xf32>
    %83 = tpu.matmul %81, %82, %cst_45 {dimension_numbers = #tpu.dot_dimension_numbers<[1], [0], [0], [1], [0, 0, 1, 1], [], []>} : vector<5x64xbf16>, vector<64x32xbf16>, vector<5x32xf32> -> vector<5x32xf32>
    %c0_46 = arith.constant 0 : index
    %c0_47 = arith.constant 0 : index
    %c0_48 = arith.constant 0 : index
    %84 = vector.load %arg13[%c0_46, %c0_47, %c0_48] : memref<4x1x32xf32, #tpu.memory_space<vmem>>, vector<1x1x32xf32>
    %85 = vector.shape_cast %84 : vector<1x1x32xf32> to vector<1x32xf32>
    %86 = vector.broadcast %85 : vector<1x32xf32> to vector<5x32xf32>
    %87 = arith.addf %83, %86 : vector<5x32xf32>
    %88 = tpu.transpose %78, [1, 0] : vector<5x32xf32> -> vector<32x5xf32>
    %89 = arith.truncf %69 : vector<5x32xf32> to vector<5x32xbf16>
    %90 = arith.truncf %88 : vector<32x5xf32> to vector<32x5xbf16>
    %cst_49 = arith.constant dense<0.000000e+00> : vector<5x5xf32>
    %91 = tpu.matmul %89, %90, %cst_49 {dimension_numbers = #tpu.dot_dimension_numbers<[1], [0], [0], [1], [0, 0, 1, 1], [], []>} : vector<5x32xbf16>, vector<32x5xbf16>, vector<5x5xf32> -> vector<5x5xf32>
    %cst_50 = arith.constant dense<0xFF800000> : vector<5xf32>
    %92 = vector.multi_reduction <maximumf>, %91, %cst_50 [1] : vector<5x5xf32> to vector<5xf32>
    %93 = vector.shape_cast %92 : vector<5xf32> to vector<5x1xf32>
    %94 = vector.broadcast %93 : vector<5x1xf32> to vector<5x5xf32>
    %95 = arith.subf %91, %94 : vector<5x5xf32>
    %96 = math.exp %95 : vector<5x5xf32>
    %cst_51 = arith.constant dense<0.000000e+00> : vector<5xf32>
    %97 = vector.multi_reduction <add>, %96, %cst_51 [1] : vector<5x5xf32> to vector<5xf32>
    %98 = vector.shape_cast %97 : vector<5xf32> to vector<5x1xf32>
    %99 = tpu.reciprocal %98 {approx = true} : vector<5x1xf32> -> vector<5x1xf32>
    %100 = vector.broadcast %99 : vector<5x1xf32> to vector<5x5xf32>
    %101 = arith.mulf %96, %100 : vector<5x5xf32>
    %102 = arith.truncf %101 : vector<5x5xf32> to vector<5x5xbf16>
    %103 = arith.truncf %87 : vector<5x32xf32> to vector<5x32xbf16>
    %cst_52 = arith.constant dense<0.000000e+00> : vector<5x32xf32>
    %104 = tpu.matmul %102, %103, %cst_52 {dimension_numbers = #tpu.dot_dimension_numbers<[1], [0], [0], [1], [0, 0, 1, 1], [], []>} : vector<5x5xbf16>, vector<5x32xbf16>, vector<5x32xf32> -> vector<5x32xf32>
    %c0_53 = arith.constant 0 : index
    %c0_54 = arith.constant 0 : index
    %c0_55 = arith.constant 0 : index
    %105 = vector.load %arg14[%c0_53, %c0_54, %c0_55] : memref<4x32x64xf32, #tpu.memory_space<vmem>>, vector<1x32x64xf32>
    %106 = vector.shape_cast %105 : vector<1x32x64xf32> to vector<32x64xf32>
    %107 = arith.truncf %104 : vector<5x32xf32> to vector<5x32xbf16>
    %108 = arith.truncf %106 : vector<32x64xf32> to vector<32x64xbf16>
    %cst_56 = arith.constant dense<0.000000e+00> : vector<5x64xf32>
    %109 = tpu.matmul %107, %108, %cst_56 {dimension_numbers = #tpu.dot_dimension_numbers<[1], [0], [0], [1], [0, 0, 1, 1], [], []>} : vector<5x32xbf16>, vector<32x64xbf16>, vector<5x64xf32> -> vector<5x64xf32>
    %110 = arith.addf %58, %109 : vector<5x64xf32>
    %c1 = arith.constant 1 : index
    %c0_57 = arith.constant 0 : index
    %c0_58 = arith.constant 0 : index
    %111 = vector.load %arg8[%c1, %c0_57, %c0_58] : memref<4x64x32xf32, #tpu.memory_space<vmem>>, vector<1x64x32xf32>
    %112 = vector.shape_cast %111 : vector<1x64x32xf32> to vector<64x32xf32>
    %113 = arith.truncf %57 : vector<5x64xf32> to vector<5x64xbf16>
    %114 = arith.truncf %112 : vector<64x32xf32> to vector<64x32xbf16>
    %cst_59 = arith.constant dense<0.000000e+00> : vector<5x32xf32>
    %115 = tpu.matmul %113, %114, %cst_59 {dimension_numbers = #tpu.dot_dimension_numbers<[1], [0], [0], [1], [0, 0, 1, 1], [], []>} : vector<5x64xbf16>, vector<64x32xbf16>, vector<5x32xf32> -> vector<5x32xf32>
    %c1_60 = arith.constant 1 : index
    %c0_61 = arith.constant 0 : index
    %c0_62 = arith.constant 0 : index
    %116 = vector.load %arg9[%c1_60, %c0_61, %c0_62] : memref<4x1x32xf32, #tpu.memory_space<vmem>>, vector<1x1x32xf32>
    %117 = vector.shape_cast %116 : vector<1x1x32xf32> to vector<1x32xf32>
    %118 = vector.broadcast %117 : vector<1x32xf32> to vector<5x32xf32>
    %119 = arith.addf %115, %118 : vector<5x32xf32>
    %cst_63 = arith.constant 0.176776692 : f32
    %120 = vector.broadcast %cst_63 : f32 to vector<5x32xf32>
    %121 = arith.mulf %119, %120 : vector<5x32xf32>
    %c1_64 = arith.constant 1 : index
    %c0_65 = arith.constant 0 : index
    %c0_66 = arith.constant 0 : index
    %122 = vector.load %arg10[%c1_64, %c0_65, %c0_66] : memref<4x64x32xf32, #tpu.memory_space<vmem>>, vector<1x64x32xf32>
    %123 = vector.shape_cast %122 : vector<1x64x32xf32> to vector<64x32xf32>
    %124 = arith.truncf %57 : vector<5x64xf32> to vector<5x64xbf16>
    %125 = arith.truncf %123 : vector<64x32xf32> to vector<64x32xbf16>
    %cst_67 = arith.constant dense<0.000000e+00> : vector<5x32xf32>
    %126 = tpu.matmul %124, %125, %cst_67 {dimension_numbers = #tpu.dot_dimension_numbers<[1], [0], [0], [1], [0, 0, 1, 1], [], []>} : vector<5x64xbf16>, vector<64x32xbf16>, vector<5x32xf32> -> vector<5x32xf32>
    %c1_68 = arith.constant 1 : index
    %c0_69 = arith.constant 0 : index
    %c0_70 = arith.constant 0 : index
    %127 = vector.load %arg11[%c1_68, %c0_69, %c0_70] : memref<4x1x32xf32, #tpu.memory_space<vmem>>, vector<1x1x32xf32>
    %128 = vector.shape_cast %127 : vector<1x1x32xf32> to vector<1x32xf32>
    %129 = vector.broadcast %128 : vector<1x32xf32> to vector<5x32xf32>
    %130 = arith.addf %126, %129 : vector<5x32xf32>
    %c1_71 = arith.constant 1 : index
    %c0_72 = arith.constant 0 : index
    %c0_73 = arith.constant 0 : index
    %131 = vector.load %arg12[%c1_71, %c0_72, %c0_73] : memref<4x64x32xf32, #tpu.memory_space<vmem>>, vector<1x64x32xf32>
    %132 = vector.shape_cast %131 : vector<1x64x32xf32> to vector<64x32xf32>
    %133 = arith.truncf %57 : vector<5x64xf32> to vector<5x64xbf16>
    %134 = arith.truncf %132 : vector<64x32xf32> to vector<64x32xbf16>
    %cst_74 = arith.constant dense<0.000000e+00> : vector<5x32xf32>
    %135 = tpu.matmul %133, %134, %cst_74 {dimension_numbers = #tpu.dot_dimension_numbers<[1], [0], [0], [1], [0, 0, 1, 1], [], []>} : vector<5x64xbf16>, vector<64x32xbf16>, vector<5x32xf32> -> vector<5x32xf32>
    %c1_75 = arith.constant 1 : index
    %c0_76 = arith.constant 0 : index
    %c0_77 = arith.constant 0 : index
    %136 = vector.load %arg13[%c1_75, %c0_76, %c0_77] : memref<4x1x32xf32, #tpu.memory_space<vmem>>, vector<1x1x32xf32>
    %137 = vector.shape_cast %136 : vector<1x1x32xf32> to vector<1x32xf32>
    %138 = vector.broadcast %137 : vector<1x32xf32> to vector<5x32xf32>
    %139 = arith.addf %135, %138 : vector<5x32xf32>
    %140 = tpu.transpose %130, [1, 0] : vector<5x32xf32> -> vector<32x5xf32>
    %141 = arith.truncf %121 : vector<5x32xf32> to vector<5x32xbf16>
    %142 = arith.truncf %140 : vector<32x5xf32> to vector<32x5xbf16>
    %cst_78 = arith.constant dense<0.000000e+00> : vector<5x5xf32>
    %143 = tpu.matmul %141, %142, %cst_78 {dimension_numbers = #tpu.dot_dimension_numbers<[1], [0], [0], [1], [0, 0, 1, 1], [], []>} : vector<5x32xbf16>, vector<32x5xbf16>, vector<5x5xf32> -> vector<5x5xf32>
    %cst_79 = arith.constant dense<0xFF800000> : vector<5xf32>
    %144 = vector.multi_reduction <maximumf>, %143, %cst_79 [1] : vector<5x5xf32> to vector<5xf32>
    %145 = vector.shape_cast %144 : vector<5xf32> to vector<5x1xf32>
    %146 = vector.broadcast %145 : vector<5x1xf32> to vector<5x5xf32>
    %147 = arith.subf %143, %146 : vector<5x5xf32>
    %148 = math.exp %147 : vector<5x5xf32>
    %cst_80 = arith.constant dense<0.000000e+00> : vector<5xf32>
    %149 = vector.multi_reduction <add>, %148, %cst_80 [1] : vector<5x5xf32> to vector<5xf32>
    %150 = vector.shape_cast %149 : vector<5xf32> to vector<5x1xf32>
    %151 = tpu.reciprocal %150 {approx = true} : vector<5x1xf32> -> vector<5x1xf32>
    %152 = vector.broadcast %151 : vector<5x1xf32> to vector<5x5xf32>
    %153 = arith.mulf %148, %152 : vector<5x5xf32>
    %154 = arith.truncf %153 : vector<5x5xf32> to vector<5x5xbf16>
    %155 = arith.truncf %139 : vector<5x32xf32> to vector<5x32xbf16>
    %cst_81 = arith.constant dense<0.000000e+00> : vector<5x32xf32>
    %156 = tpu.matmul %154, %155, %cst_81 {dimension_numbers = #tpu.dot_dimension_numbers<[1], [0], [0], [1], [0, 0, 1, 1], [], []>} : vector<5x5xbf16>, vector<5x32xbf16>, vector<5x32xf32> -> vector<5x32xf32>
    %c1_82 = arith.constant 1 : index
    %c0_83 = arith.constant 0 : index
    %c0_84 = arith.constant 0 : index
    %157 = vector.load %arg14[%c1_82, %c0_83, %c0_84] : memref<4x32x64xf32, #tpu.memory_space<vmem>>, vector<1x32x64xf32>
    %158 = vector.shape_cast %157 : vector<1x32x64xf32> to vector<32x64xf32>
    %159 = arith.truncf %156 : vector<5x32xf32> to vector<5x32xbf16>
    %160 = arith.truncf %158 : vector<32x64xf32> to vector<32x64xbf16>
    %cst_85 = arith.constant dense<0.000000e+00> : vector<5x64xf32>
    %161 = tpu.matmul %159, %160, %cst_85 {dimension_numbers = #tpu.dot_dimension_numbers<[1], [0], [0], [1], [0, 0, 1, 1], [], []>} : vector<5x32xbf16>, vector<32x64xbf16>, vector<5x64xf32> -> vector<5x64xf32>
    %162 = arith.addf %110, %161 : vector<5x64xf32>
    %163 = arith.addf %31, %162 : vector<5x64xf32>
    %c0_86 = arith.constant 0 : index
    %c0_87 = arith.constant 0 : index
    %c0_88 = arith.constant 0 : index
    %164 = vector.load %arg15[%c0_86, %c0_87, %c0_88] : memref<2x1x64xf32, #tpu.memory_space<vmem>>, vector<1x1x64xf32>
    %165 = vector.shape_cast %164 : vector<1x1x64xf32> to vector<1x64xf32>
    %166 = vector.broadcast %165 : vector<1x64xf32> to vector<5x64xf32>
    %167 = arith.addf %163, %166 : vector<5x64xf32>
    %c0_89 = arith.constant 0 : index
    %c0_90 = arith.constant 0 : index
    %c0_91 = arith.constant 0 : index
    %168 = vector.load %arg16[%c0_89, %c0_90, %c0_91] : memref<2x1x64xf32, #tpu.memory_space<vmem>>, vector<1x1x64xf32>
    %169 = vector.shape_cast %168 : vector<1x1x64xf32> to vector<1x64xf32>
    %c0_92 = arith.constant 0 : index
    %c0_93 = arith.constant 0 : index
    %c0_94 = arith.constant 0 : index
    %170 = vector.load %arg17[%c0_92, %c0_93, %c0_94] : memref<2x1x64xf32, #tpu.memory_space<vmem>>, vector<1x1x64xf32>
    %171 = vector.shape_cast %170 : vector<1x1x64xf32> to vector<1x64xf32>
    %cst_95 = arith.constant dense<0.000000e+00> : vector<5xf32>
    %172 = vector.multi_reduction <add>, %167, %cst_95 [1] : vector<5x64xf32> to vector<5xf32>
    %173 = vector.shape_cast %172 : vector<5xf32> to vector<5x1xf32>
    %cst_96 = arith.constant 6.400000e+01 : f32
    %174 = vector.broadcast %cst_96 : f32 to vector<5x1xf32>
    %175 = arith.divf %173, %174 : vector<5x1xf32>
    %176 = vector.broadcast %175 : vector<5x1xf32> to vector<5x64xf32>
    %177 = arith.subf %167, %176 : vector<5x64xf32>
    %178 = arith.mulf %177, %177 : vector<5x64xf32>
    %cst_97 = arith.constant dense<0.000000e+00> : vector<5xf32>
    %179 = vector.multi_reduction <add>, %178, %cst_97 [1] : vector<5x64xf32> to vector<5xf32>
    %180 = vector.shape_cast %179 : vector<5xf32> to vector<5x1xf32>
    %cst_98 = arith.constant 6.400000e+01 : f32
    %181 = vector.broadcast %cst_98 : f32 to vector<5x1xf32>
    %182 = arith.divf %180, %181 : vector<5x1xf32>
    %183 = vector.broadcast %175 : vector<5x1xf32> to vector<5x64xf32>
    %184 = arith.subf %167, %183 : vector<5x64xf32>
    %cst_99 = arith.constant 9.99999974E-6 : f32
    %185 = vector.broadcast %cst_99 : f32 to vector<5x1xf32>
    %186 = arith.addf %182, %185 : vector<5x1xf32>
    %187 = math.rsqrt %186 : vector<5x1xf32>
    %188 = vector.broadcast %187 : vector<5x1xf32> to vector<5x64xf32>
    %189 = arith.mulf %184, %188 : vector<5x64xf32>
    %190 = vector.broadcast %169 : vector<1x64xf32> to vector<5x64xf32>
    %191 = arith.mulf %189, %190 : vector<5x64xf32>
    %192 = vector.broadcast %171 : vector<1x64xf32> to vector<5x64xf32>
    %193 = arith.addf %191, %192 : vector<5x64xf32>
    %c0_100 = arith.constant 0 : index
    %c0_101 = arith.constant 0 : index
    %c0_102 = arith.constant 0 : index
    %194 = vector.load %arg18[%c0_100, %c0_101, %c0_102] : memref<2x64x128xf32, #tpu.memory_space<vmem>>, vector<1x64x128xf32>
    %195 = vector.shape_cast %194 : vector<1x64x128xf32> to vector<64x128xf32>
    %196 = arith.truncf %193 : vector<5x64xf32> to vector<5x64xbf16>
    %197 = arith.truncf %195 : vector<64x128xf32> to vector<64x128xbf16>
    %cst_103 = arith.constant dense<0.000000e+00> : vector<5x128xf32>
    %198 = tpu.matmul %196, %197, %cst_103 {dimension_numbers = #tpu.dot_dimension_numbers<[1], [0], [0], [1], [0, 0, 1, 1], [], []>} : vector<5x64xbf16>, vector<64x128xbf16>, vector<5x128xf32> -> vector<5x128xf32>
    %c0_104 = arith.constant 0 : index
    %c0_105 = arith.constant 0 : index
    %c0_106 = arith.constant 0 : index
    %199 = vector.load %arg19[%c0_104, %c0_105, %c0_106] : memref<2x1x128xf32, #tpu.memory_space<vmem>>, vector<1x1x128xf32>
    %200 = vector.shape_cast %199 : vector<1x1x128xf32> to vector<1x128xf32>
    %201 = vector.broadcast %200 : vector<1x128xf32> to vector<5x128xf32>
    %202 = arith.addf %198, %201 : vector<5x128xf32>
    %cst_107 = arith.constant 1.702000e+00 : f32
    %203 = vector.broadcast %cst_107 : f32 to vector<5x128xf32>
    %204 = arith.mulf %203, %202 : vector<5x128xf32>
    %205 = arith.negf %204 : vector<5x128xf32>
    %206 = math.exp %205 : vector<5x128xf32>
    %cst_108 = arith.constant 1.000000e+00 : f32
    %207 = vector.broadcast %cst_108 : f32 to vector<5x128xf32>
    %208 = arith.addf %207, %206 : vector<5x128xf32>
    %209 = arith.divf %207, %208 : vector<5x128xf32>
    %210 = arith.mulf %202, %209 : vector<5x128xf32>
    %c0_109 = arith.constant 0 : index
    %c0_110 = arith.constant 0 : index
    %c0_111 = arith.constant 0 : index
    %211 = vector.load %arg20[%c0_109, %c0_110, %c0_111] : memref<2x128x64xf32, #tpu.memory_space<vmem>>, vector<1x128x64xf32>
    %212 = vector.shape_cast %211 : vector<1x128x64xf32> to vector<128x64xf32>
    %213 = arith.truncf %210 : vector<5x128xf32> to vector<5x128xbf16>
    %214 = arith.truncf %212 : vector<128x64xf32> to vector<128x64xbf16>
    %cst_112 = arith.constant dense<0.000000e+00> : vector<5x64xf32>
    %215 = tpu.matmul %213, %214, %cst_112 {dimension_numbers = #tpu.dot_dimension_numbers<[1], [0], [0], [1], [0, 0, 1, 1], [], []>} : vector<5x128xbf16>, vector<128x64xbf16>, vector<5x64xf32> -> vector<5x64xf32>
    %c0_113 = arith.constant 0 : index
    %c0_114 = arith.constant 0 : index
    %c0_115 = arith.constant 0 : index
    %216 = vector.load %arg21[%c0_113, %c0_114, %c0_115] : memref<2x1x64xf32, #tpu.memory_space<vmem>>, vector<1x1x64xf32>
    %217 = vector.shape_cast %216 : vector<1x1x64xf32> to vector<1x64xf32>
    %218 = vector.broadcast %217 : vector<1x64xf32> to vector<5x64xf32>
    %219 = arith.addf %215, %218 : vector<5x64xf32>
    %220 = arith.addf %167, %219 : vector<5x64xf32>
    %c1_116 = arith.constant 1 : index
    %c0_117 = arith.constant 0 : index
    %c0_118 = arith.constant 0 : index
    %221 = vector.load %arg6[%c1_116, %c0_117, %c0_118] : memref<2x1x64xf32, #tpu.memory_space<vmem>>, vector<1x1x64xf32>
    %222 = vector.shape_cast %221 : vector<1x1x64xf32> to vector<1x64xf32>
    %c1_119 = arith.constant 1 : index
    %c0_120 = arith.constant 0 : index
    %c0_121 = arith.constant 0 : index
    %223 = vector.load %arg7[%c1_119, %c0_120, %c0_121] : memref<2x1x64xf32, #tpu.memory_space<vmem>>, vector<1x1x64xf32>
    %224 = vector.shape_cast %223 : vector<1x1x64xf32> to vector<1x64xf32>
    %cst_122 = arith.constant dense<0.000000e+00> : vector<5xf32>
    %225 = vector.multi_reduction <add>, %220, %cst_122 [1] : vector<5x64xf32> to vector<5xf32>
    %226 = vector.shape_cast %225 : vector<5xf32> to vector<5x1xf32>
    %cst_123 = arith.constant 6.400000e+01 : f32
    %227 = vector.broadcast %cst_123 : f32 to vector<5x1xf32>
    %228 = arith.divf %226, %227 : vector<5x1xf32>
    %229 = vector.broadcast %228 : vector<5x1xf32> to vector<5x64xf32>
    %230 = arith.subf %220, %229 : vector<5x64xf32>
    %231 = arith.mulf %230, %230 : vector<5x64xf32>
    %cst_124 = arith.constant dense<0.000000e+00> : vector<5xf32>
    %232 = vector.multi_reduction <add>, %231, %cst_124 [1] : vector<5x64xf32> to vector<5xf32>
    %233 = vector.shape_cast %232 : vector<5xf32> to vector<5x1xf32>
    %cst_125 = arith.constant 6.400000e+01 : f32
    %234 = vector.broadcast %cst_125 : f32 to vector<5x1xf32>
    %235 = arith.divf %233, %234 : vector<5x1xf32>
    %236 = vector.broadcast %228 : vector<5x1xf32> to vector<5x64xf32>
    %237 = arith.subf %220, %236 : vector<5x64xf32>
    %cst_126 = arith.constant 9.99999974E-6 : f32
    %238 = vector.broadcast %cst_126 : f32 to vector<5x1xf32>
    %239 = arith.addf %235, %238 : vector<5x1xf32>
    %240 = math.rsqrt %239 : vector<5x1xf32>
    %241 = vector.broadcast %240 : vector<5x1xf32> to vector<5x64xf32>
    %242 = arith.mulf %237, %241 : vector<5x64xf32>
    %243 = vector.broadcast %222 : vector<1x64xf32> to vector<5x64xf32>
    %244 = arith.mulf %242, %243 : vector<5x64xf32>
    %245 = vector.broadcast %224 : vector<1x64xf32> to vector<5x64xf32>
    %246 = arith.addf %244, %245 : vector<5x64xf32>
    %cst_127 = arith.constant 0.000000e+00 : f32
    %247 = vector.broadcast %cst_127 : f32 to vector<5x64xf32>
    %c2 = arith.constant 2 : index
    %c0_128 = arith.constant 0 : index
    %c0_129 = arith.constant 0 : index
    %248 = vector.load %arg8[%c2, %c0_128, %c0_129] : memref<4x64x32xf32, #tpu.memory_space<vmem>>, vector<1x64x32xf32>
    %249 = vector.shape_cast %248 : vector<1x64x32xf32> to vector<64x32xf32>
    %250 = arith.truncf %246 : vector<5x64xf32> to vector<5x64xbf16>
    %251 = arith.truncf %249 : vector<64x32xf32> to vector<64x32xbf16>
    %cst_130 = arith.constant dense<0.000000e+00> : vector<5x32xf32>
    %252 = tpu.matmul %250, %251, %cst_130 {dimension_numbers = #tpu.dot_dimension_numbers<[1], [0], [0], [1], [0, 0, 1, 1], [], []>} : vector<5x64xbf16>, vector<64x32xbf16>, vector<5x32xf32> -> vector<5x32xf32>
    %c2_131 = arith.constant 2 : index
    %c0_132 = arith.constant 0 : index
    %c0_133 = arith.constant 0 : index
    %253 = vector.load %arg9[%c2_131, %c0_132, %c0_133] : memref<4x1x32xf32, #tpu.memory_space<vmem>>, vector<1x1x32xf32>
    %254 = vector.shape_cast %253 : vector<1x1x32xf32> to vector<1x32xf32>
    %255 = vector.broadcast %254 : vector<1x32xf32> to vector<5x32xf32>
    %256 = arith.addf %252, %255 : vector<5x32xf32>
    %cst_134 = arith.constant 0.176776692 : f32
    %257 = vector.broadcast %cst_134 : f32 to vector<5x32xf32>
    %258 = arith.mulf %256, %257 : vector<5x32xf32>
    %c2_135 = arith.constant 2 : index
    %c0_136 = arith.constant 0 : index
    %c0_137 = arith.constant 0 : index
    %259 = vector.load %arg10[%c2_135, %c0_136, %c0_137] : memref<4x64x32xf32, #tpu.memory_space<vmem>>, vector<1x64x32xf32>
    %260 = vector.shape_cast %259 : vector<1x64x32xf32> to vector<64x32xf32>
    %261 = arith.truncf %246 : vector<5x64xf32> to vector<5x64xbf16>
    %262 = arith.truncf %260 : vector<64x32xf32> to vector<64x32xbf16>
    %cst_138 = arith.constant dense<0.000000e+00> : vector<5x32xf32>
    %263 = tpu.matmul %261, %262, %cst_138 {dimension_numbers = #tpu.dot_dimension_numbers<[1], [0], [0], [1], [0, 0, 1, 1], [], []>} : vector<5x64xbf16>, vector<64x32xbf16>, vector<5x32xf32> -> vector<5x32xf32>
    %c2_139 = arith.constant 2 : index
    %c0_140 = arith.constant 0 : index
    %c0_141 = arith.constant 0 : index
    %264 = vector.load %arg11[%c2_139, %c0_140, %c0_141] : memref<4x1x32xf32, #tpu.memory_space<vmem>>, vector<1x1x32xf32>
    %265 = vector.shape_cast %264 : vector<1x1x32xf32> to vector<1x32xf32>
    %266 = vector.broadcast %265 : vector<1x32xf32> to vector<5x32xf32>
    %267 = arith.addf %263, %266 : vector<5x32xf32>
    %c2_142 = arith.constant 2 : index
    %c0_143 = arith.constant 0 : index
    %c0_144 = arith.constant 0 : index
    %268 = vector.load %arg12[%c2_142, %c0_143, %c0_144] : memref<4x64x32xf32, #tpu.memory_space<vmem>>, vector<1x64x32xf32>
    %269 = vector.shape_cast %268 : vector<1x64x32xf32> to vector<64x32xf32>
    %270 = arith.truncf %246 : vector<5x64xf32> to vector<5x64xbf16>
    %271 = arith.truncf %269 : vector<64x32xf32> to vector<64x32xbf16>
    %cst_145 = arith.constant dense<0.000000e+00> : vector<5x32xf32>
    %272 = tpu.matmul %270, %271, %cst_145 {dimension_numbers = #tpu.dot_dimension_numbers<[1], [0], [0], [1], [0, 0, 1, 1], [], []>} : vector<5x64xbf16>, vector<64x32xbf16>, vector<5x32xf32> -> vector<5x32xf32>
    %c2_146 = arith.constant 2 : index
    %c0_147 = arith.constant 0 : index
    %c0_148 = arith.constant 0 : index
    %273 = vector.load %arg13[%c2_146, %c0_147, %c0_148] : memref<4x1x32xf32, #tpu.memory_space<vmem>>, vector<1x1x32xf32>
    %274 = vector.shape_cast %273 : vector<1x1x32xf32> to vector<1x32xf32>
    %275 = vector.broadcast %274 : vector<1x32xf32> to vector<5x32xf32>
    %276 = arith.addf %272, %275 : vector<5x32xf32>
    %277 = tpu.transpose %267, [1, 0] : vector<5x32xf32> -> vector<32x5xf32>
    %278 = arith.truncf %258 : vector<5x32xf32> to vector<5x32xbf16>
    %279 = arith.truncf %277 : vector<32x5xf32> to vector<32x5xbf16>
    %cst_149 = arith.constant dense<0.000000e+00> : vector<5x5xf32>
    %280 = tpu.matmul %278, %279, %cst_149 {dimension_numbers = #tpu.dot_dimension_numbers<[1], [0], [0], [1], [0, 0, 1, 1], [], []>} : vector<5x32xbf16>, vector<32x5xbf16>, vector<5x5xf32> -> vector<5x5xf32>
    %cst_150 = arith.constant dense<0xFF800000> : vector<5xf32>
    %281 = vector.multi_reduction <maximumf>, %280, %cst_150 [1] : vector<5x5xf32> to vector<5xf32>
    %282 = vector.shape_cast %281 : vector<5xf32> to vector<5x1xf32>
    %283 = vector.broadcast %282 : vector<5x1xf32> to vector<5x5xf32>
    %284 = arith.subf %280, %283 : vector<5x5xf32>
    %285 = math.exp %284 : vector<5x5xf32>
    %cst_151 = arith.constant dense<0.000000e+00> : vector<5xf32>
    %286 = vector.multi_reduction <add>, %285, %cst_151 [1] : vector<5x5xf32> to vector<5xf32>
    %287 = vector.shape_cast %286 : vector<5xf32> to vector<5x1xf32>
    %288 = tpu.reciprocal %287 {approx = true} : vector<5x1xf32> -> vector<5x1xf32>
    %289 = vector.broadcast %288 : vector<5x1xf32> to vector<5x5xf32>
    %290 = arith.mulf %285, %289 : vector<5x5xf32>
    %291 = arith.truncf %290 : vector<5x5xf32> to vector<5x5xbf16>
    %292 = arith.truncf %276 : vector<5x32xf32> to vector<5x32xbf16>
    %cst_152 = arith.constant dense<0.000000e+00> : vector<5x32xf32>
    %293 = tpu.matmul %291, %292, %cst_152 {dimension_numbers = #tpu.dot_dimension_numbers<[1], [0], [0], [1], [0, 0, 1, 1], [], []>} : vector<5x5xbf16>, vector<5x32xbf16>, vector<5x32xf32> -> vector<5x32xf32>
    %c2_153 = arith.constant 2 : index
    %c0_154 = arith.constant 0 : index
    %c0_155 = arith.constant 0 : index
    %294 = vector.load %arg14[%c2_153, %c0_154, %c0_155] : memref<4x32x64xf32, #tpu.memory_space<vmem>>, vector<1x32x64xf32>
    %295 = vector.shape_cast %294 : vector<1x32x64xf32> to vector<32x64xf32>
    %296 = arith.truncf %293 : vector<5x32xf32> to vector<5x32xbf16>
    %297 = arith.truncf %295 : vector<32x64xf32> to vector<32x64xbf16>
    %cst_156 = arith.constant dense<0.000000e+00> : vector<5x64xf32>
    %298 = tpu.matmul %296, %297, %cst_156 {dimension_numbers = #tpu.dot_dimension_numbers<[1], [0], [0], [1], [0, 0, 1, 1], [], []>} : vector<5x32xbf16>, vector<32x64xbf16>, vector<5x64xf32> -> vector<5x64xf32>
    %299 = arith.addf %247, %298 : vector<5x64xf32>
    %c3 = arith.constant 3 : index
    %c0_157 = arith.constant 0 : index
    %c0_158 = arith.constant 0 : index
    %300 = vector.load %arg8[%c3, %c0_157, %c0_158] : memref<4x64x32xf32, #tpu.memory_space<vmem>>, vector<1x64x32xf32>
    %301 = vector.shape_cast %300 : vector<1x64x32xf32> to vector<64x32xf32>
    %302 = arith.truncf %246 : vector<5x64xf32> to vector<5x64xbf16>
    %303 = arith.truncf %301 : vector<64x32xf32> to vector<64x32xbf16>
    %cst_159 = arith.constant dense<0.000000e+00> : vector<5x32xf32>
    %304 = tpu.matmul %302, %303, %cst_159 {dimension_numbers = #tpu.dot_dimension_numbers<[1], [0], [0], [1], [0, 0, 1, 1], [], []>} : vector<5x64xbf16>, vector<64x32xbf16>, vector<5x32xf32> -> vector<5x32xf32>
    %c3_160 = arith.constant 3 : index
    %c0_161 = arith.constant 0 : index
    %c0_162 = arith.constant 0 : index
    %305 = vector.load %arg9[%c3_160, %c0_161, %c0_162] : memref<4x1x32xf32, #tpu.memory_space<vmem>>, vector<1x1x32xf32>
    %306 = vector.shape_cast %305 : vector<1x1x32xf32> to vector<1x32xf32>
    %307 = vector.broadcast %306 : vector<1x32xf32> to vector<5x32xf32>
    %308 = arith.addf %304, %307 : vector<5x32xf32>
    %cst_163 = arith.constant 0.176776692 : f32
    %309 = vector.broadcast %cst_163 : f32 to vector<5x32xf32>
    %310 = arith.mulf %308, %309 : vector<5x32xf32>
    %c3_164 = arith.constant 3 : index
    %c0_165 = arith.constant 0 : index
    %c0_166 = arith.constant 0 : index
    %311 = vector.load %arg10[%c3_164, %c0_165, %c0_166] : memref<4x64x32xf32, #tpu.memory_space<vmem>>, vector<1x64x32xf32>
    %312 = vector.shape_cast %311 : vector<1x64x32xf32> to vector<64x32xf32>
    %313 = arith.truncf %246 : vector<5x64xf32> to vector<5x64xbf16>
    %314 = arith.truncf %312 : vector<64x32xf32> to vector<64x32xbf16>
    %cst_167 = arith.constant dense<0.000000e+00> : vector<5x32xf32>
    %315 = tpu.matmul %313, %314, %cst_167 {dimension_numbers = #tpu.dot_dimension_numbers<[1], [0], [0], [1], [0, 0, 1, 1], [], []>} : vector<5x64xbf16>, vector<64x32xbf16>, vector<5x32xf32> -> vector<5x32xf32>
    %c3_168 = arith.constant 3 : index
    %c0_169 = arith.constant 0 : index
    %c0_170 = arith.constant 0 : index
    %316 = vector.load %arg11[%c3_168, %c0_169, %c0_170] : memref<4x1x32xf32, #tpu.memory_space<vmem>>, vector<1x1x32xf32>
    %317 = vector.shape_cast %316 : vector<1x1x32xf32> to vector<1x32xf32>
    %318 = vector.broadcast %317 : vector<1x32xf32> to vector<5x32xf32>
    %319 = arith.addf %315, %318 : vector<5x32xf32>
    %c3_171 = arith.constant 3 : index
    %c0_172 = arith.constant 0 : index
    %c0_173 = arith.constant 0 : index
    %320 = vector.load %arg12[%c3_171, %c0_172, %c0_173] : memref<4x64x32xf32, #tpu.memory_space<vmem>>, vector<1x64x32xf32>
    %321 = vector.shape_cast %320 : vector<1x64x32xf32> to vector<64x32xf32>
    %322 = arith.truncf %246 : vector<5x64xf32> to vector<5x64xbf16>
    %323 = arith.truncf %321 : vector<64x32xf32> to vector<64x32xbf16>
    %cst_174 = arith.constant dense<0.000000e+00> : vector<5x32xf32>
    %324 = tpu.matmul %322, %323, %cst_174 {dimension_numbers = #tpu.dot_dimension_numbers<[1], [0], [0], [1], [0, 0, 1, 1], [], []>} : vector<5x64xbf16>, vector<64x32xbf16>, vector<5x32xf32> -> vector<5x32xf32>
    %c3_175 = arith.constant 3 : index
    %c0_176 = arith.constant 0 : index
    %c0_177 = arith.constant 0 : index
    %325 = vector.load %arg13[%c3_175, %c0_176, %c0_177] : memref<4x1x32xf32, #tpu.memory_space<vmem>>, vector<1x1x32xf32>
    %326 = vector.shape_cast %325 : vector<1x1x32xf32> to vector<1x32xf32>
    %327 = vector.broadcast %326 : vector<1x32xf32> to vector<5x32xf32>
    %328 = arith.addf %324, %327 : vector<5x32xf32>
    %329 = tpu.transpose %319, [1, 0] : vector<5x32xf32> -> vector<32x5xf32>
    %330 = arith.truncf %310 : vector<5x32xf32> to vector<5x32xbf16>
    %331 = arith.truncf %329 : vector<32x5xf32> to vector<32x5xbf16>
    %cst_178 = arith.constant dense<0.000000e+00> : vector<5x5xf32>
    %332 = tpu.matmul %330, %331, %cst_178 {dimension_numbers = #tpu.dot_dimension_numbers<[1], [0], [0], [1], [0, 0, 1, 1], [], []>} : vector<5x32xbf16>, vector<32x5xbf16>, vector<5x5xf32> -> vector<5x5xf32>
    %cst_179 = arith.constant dense<0xFF800000> : vector<5xf32>
    %333 = vector.multi_reduction <maximumf>, %332, %cst_179 [1] : vector<5x5xf32> to vector<5xf32>
    %334 = vector.shape_cast %333 : vector<5xf32> to vector<5x1xf32>
    %335 = vector.broadcast %334 : vector<5x1xf32> to vector<5x5xf32>
    %336 = arith.subf %332, %335 : vector<5x5xf32>
    %337 = math.exp %336 : vector<5x5xf32>
    %cst_180 = arith.constant dense<0.000000e+00> : vector<5xf32>
    %338 = vector.multi_reduction <add>, %337, %cst_180 [1] : vector<5x5xf32> to vector<5xf32>
    %339 = vector.shape_cast %338 : vector<5xf32> to vector<5x1xf32>
    %340 = tpu.reciprocal %339 {approx = true} : vector<5x1xf32> -> vector<5x1xf32>
    %341 = vector.broadcast %340 : vector<5x1xf32> to vector<5x5xf32>
    %342 = arith.mulf %337, %341 : vector<5x5xf32>
    %343 = arith.truncf %342 : vector<5x5xf32> to vector<5x5xbf16>
    %344 = arith.truncf %328 : vector<5x32xf32> to vector<5x32xbf16>
    %cst_181 = arith.constant dense<0.000000e+00> : vector<5x32xf32>
    %345 = tpu.matmul %343, %344, %cst_181 {dimension_numbers = #tpu.dot_dimension_numbers<[1], [0], [0], [1], [0, 0, 1, 1], [], []>} : vector<5x5xbf16>, vector<5x32xbf16>, vector<5x32xf32> -> vector<5x32xf32>
    %c3_182 = arith.constant 3 : index
    %c0_183 = arith.constant 0 : index
    %c0_184 = arith.constant 0 : index
    %346 = vector.load %arg14[%c3_182, %c0_183, %c0_184] : memref<4x32x64xf32, #tpu.memory_space<vmem>>, vector<1x32x64xf32>
    %347 = vector.shape_cast %346 : vector<1x32x64xf32> to vector<32x64xf32>
    %348 = arith.truncf %345 : vector<5x32xf32> to vector<5x32xbf16>
    %349 = arith.truncf %347 : vector<32x64xf32> to vector<32x64xbf16>
    %cst_185 = arith.constant dense<0.000000e+00> : vector<5x64xf32>
    %350 = tpu.matmul %348, %349, %cst_185 {dimension_numbers = #tpu.dot_dimension_numbers<[1], [0], [0], [1], [0, 0, 1, 1], [], []>} : vector<5x32xbf16>, vector<32x64xbf16>, vector<5x64xf32> -> vector<5x64xf32>
    %351 = arith.addf %299, %350 : vector<5x64xf32>
    %352 = arith.addf %220, %351 : vector<5x64xf32>
    %c1_186 = arith.constant 1 : index
    %c0_187 = arith.constant 0 : index
    %c0_188 = arith.constant 0 : index
    %353 = vector.load %arg15[%c1_186, %c0_187, %c0_188] : memref<2x1x64xf32, #tpu.memory_space<vmem>>, vector<1x1x64xf32>
    %354 = vector.shape_cast %353 : vector<1x1x64xf32> to vector<1x64xf32>
    %355 = vector.broadcast %354 : vector<1x64xf32> to vector<5x64xf32>
    %356 = arith.addf %352, %355 : vector<5x64xf32>
    %c1_189 = arith.constant 1 : index
    %c0_190 = arith.constant 0 : index
    %c0_191 = arith.constant 0 : index
    %357 = vector.load %arg16[%c1_189, %c0_190, %c0_191] : memref<2x1x64xf32, #tpu.memory_space<vmem>>, vector<1x1x64xf32>
    %358 = vector.shape_cast %357 : vector<1x1x64xf32> to vector<1x64xf32>
    %c1_192 = arith.constant 1 : index
    %c0_193 = arith.constant 0 : index
    %c0_194 = arith.constant 0 : index
    %359 = vector.load %arg17[%c1_192, %c0_193, %c0_194] : memref<2x1x64xf32, #tpu.memory_space<vmem>>, vector<1x1x64xf32>
    %360 = vector.shape_cast %359 : vector<1x1x64xf32> to vector<1x64xf32>
    %cst_195 = arith.constant dense<0.000000e+00> : vector<5xf32>
    %361 = vector.multi_reduction <add>, %356, %cst_195 [1] : vector<5x64xf32> to vector<5xf32>
    %362 = vector.shape_cast %361 : vector<5xf32> to vector<5x1xf32>
    %cst_196 = arith.constant 6.400000e+01 : f32
    %363 = vector.broadcast %cst_196 : f32 to vector<5x1xf32>
    %364 = arith.divf %362, %363 : vector<5x1xf32>
    %365 = vector.broadcast %364 : vector<5x1xf32> to vector<5x64xf32>
    %366 = arith.subf %356, %365 : vector<5x64xf32>
    %367 = arith.mulf %366, %366 : vector<5x64xf32>
    %cst_197 = arith.constant dense<0.000000e+00> : vector<5xf32>
    %368 = vector.multi_reduction <add>, %367, %cst_197 [1] : vector<5x64xf32> to vector<5xf32>
    %369 = vector.shape_cast %368 : vector<5xf32> to vector<5x1xf32>
    %cst_198 = arith.constant 6.400000e+01 : f32
    %370 = vector.broadcast %cst_198 : f32 to vector<5x1xf32>
    %371 = arith.divf %369, %370 : vector<5x1xf32>
    %372 = vector.broadcast %364 : vector<5x1xf32> to vector<5x64xf32>
    %373 = arith.subf %356, %372 : vector<5x64xf32>
    %cst_199 = arith.constant 9.99999974E-6 : f32
    %374 = vector.broadcast %cst_199 : f32 to vector<5x1xf32>
    %375 = arith.addf %371, %374 : vector<5x1xf32>
    %376 = math.rsqrt %375 : vector<5x1xf32>
    %377 = vector.broadcast %376 : vector<5x1xf32> to vector<5x64xf32>
    %378 = arith.mulf %373, %377 : vector<5x64xf32>
    %379 = vector.broadcast %358 : vector<1x64xf32> to vector<5x64xf32>
    %380 = arith.mulf %378, %379 : vector<5x64xf32>
    %381 = vector.broadcast %360 : vector<1x64xf32> to vector<5x64xf32>
    %382 = arith.addf %380, %381 : vector<5x64xf32>
    %c1_200 = arith.constant 1 : index
    %c0_201 = arith.constant 0 : index
    %c0_202 = arith.constant 0 : index
    %383 = vector.load %arg18[%c1_200, %c0_201, %c0_202] : memref<2x64x128xf32, #tpu.memory_space<vmem>>, vector<1x64x128xf32>
    %384 = vector.shape_cast %383 : vector<1x64x128xf32> to vector<64x128xf32>
    %385 = arith.truncf %382 : vector<5x64xf32> to vector<5x64xbf16>
    %386 = arith.truncf %384 : vector<64x128xf32> to vector<64x128xbf16>
    %cst_203 = arith.constant dense<0.000000e+00> : vector<5x128xf32>
    %387 = tpu.matmul %385, %386, %cst_203 {dimension_numbers = #tpu.dot_dimension_numbers<[1], [0], [0], [1], [0, 0, 1, 1], [], []>} : vector<5x64xbf16>, vector<64x128xbf16>, vector<5x128xf32> -> vector<5x128xf32>
    %c1_204 = arith.constant 1 : index
    %c0_205 = arith.constant 0 : index
    %c0_206 = arith.constant 0 : index
    %388 = vector.load %arg19[%c1_204, %c0_205, %c0_206] : memref<2x1x128xf32, #tpu.memory_space<vmem>>, vector<1x1x128xf32>
    %389 = vector.shape_cast %388 : vector<1x1x128xf32> to vector<1x128xf32>
    %390 = vector.broadcast %389 : vector<1x128xf32> to vector<5x128xf32>
    %391 = arith.addf %387, %390 : vector<5x128xf32>
    %cst_207 = arith.constant 1.702000e+00 : f32
    %392 = vector.broadcast %cst_207 : f32 to vector<5x128xf32>
    %393 = arith.mulf %392, %391 : vector<5x128xf32>
    %394 = arith.negf %393 : vector<5x128xf32>
    %395 = math.exp %394 : vector<5x128xf32>
    %cst_208 = arith.constant 1.000000e+00 : f32
    %396 = vector.broadcast %cst_208 : f32 to vector<5x128xf32>
    %397 = arith.addf %396, %395 : vector<5x128xf32>
    %398 = arith.divf %396, %397 : vector<5x128xf32>
    %399 = arith.mulf %391, %398 : vector<5x128xf32>
    %c1_209 = arith.constant 1 : index
    %c0_210 = arith.constant 0 : index
    %c0_211 = arith.constant 0 : index
    %400 = vector.load %arg20[%c1_209, %c0_210, %c0_211] : memref<2x128x64xf32, #tpu.memory_space<vmem>>, vector<1x128x64xf32>
    %401 = vector.shape_cast %400 : vector<1x128x64xf32> to vector<128x64xf32>
    %402 = arith.truncf %399 : vector<5x128xf32> to vector<5x128xbf16>
    %403 = arith.truncf %401 : vector<128x64xf32> to vector<128x64xbf16>
    %cst_212 = arith.constant dense<0.000000e+00> : vector<5x64xf32>
    %404 = tpu.matmul %402, %403, %cst_212 {dimension_numbers = #tpu.dot_dimension_numbers<[1], [0], [0], [1], [0, 0, 1, 1], [], []>} : vector<5x128xbf16>, vector<128x64xbf16>, vector<5x64xf32> -> vector<5x64xf32>
    %c1_213 = arith.constant 1 : index
    %c0_214 = arith.constant 0 : index
    %c0_215 = arith.constant 0 : index
    %405 = vector.load %arg21[%c1_213, %c0_214, %c0_215] : memref<2x1x64xf32, #tpu.memory_space<vmem>>, vector<1x1x64xf32>
    %406 = vector.shape_cast %405 : vector<1x1x64xf32> to vector<1x64xf32>
    %407 = vector.broadcast %406 : vector<1x64xf32> to vector<5x64xf32>
    %408 = arith.addf %404, %407 : vector<5x64xf32>
    %409 = arith.addf %356, %408 : vector<5x64xf32>
    %410 = vector.extract_strided_slice %409 {offsets = [0, 0], sizes = [1, 64], strides = [1, 1]} : vector<5x64xf32> to vector<1x64xf32>
    %c0_216 = arith.constant 0 : index
    %c0_217 = arith.constant 0 : index
    %411 = vector.load %arg22[%c0_216, %c0_217] : memref<1x64xf32, #tpu.memory_space<vmem>>, vector<1x64xf32>
    %c0_218 = arith.constant 0 : index
    %c0_219 = arith.constant 0 : index
    %412 = vector.load %arg23[%c0_218, %c0_219] : memref<1x64xf32, #tpu.memory_space<vmem>>, vector<1x64xf32>
    %cst_220 = arith.constant dense<0.000000e+00> : vector<1xf32>
    %413 = vector.multi_reduction <add>, %410, %cst_220 [1] : vector<1x64xf32> to vector<1xf32>
    %414 = vector.shape_cast %413 : vector<1xf32> to vector<1x1xf32>
    %cst_221 = arith.constant 6.400000e+01 : f32
    %415 = vector.broadcast %cst_221 : f32 to vector<1x1xf32>
    %416 = arith.divf %414, %415 : vector<1x1xf32>
    %417 = vector.broadcast %416 : vector<1x1xf32> to vector<1x64xf32>
    %418 = arith.subf %410, %417 : vector<1x64xf32>
    %419 = arith.mulf %418, %418 : vector<1x64xf32>
    %cst_222 = arith.constant dense<0.000000e+00> : vector<1xf32>
    %420 = vector.multi_reduction <add>, %419, %cst_222 [1] : vector<1x64xf32> to vector<1xf32>
    %421 = vector.shape_cast %420 : vector<1xf32> to vector<1x1xf32>
    %cst_223 = arith.constant 6.400000e+01 : f32
    %422 = vector.broadcast %cst_223 : f32 to vector<1x1xf32>
    %423 = arith.divf %421, %422 : vector<1x1xf32>
    %424 = vector.broadcast %416 : vector<1x1xf32> to vector<1x64xf32>
    %425 = arith.subf %410, %424 : vector<1x64xf32>
    %cst_224 = arith.constant 9.99999974E-6 : f32
    %426 = vector.broadcast %cst_224 : f32 to vector<1x1xf32>
    %427 = arith.addf %423, %426 : vector<1x1xf32>
    %428 = math.rsqrt %427 : vector<1x1xf32>
    %429 = vector.broadcast %428 : vector<1x1xf32> to vector<1x64xf32>
    %430 = arith.mulf %425, %429 : vector<1x64xf32>
    %431 = arith.mulf %430, %411 : vector<1x64xf32>
    %432 = arith.addf %431, %412 : vector<1x64xf32>
    %c0_225 = arith.constant 0 : index
    %c0_226 = arith.constant 0 : index
    %433 = vector.load %arg24[%c0_225, %c0_226] : memref<64x64xf32, #tpu.memory_space<vmem>>, vector<64x64xf32>
    %434 = arith.truncf %432 : vector<1x64xf32> to vector<1x64xbf16>
    %435 = arith.truncf %433 : vector<64x64xf32> to vector<64x64xbf16>
    %cst_227 = arith.constant dense<0.000000e+00> : vector<1x64xf32>
    %436 = tpu.matmul %434, %435, %cst_227 {dimension_numbers = #tpu.dot_dimension_numbers<[1], [0], [0], [1], [0, 0, 1, 1], [], []>} : vector<1x64xbf16>, vector<64x64xbf16>, vector<1x64xf32> -> vector<1x64xf32>
    %c0_228 = arith.constant 0 : index
    %c0_229 = arith.constant 0 : index
    %c0_230 = arith.constant 0 : index
    %437 = vector.load %arg25[%c0_228, %c0_229, %c0_230] : memref<1x1x64xf32, #tpu.memory_space<vmem>>, vector<1x1x64xf32>
    %438 = vector.shape_cast %437 : vector<1x1x64xf32> to vector<1x64xf32>
    %439 = vector.shape_cast %436 : vector<1x64xf32> to vector<1x1x64xf32>
    tpu.vector_store %arg25[%c0_228, %c0_229, %c0_230], %439 {strides = array<i32>} : memref<1x1x64xf32, #tpu.memory_space<vmem>>, vector<1x1x64xf32>,
    return
  }
  func.func @transform_0(%arg0: i32) -> (i32, i32, i32) {
    %c0_i32 = arith.constant 0 : i32
    %c0_i32_0 = arith.constant 0 : i32
    %c0_i32_1 = arith.constant 0 : i32
    return %arg0, %c0_i32, %c0_i32_0 : i32, i32, i32
  }
  func.func @transform_1(%arg0: i32) -> (i32, i32) {
    %c0_i32 = arith.constant 0 : i32
    %c0_i32_0 = arith.constant 0 : i32
    %c0_i32_1 = arith.constant 0 : i32
    return %c0_i32, %c0_i32_0 : i32, i32
  }
  func.func @transform_2(%arg0: i32) -> (i32, i32) {
    %c0_i32 = arith.constant 0 : i32
    %c0_i32_0 = arith.constant 0 : i32
    %c0_i32_1 = arith.constant 0 : i32
    return %c0_i32, %c0_i32_0 : i32, i32
  }
  func.func @transform_3(%arg0: i32) -> (i32, i32) {
    %c0_i32 = arith.constant 0 : i32
    %c0_i32_0 = arith.constant 0 : i32
    %c0_i32_1 = arith.constant 0 : i32
    return %c0_i32, %c0_i32_0 : i32, i32
  }
  func.func @transform_4(%arg0: i32) -> (i32, i32) {
    %c0_i32 = arith.constant 0 : i32
    %c0_i32_0 = arith.constant 0 : i32
    %c0_i32_1 = arith.constant 0 : i32
    return %c0_i32, %c0_i32_0 : i32, i32
  }
  func.func @transform_5(%arg0: i32) -> (i32, i32, i32) {
    %c0_i32 = arith.constant 0 : i32
    %c0_i32_0 = arith.constant 0 : i32
    %c0_i32_1 = arith.constant 0 : i32
    %c0_i32_2 = arith.constant 0 : i32
    return %c0_i32, %c0_i32_0, %c0_i32_1 : i32, i32, i32
  }
  func.func @transform_6(%arg0: i32) -> (i32, i32, i32) {
    %c0_i32 = arith.constant 0 : i32
    %c0_i32_0 = arith.constant 0 : i32
    %c0_i32_1 = arith.constant 0 : i32
    %c0_i32_2 = arith.constant 0 : i32
    return %c0_i32, %c0_i32_0, %c0_i32_1 : i32, i32, i32
  }
  func.func @transform_7(%arg0: i32) -> (i32, i32, i32) {
    %c0_i32 = arith.constant 0 : i32
    %c0_i32_0 = arith.constant 0 : i32
    %c0_i32_1 = arith.constant 0 : i32
    %c0_i32_2 = arith.constant 0 : i32
    return %c0_i32, %c0_i32_0, %c0_i32_1 : i32, i32, i32
  }
  func.func @transform_8(%arg0: i32) -> (i32, i32, i32) {
    %c0_i32 = arith.constant 0 : i32
    %c0_i32_0 = arith.constant 0 : i32
    %c0_i32_1 = arith.constant 0 : i32
    %c0_i32_2 = arith.constant 0 : i32
    return %c0_i32, %c0_i32_0, %c0_i32_1 : i32, i32, i32
  }
  func.func @transform_9(%arg0: i32) -> (i32, i32, i32) {
    %c0_i32 = arith.constant 0 : i32
    %c0_i32_0 = arith.constant 0 : i32
    %c0_i32_1 = arith.constant 0 : i32
    %c0_i32_2 = arith.constant 0 : i32
    return %c0_i32, %c0_i32_0, %c0_i32_1 : i32, i32, i32
  }
  func.func @transform_10(%arg0: i32) -> (i32, i32, i32) {
    %c0_i32 = arith.constant 0 : i32
    %c0_i32_0 = arith.constant 0 : i32
    %c0_i32_1 = arith.constant 0 : i32
    %c0_i32_2 = arith.constant 0 : i32
    return %c0_i32, %c0_i32_0, %c0_i32_1 : i32, i32, i32
  }
  func.func @transform_11(%arg0: i32) -> (i32, i32, i32) {
    %c0_i32 = arith.constant 0 : i32
    %c0_i32_0 = arith.constant 0 : i32
    %c0_i32_1 = arith.constant 0 : i32
    %c0_i32_2 = arith.constant 0 : i32
    return %c0_i32, %c0_i32_0, %c0_i32_1 : i32, i32, i32
  }
  func.func @transform_12(%arg0: i32) -> (i32, i32, i32) {
    %c0_i32 = arith.constant 0 : i32
    %c0_i32_0 = arith.constant 0 : i32
    %c0_i32_1 = arith.constant 0 : i32
    %c0_i32_2 = arith.constant 0 : i32
    return %c0_i32, %c0_i32_0, %c0_i32_1 : i32, i32, i32
  }
  func.func @transform_13(%arg0: i32) -> (i32, i32, i32) {
    %c0_i32 = arith.constant 0 : i32
    %c0_i32_0 = arith.constant 0 : i32
    %c0_i32_1 = arith.constant 0 : i32
    %c0_i32_2 = arith.constant 0 : i32
    return %c0_i32, %c0_i32_0, %c0_i32_1 : i32, i32, i32
  }
  func.func @transform_14(%arg0: i32) -> (i32, i32, i32) {
    %c0_i32 = arith.constant 0 : i32
    %c0_i32_0 = arith.constant 0 : i32
    %c0_i32_1 = arith.constant 0 : i32
    %c0_i32_2 = arith.constant 0 : i32
    return %c0_i32, %c0_i32_0, %c0_i32_1 : i32, i32, i32
  }
  func.func @transform_15(%arg0: i32) -> (i32, i32, i32) {
    %c0_i32 = arith.constant 0 : i32
    %c0_i32_0 = arith.constant 0 : i32
    %c0_i32_1 = arith.constant 0 : i32
    %c0_i32_2 = arith.constant 0 : i32
    return %c0_i32, %c0_i32_0, %c0_i32_1 : i32, i32, i32
  }
  func.func @transform_16(%arg0: i32) -> (i32, i32, i32) {
    %c0_i32 = arith.constant 0 : i32
    %c0_i32_0 = arith.constant 0 : i32
    %c0_i32_1 = arith.constant 0 : i32
    %c0_i32_2 = arith.constant 0 : i32
    return %c0_i32, %c0_i32_0, %c0_i32_1 : i32, i32, i32
  }
  func.func @transform_17(%arg0: i32) -> (i32, i32, i32) {
    %c0_i32 = arith.constant 0 : i32
    %c0_i32_0 = arith.constant 0 : i32
    %c0_i32_1 = arith.constant 0 : i32
    %c0_i32_2 = arith.constant 0 : i32
    return %c0_i32, %c0_i32_0, %c0_i32_1 : i32, i32, i32
  }
  func.func @transform_18(%arg0: i32) -> (i32, i32, i32) {
    %c0_i32 = arith.constant 0 : i32
    %c0_i32_0 = arith.constant 0 : i32
    %c0_i32_1 = arith.constant 0 : i32
    %c0_i32_2 = arith.constant 0 : i32
    return %c0_i32, %c0_i32_0, %c0_i32_1 : i32, i32, i32
  }
  func.func @transform_19(%arg0: i32) -> (i32, i32, i32) {
    %c0_i32 = arith.constant 0 : i32
    %c0_i32_0 = arith.constant 0 : i32
    %c0_i32_1 = arith.constant 0 : i32
    %c0_i32_2 = arith.constant 0 : i32
    return %c0_i32, %c0_i32_0, %c0_i32_1 : i32, i32, i32
  }
  func.func @transform_20(%arg0: i32) -> (i32, i32, i32) {
    %c0_i32 = arith.constant 0 : i32
    %c0_i32_0 = arith.constant 0 : i32
    %c0_i32_1 = arith.constant 0 : i32
    %c0_i32_2 = arith.constant 0 : i32
    return %c0_i32, %c0_i32_0, %c0_i32_1 : i32, i32, i32
  }
  func.func @transform_21(%arg0: i32) -> (i32, i32) {
    %c0_i32 = arith.constant 0 : i32
    %c0_i32_0 = arith.constant 0 : i32
    %c0_i32_1 = arith.constant 0 : i32
    return %c0_i32, %c0_i32_0 : i32, i32
  }
  func.func @transform_22(%arg0: i32) -> (i32, i32) {
    %c0_i32 = arith.constant 0 : i32
    %c0_i32_0 = arith.constant 0 : i32
    %c0_i32_1 = arith.constant 0 : i32
    return %c0_i32, %c0_i32_0 : i32, i32
  }
  func.func @transform_23(%arg0: i32) -> (i32, i32) {
    %c0_i32 = arith.constant 0 : i32
    %c0_i32_0 = arith.constant 0 : i32
    %c0_i32_1 = arith.constant 0 : i32
    return %c0_i32, %c0_i32_0 : i32, i32
  }
  func.func @transform_24(%arg0: i32) -> (i32, i32, i32) {
    %c0_i32 = arith.constant 0 : i32
    %c0_i32_0 = arith.constant 0 : i32
    %c0_i32_1 = arith.constant 0 : i32
    return %arg0, %c0_i32, %c0_i32_0 : i32, i32, i32
  }
}

</mosaic_0001>

<llo_original>
// kernel: clip_image_encoder_forward.1
$region0: #{clip_image_encoder_forward.1}
  #allocation0 [shape = 'u32[]', space=smem, size = 0x4, offset = 0x4, fixed_abs, tag = 'smem constant byte address 0x4 - core index']
  #allocation1 [shape = 'u32[72,128]{1,0:T(1,128)}', space=vmem, size = 0x9000, scoped, tag = 'internal scratch']
  %s0 = inlined_call_operand.vmem [shape: f32[2,5,192], index: 0, kind: input, shape index: {}]
  %s1 = inlined_call_operand.vmem [shape: f32[192,64], index: 1, kind: input, shape index: {}]
  %s2 = inlined_call_operand.vmem [shape: f32[5,64], index: 2, kind: input, shape index: {}]
  %s3 = inlined_call_operand.vmem [shape: f32[1,64], index: 3, kind: input, shape index: {}]
  %s4 = inlined_call_operand.vmem [shape: f32[1,64], index: 4, kind: input, shape index: {}]
  %s5 = inlined_call_operand.vmem [shape: f32[2,1,64], index: 5, kind: input, shape index: {}]
  %s6 = inlined_call_operand.vmem [shape: f32[2,1,64], index: 6, kind: input, shape index: {}]
  %s7 = inlined_call_operand.vmem [shape: f32[4,64,32], index: 7, kind: input, shape index: {}]
  %s8 = inlined_call_operand.vmem [shape: f32[4,1,32], index: 8, kind: input, shape index: {}]
  %s9 = inlined_call_operand.vmem [shape: f32[4,64,32], index: 9, kind: input, shape index: {}]
  %s10 = inlined_call_operand.vmem [shape: f32[4,1,32], index: 10, kind: input, shape index: {}]
  %s11 = inlined_call_operand.vmem [shape: f32[4,64,32], index: 11, kind: input, shape index: {}]
  %s12 = inlined_call_operand.vmem [shape: f32[4,1,32], index: 12, kind: input, shape index: {}]
  %s13 = inlined_call_operand.vmem [shape: f32[4,32,64], index: 13, kind: input, shape index: {}]
  %s14 = inlined_call_operand.vmem [shape: f32[2,1,64], index: 14, kind: input, shape index: {}]
  %s15 = inlined_call_operand.vmem [shape: f32[2,1,64], index: 15, kind: input, shape index: {}]
  %s16 = inlined_call_operand.vmem [shape: f32[2,1,64], index: 16, kind: input, shape index: {}]
  %s17 = inlined_call_operand.vmem [shape: f32[2,64,128], index: 17, kind: input, shape index: {}]
  %s18 = inlined_call_operand.vmem [shape: f32[2,1,128], index: 18, kind: input, shape index: {}]
  %s19 = inlined_call_operand.vmem [shape: f32[2,128,64], index: 19, kind: input, shape index: {}]
  %s20 = inlined_call_operand.vmem [shape: f32[2,1,64], index: 20, kind: input, shape index: {}]
  %s21 = inlined_call_operand.vmem [shape: f32[1,64], index: 21, kind: input, shape index: {}]
  %s22 = inlined_call_operand.vmem [shape: f32[1,64], index: 22, kind: input, shape index: {}]
  %s23 = inlined_call_operand.vmem [shape: f32[64,64], index: 23, kind: input, shape index: {}]
  %s24 = inlined_call_operand.vmem [shape: f32[2,1,64], index: 24, kind: output, shape index: {}]
  %s25 = sld [smem:[#allocation0]]
  $region129: #{clip_image_encoder_forward.1} parent=0
    _
  %s27 = ssub.s32 1, %s25
  %s28 = scalar_select 0, %s27, %s25
  loop: start=0, step=1, limit=4
  $region2: #{clip_image_encoder_forward.1} parent=0 // loop_pre_header
    _
  $region3: #{clip_image_encoder_forward.1} parent=0 // loop_header
    %s30 = sphi 0, %s34
    %p31 = scmp.ge.s32.totalorder %s30, 4
    %s40 = sphi 0, %s42
    %s43 = sphi 0, %s40
    %s44 = sphi 0, %s43
    %s60 = sphi 0, %s44
    %s64 = sphi 0, %s64
    %s66 = sphi 0, %s64
    %s67 = sphi 0, %s66
    %s81 = sphi 0, %s67
    %s85 = sphi 0, %s85
    %s87 = sphi 0, %s85
    %s88 = sphi 0, %s87
    %s102 = sphi 0, %s88
    %s106 = sphi 0, %s106
    %s108 = sphi 0, %s106
    %s109 = sphi 0, %s108
    %s123 = sphi 0, %s109
    %s127 = sphi 0, %s127
    %s129 = sphi 0, %s127
    %s130 = sphi 0, %s129
    %s144 = sphi 0, %s130
    %s148 = sphi 0, %s148
    %s150 = sphi 0, %s148
    %s151 = sphi 0, %s150
    %s165 = sphi 0, %s151
    %s169 = sphi 0, %s169
    %s171 = sphi 0, %s169
    %s172 = sphi 0, %s171
    %s186 = sphi 0, %s172
    %s190 = sphi 0, %s190
    %s192 = sphi 0, %s190
    %s193 = sphi 0, %s192
    %s207 = sphi 0, %s193
    %s211 = sphi 0, %s211
    %s213 = sphi 0, %s211
    %s214 = sphi 0, %s213
    %s228 = sphi 0, %s214
    %s232 = sphi 0, %s232
    %s234 = sphi 0, %s232
    %s235 = sphi 0, %s234
    %s249 = sphi 0, %s235
    %s253 = sphi 0, %s253
    %s255 = sphi 0, %s253
    %s256 = sphi 0, %s255
    %s270 = sphi 0, %s256
    %s274 = sphi 0, %s274
    %s276 = sphi 0, %s274
    %s277 = sphi 0, %s276
    %s291 = sphi 0, %s277
    %s295 = sphi 0, %s295
    %s297 = sphi 0, %s295
    %s298 = sphi 0, %s297
    %s312 = sphi 0, %s298
    %s316 = sphi 0, %s316
    %s318 = sphi 0, %s316
    %s319 = sphi 0, %s318
    %s333 = sphi 0, %s319
    %s337 = sphi 0, %s337
    %s339 = sphi 0, %s337
    %s340 = sphi 0, %s339
    %s354 = sphi 0, %s340
    %s358 = sphi 0, %s358
    %s360 = sphi 0, %s358
    %s361 = sphi 0, %s360
    %s375 = sphi 0, %s361
    %s379 = sphi 0, %s379
    %s381 = sphi 0, %s379
    %s382 = sphi 0, %s381
    %s396 = sphi 0, %s382
    %s400 = sphi 0, %s400
    %s402 = sphi 0, %s400
    %s403 = sphi 0, %s402
    %s417 = sphi 0, %s403
    %s421 = sphi 0, %s421
    %s423 = sphi 0, %s421
    %s424 = sphi 0, %s423
    %s438 = sphi 0, %s424
    %s442 = sphi 0, %s442
    %s444 = sphi 0, %s442
    %s445 = sphi 0, %s444
    %s459 = sphi 0, %s445
    %s463 = sphi 0, %s463
    %s465 = sphi 0, %s463
    %s466 = sphi 0, %s465
    %s480 = sphi 0, %s466
    %s484 = sphi 0, %s484
    %s486 = sphi 0, %s484
    %s487 = sphi 0, %s486
    %s501 = sphi 0, %s487
    %s505 = sphi 0, %s505
    %s507 = sphi 0, %s505
    %s508 = sphi 0, %s507
    %s522 = sphi 0, %s508
    %s526 = sphi 0, %s526
    %s528 = sphi 0, %s526
    %s529 = sphi 0, %s528
    %s543 = sphi 0, %s529
    %s549 = sphi 0, %s551
    %s552 = sphi 0, %s549
    %s553 = sphi 0, %s552
    %s569 = sphi 0, %s553
  $region4: #{clip_image_encoder_forward.1} parent=0 // loop_header_branch
    %33 = sbr.rel (%p31) target = $region8
  $region5: #{clip_image_encoder_forward.1} parent=0 // loop_body
    %s35 = ssub.s32 %s30, 1
    %s36 = ssub.s32 %s30, 2
    %s37 = sadd.s32 %s30, 1
    %s38 = ssub.s32 %s30, %s37
    %p39 = scmp.eq.s32.totalorder %s38, 0
    %s41 = sadd.s32 %s40, 1
    %s42 = scalar_select %p39, %s40, %s41
    %p45 = pneg %p39
    %p46 = scmp.eq.s32.totalorder %s30, 1
    %p47 = por %p45, %p46
    %p48 = scmp.ne.s32.totalorder %s40, %s43
    %p49 = scmp.eq.s32.totalorder %s30, 0
    %p50 = por %p48, %p49
    %p51 = scmp.ne.s32.totalorder %s40, %s43
    %p52 = scmp.eq.s32.totalorder %s35, 1
    %p53 = por %p51, %p52
    %p54 = scmp.ne.s32.totalorder %s43, %s44
    %p55 = scmp.eq.s32.totalorder %s35, 0
    %p56 = por %p54, %p55
    %p57 = scmp.ne.s32.totalorder %s43, %s44
    %p58 = scmp.eq.s32.totalorder %s36, 1
    %p59 = por %p57, %p58
    %p61 = scmp.ne.s32.totalorder %s44, %s60
    %p62 = scmp.eq.s32.totalorder %s36, 0
    %p63 = por %p61, %p62
    %s65 = sadd.s32 %s64, 1
    %p68 = scmp.eq.s32.totalorder %s30, 1
    %p69 = scmp.ne.s32.totalorder %s64, %s66
    %p70 = scmp.eq.s32.totalorder %s30, 0
    %p71 = por %p69, %p70
    %p72 = scmp.ne.s32.totalorder %s64, %s66
    %p73 = scmp.eq.s32.totalorder %s35, 1
    %p74 = por %p72, %p73
    %p75 = scmp.ne.s32.totalorder %s66, %s67
    %p76 = scmp.eq.s32.totalorder %s35, 0
    %p77 = por %p75, %p76
    %p78 = scmp.ne.s32.totalorder %s66, %s67
    %p79 = scmp.eq.s32.totalorder %s36, 1
    %p80 = por %p78, %p79
    %p82 = scmp.ne.s32.totalorder %s67, %s81
    %p83 = scmp.eq.s32.totalorder %s36, 0
    %p84 = por %p82, %p83
    %s86 = sadd.s32 %s85, 1
    %p89 = scmp.eq.s32.totalorder %s30, 1
    %p90 = scmp.ne.s32.totalorder %s85, %s87
    %p91 = scmp.eq.s32.totalorder %s30, 0
    %p92 = por %p90, %p91
    %p93 = scmp.ne.s32.totalorder %s85, %s87
    %p94 = scmp.eq.s32.totalorder %s35, 1
    %p95 = por %p93, %p94
    %p96 = scmp.ne.s32.totalorder %s87, %s88
    %p97 = scmp.eq.s32.totalorder %s35, 0
    %p98 = por %p96, %p97
    %p99 = scmp.ne.s32.totalorder %s87, %s88
    %p100 = scmp.eq.s32.totalorder %s36, 1
    %p101 = por %p99, %p100
    %p103 = scmp.ne.s32.totalorder %s88, %s102
    %p104 = scmp.eq.s32.totalorder %s36, 0
    %p105 = por %p103, %p104
    %s107 = sadd.s32 %s106, 1
    %p110 = scmp.eq.s32.totalorder %s30, 1
    %p111 = scmp.ne.s32.totalorder %s106, %s108
    %p112 = scmp.eq.s32.totalorder %s30, 0
    %p113 = por %p111, %p112
    %p114 = scmp.ne.s32.totalorder %s106, %s108
    %p115 = scmp.eq.s32.totalorder %s35, 1
    %p116 = por %p114, %p115
    %p117 = scmp.ne.s32.totalorder %s108, %s109
    %p118 = scmp.eq.s32.totalorder %s35, 0
    %p119 = por %p117, %p118
    %p120 = scmp.ne.s32.totalorder %s108, %s109
    %p121 = scmp.eq.s32.totalorder %s36, 1
    %p122 = por %p120, %p121
    %p124 = scmp.ne.s32.totalorder %s109, %s123
    %p125 = scmp.eq.s32.totalorder %s36, 0
    %p126 = por %p124, %p125
    %s128 = sadd.s32 %s127, 1
    %p131 = scmp.eq.s32.totalorder %s30, 1
    %p132 = scmp.ne.s32.totalorder %s127, %s129
    %p133 = scmp.eq.s32.totalorder %s30, 0
    %p134 = por %p132, %p133
    %p135 = scmp.ne.s32.totalorder %s127, %s129
    %p136 = scmp.eq.s32.totalorder %s35, 1
    %p137 = por %p135, %p136
    %p138 = scmp.ne.s32.totalorder %s129, %s130
    %p139 = scmp.eq.s32.totalorder %s35, 0
    %p140 = por %p138, %p139
    %p141 = scmp.ne.s32.totalorder %s129, %s130
    %p142 = scmp.eq.s32.totalorder %s36, 1
    %p143 = por %p141, %p142
    %p145 = scmp.ne.s32.totalorder %s130, %s144
    %p146 = scmp.eq.s32.totalorder %s36, 0
    %p147 = por %p145, %p146
    %s149 = sadd.s32 %s148, 1
    %p152 = scmp.eq.s32.totalorder %s30, 1
    %p153 = scmp.ne.s32.totalorder %s148, %s150
    %p154 = scmp.eq.s32.totalorder %s30, 0
    %p155 = por %p153, %p154
    %p156 = scmp.ne.s32.totalorder %s148, %s150
    %p157 = scmp.eq.s32.totalorder %s35, 1
    %p158 = por %p156, %p157
    %p159 = scmp.ne.s32.totalorder %s150, %s151
    %p160 = scmp.eq.s32.totalorder %s35, 0
    %p161 = por %p159, %p160
    %p162 = scmp.ne.s32.totalorder %s150, %s151
    %p163 = scmp.eq.s32.totalorder %s36, 1
    %p164 = por %p162, %p163
    %p166 = scmp.ne.s32.totalorder %s151, %s165
    %p167 = scmp.eq.s32.totalorder %s36, 0
    %p168 = por %p166, %p167
    %s170 = sadd.s32 %s169, 1
    %p173 = scmp.eq.s32.totalorder %s30, 1
    %p174 = scmp.ne.s32.totalorder %s169, %s171
    %p175 = scmp.eq.s32.totalorder %s30, 0
    %p176 = por %p174, %p175
    %p177 = scmp.ne.s32.totalorder %s169, %s171
    %p178 = scmp.eq.s32.totalorder %s35, 1
    %p179 = por %p177, %p178
    %p180 = scmp.ne.s32.totalorder %s171, %s172
    %p181 = scmp.eq.s32.totalorder %s35, 0
    %p182 = por %p180, %p181
    %p183 = scmp.ne.s32.totalorder %s171, %s172
    %p184 = scmp.eq.s32.totalorder %s36, 1
    %p185 = por %p183, %p184
    %p187 = scmp.ne.s32.totalorder %s172, %s186
    %p188 = scmp.eq.s32.totalorder %s36, 0
    %p189 = por %p187, %p188
    %s191 = sadd.s32 %s190, 1
    %p194 = scmp.eq.s32.totalorder %s30, 1
    %p195 = scmp.ne.s32.totalorder %s190, %s192
    %p196 = scmp.eq.s32.totalorder %s30, 0
    %p197 = por %p195, %p196
    %p198 = scmp.ne.s32.totalorder %s190, %s192
    %p199 = scmp.eq.s32.totalorder %s35, 1
    %p200 = por %p198, %p199
    %p201 = scmp.ne.s32.totalorder %s192, %s193
    %p202 = scmp.eq.s32.totalorder %s35, 0
    %p203 = por %p201, %p202
    %p204 = scmp.ne.s32.totalorder %s192, %s193
    %p205 = scmp.eq.s32.totalorder %s36, 1
    %p206 = por %p204, %p205
    %p208 = scmp.ne.s32.totalorder %s193, %s207
    %p209 = scmp.eq.s32.totalorder %s36, 0
    %p210 = por %p208, %p209
    %s212 = sadd.s32 %s211, 1
    %p215 = scmp.eq.s32.totalorder %s30, 1
    %p216 = scmp.ne.s32.totalorder %s211, %s213
    %p217 = scmp.eq.s32.totalorder %s30, 0
    %p218 = por %p216, %p217
    %p219 = scmp.ne.s32.totalorder %s211, %s213
    %p220 = scmp.eq.s32.totalorder %s35, 1
    %p221 = por %p219, %p220
    %p222 = scmp.ne.s32.totalorder %s213, %s214
    %p223 = scmp.eq.s32.totalorder %s35, 0
    %p224 = por %p222, %p223
    %p225 = scmp.ne.s32.totalorder %s213, %s214
    %p226 = scmp.eq.s32.totalorder %s36, 1
    %p227 = por %p225, %p226
    %p229 = scmp.ne.s32.totalorder %s214, %s228
    %p230 = scmp.eq.s32.totalorder %s36, 0
    %p231 = por %p229, %p230
    %s233 = sadd.s32 %s232, 1
    %p236 = scmp.eq.s32.totalorder %s30, 1
    %p237 = scmp.ne.s32.totalorder %s232, %s234
    %p238 = scmp.eq.s32.totalorder %s30, 0
    %p239 = por %p237, %p238
    %p240 = scmp.ne.s32.totalorder %s232, %s234
    %p241 = scmp.eq.s32.totalorder %s35, 1
    %p242 = por %p240, %p241
    %p243 = scmp.ne.s32.totalorder %s234, %s235
    %p244 = scmp.eq.s32.totalorder %s35, 0
    %p245 = por %p243, %p244
    %p246 = scmp.ne.s32.totalorder %s234, %s235
    %p247 = scmp.eq.s32.totalorder %s36, 1
    %p248 = por %p246, %p247
    %p250 = scmp.ne.s32.totalorder %s235, %s249
    %p251 = scmp.eq.s32.totalorder %s36, 0
    %p252 = por %p250, %p251
    %s254 = sadd.s32 %s253, 1
    %p257 = scmp.eq.s32.totalorder %s30, 1
    %p258 = scmp.ne.s32.totalorder %s253, %s255
    %p259 = scmp.eq.s32.totalorder %s30, 0
    %p260 = por %p258, %p259
    %p261 = scmp.ne.s32.totalorder %s253, %s255
    %p262 = scmp.eq.s32.totalorder %s35, 1
    %p263 = por %p261, %p262
    %p264 = scmp.ne.s32.totalorder %s255, %s256
    %p265 = scmp.eq.s32.totalorder %s35, 0
    %p266 = por %p264, %p265
    %p267 = scmp.ne.s32.totalorder %s255, %s256
    %p268 = scmp.eq.s32.totalorder %s36, 1
    %p269 = por %p267, %p268
    %p271 = scmp.ne.s32.totalorder %s256, %s270
    %p272 = scmp.eq.s32.totalorder %s36, 0
    %p273 = por %p271, %p272
    %s275 = sadd.s32 %s274, 1
    %p278 = scmp.eq.s32.totalorder %s30, 1
    %p279 = scmp.ne.s32.totalorder %s274, %s276
    %p280 = scmp.eq.s32.totalorder %s30, 0
    %p281 = por %p279, %p280
    %p282 = scmp.ne.s32.totalorder %s274, %s276
    %p283 = scmp.eq.s32.totalorder %s35, 1
    %p284 = por %p282, %p283
    %p285 = scmp.ne.s32.totalorder %s276, %s277
    %p286 = scmp.eq.s32.totalorder %s35, 0
    %p287 = por %p285, %p286
    %p288 = scmp.ne.s32.totalorder %s276, %s277
    %p289 = scmp.eq.s32.totalorder %s36, 1
    %p290 = por %p288, %p289
    %p292 = scmp.ne.s32.totalorder %s277, %s291
    %p293 = scmp.eq.s32.totalorder %s36, 0
    %p294 = por %p292, %p293
    %s296 = sadd.s32 %s295, 1
    %p299 = scmp.eq.s32.totalorder %s30, 1
    %p300 = scmp.ne.s32.totalorder %s295, %s297
    %p301 = scmp.eq.s32.totalorder %s30, 0
    %p302 = por %p300, %p301
    %p303 = scmp.ne.s32.totalorder %s295, %s297
    %p304 = scmp.eq.s32.totalorder %s35, 1
    %p305 = por %p303, %p304
    %p306 = scmp.ne.s32.totalorder %s297, %s298
    %p307 = scmp.eq.s32.totalorder %s35, 0
    %p308 = por %p306, %p307
    %p309 = scmp.ne.s32.totalorder %s297, %s298
    %p310 = scmp.eq.s32.totalorder %s36, 1
    %p311 = por %p309, %p310
    %p313 = scmp.ne.s32.totalorder %s298, %s312
    %p314 = scmp.eq.s32.totalorder %s36, 0
    %p315 = por %p313, %p314
    %s317 = sadd.s32 %s316, 1
    %p320 = scmp.eq.s32.totalorder %s30, 1
    %p321 = scmp.ne.s32.totalorder %s316, %s318
    %p322 = scmp.eq.s32.totalorder %s30, 0
    %p323 = por %p321, %p322
    %p324 = scmp.ne.s32.totalorder %s316, %s318
    %p325 = scmp.eq.s32.totalorder %s35, 1
    %p326 = por %p324, %p325
    %p327 = scmp.ne.s32.totalorder %s318, %s319
    %p328 = scmp.eq.s32.totalorder %s35, 0
    %p329 = por %p327, %p328
    %p330 = scmp.ne.s32.totalorder %s318, %s319
    %p331 = scmp.eq.s32.totalorder %s36, 1
    %p332 = por %p330, %p331
    %p334 = scmp.ne.s32.totalorder %s319, %s333
    %p335 = scmp.eq.s32.totalorder %s36, 0
    %p336 = por %p334, %p335
    %s338 = sadd.s32 %s337, 1
    %p341 = scmp.eq.s32.totalorder %s30, 1
    %p342 = scmp.ne.s32.totalorder %s337, %s339
    %p343 = scmp.eq.s32.totalorder %s30, 0
    %p344 = por %p342, %p343
    %p345 = scmp.ne.s32.totalorder %s337, %s339
    %p346 = scmp.eq.s32.totalorder %s35, 1
    %p347 = por %p345, %p346
    %p348 = scmp.ne.s32.totalorder %s339, %s340
    %p349 = scmp.eq.s32.totalorder %s35, 0
    %p350 = por %p348, %p349
    %p351 = scmp.ne.s32.totalorder %s339, %s340
    %p352 = scmp.eq.s32.totalorder %s36, 1
    %p353 = por %p351, %p352
    %p355 = scmp.ne.s32.totalorder %s340, %s354
    %p356 = scmp.eq.s32.totalorder %s36, 0
    %p357 = por %p355, %p356
    %s359 = sadd.s32 %s358, 1
    %p362 = scmp.eq.s32.totalorder %s30, 1
    %p363 = scmp.ne.s32.totalorder %s358, %s360
    %p364 = scmp.eq.s32.totalorder %s30, 0
    %p365 = por %p363, %p364
    %p366 = scmp.ne.s32.totalorder %s358, %s360
    %p367 = scmp.eq.s32.totalorder %s35, 1
    %p368 = por %p366, %p367
    %p369 = scmp.ne.s32.totalorder %s360, %s361
    %p370 = scmp.eq.s32.totalorder %s35, 0
    %p371 = por %p369, %p370
    %p372 = scmp.ne.s32.totalorder %s360, %s361
    %p373 = scmp.eq.s32.totalorder %s36, 1
    %p374 = por %p372, %p373
    %p376 = scmp.ne.s32.totalorder %s361, %s375
    %p377 = scmp.eq.s32.totalorder %s36, 0
    %p378 = por %p376, %p377
    %s380 = sadd.s32 %s379, 1
    %p383 = scmp.eq.s32.totalorder %s30, 1
    %p384 = scmp.ne.s32.totalorder %s379, %s381
    %p385 = scmp.eq.s32.totalorder %s30, 0
    %p386 = por %p384, %p385
    %p387 = scmp.ne.s32.totalorder %s379, %s381
    %p388 = scmp.eq.s32.totalorder %s35, 1
    %p389 = por %p387, %p388
    %p390 = scmp.ne.s32.totalorder %s381, %s382
    %p391 = scmp.eq.s32.totalorder %s35, 0
    %p392 = por %p390, %p391
    %p393 = scmp.ne.s32.totalorder %s381, %s382
    %p394 = scmp.eq.s32.totalorder %s36, 1
    %p395 = por %p393, %p394
    %p397 = scmp.ne.s32.totalorder %s382, %s396
    %p398 = scmp.eq.s32.totalorder %s36, 0
    %p399 = por %p397, %p398
    %s401 = sadd.s32 %s400, 1
    %p404 = scmp.eq.s32.totalorder %s30, 1
    %p405 = scmp.ne.s32.totalorder %s400, %s402
    %p406 = scmp.eq.s32.totalorder %s30, 0
    %p407 = por %p405, %p406
    %p408 = scmp.ne.s32.totalorder %s400, %s402
    %p409 = scmp.eq.s32.totalorder %s35, 1
    %p410 = por %p408, %p409
    %p411 = scmp.ne.s32.totalorder %s402, %s403
    %p412 = scmp.eq.s32.totalorder %s35, 0
    %p413 = por %p411, %p412
    %p414 = scmp.ne.s32.totalorder %s402, %s403
    %p415 = scmp.eq.s32.totalorder %s36, 1
    %p416 = por %p414, %p415
    %p418 = scmp.ne.s32.totalorder %s403, %s417
    %p419 = scmp.eq.s32.totalorder %s36, 0
    %p420 = por %p418, %p419
    %s422 = sadd.s32 %s421, 1
    %p425 = scmp.eq.s32.totalorder %s30, 1
    %p426 = scmp.ne.s32.totalorder %s421, %s423
    %p427 = scmp.eq.s32.totalorder %s30, 0
    %p428 = por %p426, %p427
    %p429 = scmp.ne.s32.totalorder %s421, %s423
    %p430 = scmp.eq.s32.totalorder %s35, 1
    %p431 = por %p429, %p430
    %p432 = scmp.ne.s32.totalorder %s423, %s424
    %p433 = scmp.eq.s32.totalorder %s35, 0
    %p434 = por %p432, %p433
    %p435 = scmp.ne.s32.totalorder %s423, %s424
    %p436 = scmp.eq.s32.totalorder %s36, 1
    %p437 = por %p435, %p436
    %p439 = scmp.ne.s32.totalorder %s424, %s438
    %p440 = scmp.eq.s32.totalorder %s36, 0
    %p441 = por %p439, %p440
    %s443 = sadd.s32 %s442, 1
    %p446 = scmp.eq.s32.totalorder %s30, 1
    %p447 = scmp.ne.s32.totalorder %s442, %s444
    %p448 = scmp.eq.s32.totalorder %s30, 0
    %p449 = por %p447, %p448
    %p450 = scmp.ne.s32.totalorder %s442, %s444
    %p451 = scmp.eq.s32.totalorder %s35, 1
    %p452 = por %p450, %p451
    %p453 = scmp.ne.s32.totalorder %s444, %s445
    %p454 = scmp.eq.s32.totalorder %s35, 0
    %p455 = por %p453, %p454
    %p456 = scmp.ne.s32.totalorder %s444, %s445
    %p457 = scmp.eq.s32.totalorder %s36, 1
    %p458 = por %p456, %p457
    %p460 = scmp.ne.s32.totalorder %s445, %s459
    %p461 = scmp.eq.s32.totalorder %s36, 0
    %p462 = por %p460, %p461
    %s464 = sadd.s32 %s463, 1
    %p467 = scmp.eq.s32.totalorder %s30, 1
    %p468 = scmp.ne.s32.totalorder %s463, %s465
    %p469 = scmp.eq.s32.totalorder %s30, 0
    %p470 = por %p468, %p469
    %p471 = scmp.ne.s32.totalorder %s463, %s465
    %p472 = scmp.eq.s32.totalorder %s35, 1
    %p473 = por %p471, %p472
    %p474 = scmp.ne.s32.totalorder %s465, %s466
    %p475 = scmp.eq.s32.totalorder %s35, 0
    %p476 = por %p474, %p475
    %p477 = scmp.ne.s32.totalorder %s465, %s466
    %p478 = scmp.eq.s32.totalorder %s36, 1
    %p479 = por %p477, %p478
    %p481 = scmp.ne.s32.totalorder %s466, %s480
    %p482 = scmp.eq.s32.totalorder %s36, 0
    %p483 = por %p481, %p482
    %s485 = sadd.s32 %s484, 1
    %p488 = scmp.eq.s32.totalorder %s30, 1
    %p489 = scmp.ne.s32.totalorder %s484, %s486
    %p490 = scmp.eq.s32.totalorder %s30, 0
    %p491 = por %p489, %p490
    %p492 = scmp.ne.s32.totalorder %s484, %s486
    %p493 = scmp.eq.s32.totalorder %s35, 1
    %p494 = por %p492, %p493
    %p495 = scmp.ne.s32.totalorder %s486, %s487
    %p496 = scmp.eq.s32.totalorder %s35, 0
    %p497 = por %p495, %p496
    %p498 = scmp.ne.s32.totalorder %s486, %s487
    %p499 = scmp.eq.s32.totalorder %s36, 1
    %p500 = por %p498, %p499
    %p502 = scmp.ne.s32.totalorder %s487, %s501
    %p503 = scmp.eq.s32.totalorder %s36, 0
    %p504 = por %p502, %p503
    %s506 = sadd.s32 %s505, 1
    %p509 = scmp.eq.s32.totalorder %s30, 1
    %p510 = scmp.ne.s32.totalorder %s505, %s507
    %p511 = scmp.eq.s32.totalorder %s30, 0
    %p512 = por %p510, %p511
    %p513 = scmp.ne.s32.totalorder %s505, %s507
    %p514 = scmp.eq.s32.totalorder %s35, 1
    %p515 = por %p513, %p514
    %p516 = scmp.ne.s32.totalorder %s507, %s508
    %p517 = scmp.eq.s32.totalorder %s35, 0
    %p518 = por %p516, %p517
    %p519 = scmp.ne.s32.totalorder %s507, %s508
    %p520 = scmp.eq.s32.totalorder %s36, 1
    %p521 = por %p519, %p520
    %p523 = scmp.ne.s32.totalorder %s508, %s522
    %p524 = scmp.eq.s32.totalorder %s36, 0
    %p525 = por %p523, %p524
    %s527 = sadd.s32 %s526, 1
    %p530 = scmp.eq.s32.totalorder %s30, 1
    %p531 = scmp.ne.s32.totalorder %s526, %s528
    %p532 = scmp.eq.s32.totalorder %s30, 0
    %p533 = por %p531, %p532
    %p534 = scmp.ne.s32.totalorder %s526, %s528
    %p535 = scmp.eq.s32.totalorder %s35, 1
    %p536 = por %p534, %p535
    %p537 = scmp.ne.s32.totalorder %s528, %s529
    %p538 = scmp.eq.s32.totalorder %s35, 0
    %p539 = por %p537, %p538
    %p540 = scmp.ne.s32.totalorder %s528, %s529
    %p541 = scmp.eq.s32.totalorder %s36, 1
    %p542 = por %p540, %p541
    %p544 = scmp.ne.s32.totalorder %s529, %s543
    %p545 = scmp.eq.s32.totalorder %s36, 0
    %p546 = por %p544, %p545
    %s547 = ssub.s32 %s30, %s37
    %p548 = scmp.eq.s32.totalorder %s547, 0
    %s550 = sadd.s32 %s549, 1
    %s551 = scalar_select %p548, %s549, %s550
    %p554 = pneg %p548
    %p555 = scmp.eq.s32.totalorder %s30, 1
    %p556 = por %p554, %p555
    %p557 = scmp.ne.s32.totalorder %s549, %s552
    %p558 = scmp.eq.s32.totalorder %s30, 0
    %p559 = por %p557, %p558
    %p560 = scmp.ne.s32.totalorder %s549, %s552
    %p561 = scmp.eq.s32.totalorder %s35, 1
    %p562 = por %p560, %p561
    %p563 = scmp.ne.s32.totalorder %s552, %s553
    %p564 = scmp.eq.s32.totalorder %s35, 0
    %p565 = por %p563, %p564
    %p566 = scmp.ne.s32.totalorder %s552, %s553
    %p567 = scmp.eq.s32.totalorder %s36, 1
    %p568 = por %p566, %p567
    %p570 = scmp.ne.s32.totalorder %s553, %s569
    %p571 = scmp.eq.s32.totalorder %s36, 0
    %p572 = por %p570, %p571
    %p573 = scmp.le.s32.totalorder 1, %s30
    %p574 = scmp.lt.s32.totalorder %s30, 3
    %p575 = pnand %p573, %p574
    %p576 = pneg %p575
    // Predicated region
    $region9: #{clip_image_encoder_forward.1} parent=5 // pred_check
      _
    $region10: #{clip_image_encoder_forward.1} parent=5 // pred_check_branch
      %578 = sbr.rel (%p575) target = $region12
    $region11: #{clip_image_encoder_forward.1} parent=5 // pred_region
      %s579 = ssub.s32 %s30, 1
      // Predicated region
      $region13: #{clip_image_encoder_forward.1} parent=11 // pred_check
        %p580 = pneg %p77
      $region14: #{clip_image_encoder_forward.1} parent=11 // pred_check_branch
        %582 = sbr.rel (%p580) target = $region16
      $region15: #{clip_image_encoder_forward.1} parent=11 // pred_region
        _
      $region16: #{clip_image_encoder_forward.1} parent=11 // pred_fallthru
        _
      // Predicated region
      $region17: #{clip_image_encoder_forward.1} parent=11 // pred_check
        %p583 = pneg %p98
      $region18: #{clip_image_encoder_forward.1} parent=11 // pred_check_branch
        %585 = sbr.rel (%p583) target = $region20
      $region19: #{clip_image_encoder_forward.1} parent=11 // pred_region
        _
      $region20: #{clip_image_encoder_forward.1} parent=11 // pred_fallthru
        _
      // Predicated region
      $region21: #{clip_image_encoder_forward.1} parent=11 // pred_check
        %p586 = pneg %p119
      $region22: #{clip_image_encoder_forward.1} parent=11 // pred_check_branch
        %588 = sbr.rel (%p586) target = $region24
      $region23: #{clip_image_encoder_forward.1} parent=11 // pred_region
        _
      $region24: #{clip_image_encoder_forward.1} parent=11 // pred_fallthru
        _
      // Predicated region
      $region25: #{clip_image_encoder_forward.1} parent=11 // pred_check
        %p589 = pneg %p140
      $region26: #{clip_image_encoder_forward.1} parent=11 // pred_check_branch
        %591 = sbr.rel (%p589) target = $region28
      $region27: #{clip_image_encoder_forward.1} parent=11 // pred_region
        _
      $region28: #{clip_image_encoder_forward.1} parent=11 // pred_fallthru
        _
      // Predicated region
      $region29: #{clip_image_encoder_forward.1} parent=11 // pred_check
        %p592 = pneg %p161
      $region30: #{clip_image_encoder_forward.1} parent=11 // pred_check_branch
        %594 = sbr.rel (%p592) target = $region32
      $region31: #{clip_image_encoder_forward.1} parent=11 // pred_region
        _
      $region32: #{clip_image_encoder_forward.1} parent=11 // pred_fallthru
        _
      // Predicated region
      $region33: #{clip_image_encoder_forward.1} parent=11 // pred_check
        %p595 = pneg %p182
      $region34: #{clip_image_encoder_forward.1} parent=11 // pred_check_branch
        %597 = sbr.rel (%p595) target = $region36
      $region35: #{clip_image_encoder_forward.1} parent=11 // pred_region
        _
      $region36: #{clip_image_encoder_forward.1} parent=11 // pred_fallthru
        _
      // Predicated region
      $region37: #{clip_image_encoder_forward.1} parent=11 // pred_check
        %p598 = pneg %p203
      $region38: #{clip_image_encoder_forward.1} parent=11 // pred_check_branch
        %600 = sbr.rel (%p598) target = $region40
      $region39: #{clip_image_encoder_forward.1} parent=11 // pred_region
        _
      $region40: #{clip_image_encoder_forward.1} parent=11 // pred_fallthru
        _
      // Predicated region
      $region41: #{clip_image_encoder_forward.1} parent=11 // pred_check
        %p601 = pneg %p224
      $region42: #{clip_image_encoder_forward.1} parent=11 // pred_check_branch
        %603 = sbr.rel (%p601) target = $region44
      $region43: #{clip_image_encoder_forward.1} parent=11 // pred_region
        _
      $region44: #{clip_image_encoder_forward.1} parent=11 // pred_fallthru
        _
      // Predicated region
      $region45: #{clip_image_encoder_forward.1} parent=11 // pred_check
        %p604 = pneg %p245
      $region46: #{clip_image_encoder_forward.1} parent=11 // pred_check_branch
        %606 = sbr.rel (%p604) target = $region48
      $region47: #{clip_image_encoder_forward.1} parent=11 // pred_region
        _
      $region48: #{clip_image_encoder_forward.1} parent=11 // pred_fallthru
        _
      // Predicated region
      $region49: #{clip_image_encoder_forward.1} parent=11 // pred_check
        %p607 = pneg %p266
      $region50: #{clip_image_encoder_forward.1} parent=11 // pred_check_branch
        %609 = sbr.rel (%p607) target = $region52
      $region51: #{clip_image_encoder_forward.1} parent=11 // pred_region
        _
      $region52: #{clip_image_encoder_forward.1} parent=11 // pred_fallthru
        _
      // Predicated region
      $region53: #{clip_image_encoder_forward.1} parent=11 // pred_check
        %p610 = pneg %p287
      $region54: #{clip_image_encoder_forward.1} parent=11 // pred_check_branch
        %612 = sbr.rel (%p610) target = $region56
      $region55: #{clip_image_encoder_forward.1} parent=11 // pred_region
        _
      $region56: #{clip_image_encoder_forward.1} parent=11 // pred_fallthru
        _
      // Predicated region
      $region57: #{clip_image_encoder_forward.1} parent=11 // pred_check
        %p613 = pneg %p308
      $region58: #{clip_image_encoder_forward.1} parent=11 // pred_check_branch
        %615 = sbr.rel (%p613) target = $region60
      $region59: #{clip_image_encoder_forward.1} parent=11 // pred_region
        _
      $region60: #{clip_image_encoder_forward.1} parent=11 // pred_fallthru
        _
      // Predicated region
      $region61: #{clip_image_encoder_forward.1} parent=11 // pred_check
        %p616 = pneg %p329
      $region62: #{clip_image_encoder_forward.1} parent=11 // pred_check_branch
        %618 = sbr.rel (%p616) target = $region64
      $region63: #{clip_image_encoder_forward.1} parent=11 // pred_region
        _
      $region64: #{clip_image_encoder_forward.1} parent=11 // pred_fallthru
        _
      // Predicated region
      $region65: #{clip_image_encoder_forward.1} parent=11 // pred_check
        %p619 = pneg %p350
      $region66: #{clip_image_encoder_forward.1} parent=11 // pred_check_branch
        %621 = sbr.rel (%p619) target = $region68
      $region67: #{clip_image_encoder_forward.1} parent=11 // pred_region
        _
      $region68: #{clip_image_encoder_forward.1} parent=11 // pred_fallthru
        _
      // Predicated region
      $region69: #{clip_image_encoder_forward.1} parent=11 // pred_check
        %p622 = pneg %p371
      $region70: #{clip_image_encoder_forward.1} parent=11 // pred_check_branch
        %624 = sbr.rel (%p622) target = $region72
      $region71: #{clip_image_encoder_forward.1} parent=11 // pred_region
        _
      $region72: #{clip_image_encoder_forward.1} parent=11 // pred_fallthru
        _
      // Predicated region
      $region73: #{clip_image_encoder_forward.1} parent=11 // pred_check
        %p625 = pneg %p392
      $region74: #{clip_image_encoder_forward.1} parent=11 // pred_check_branch
        %627 = sbr.rel (%p625) target = $region76
      $region75: #{clip_image_encoder_forward.1} parent=11 // pred_region
        _
      $region76: #{clip_image_encoder_forward.1} parent=11 // pred_fallthru
        _
      // Predicated region
      $region77: #{clip_image_encoder_forward.1} parent=11 // pred_check
        %p628 = pneg %p413
      $region78: #{clip_image_encoder_forward.1} parent=11 // pred_check_branch
        %630 = sbr.rel (%p628) target = $region80
      $region79: #{clip_image_encoder_forward.1} parent=11 // pred_region
        _
      $region80: #{clip_image_encoder_forward.1} parent=11 // pred_fallthru
        _
      // Predicated region
      $region81: #{clip_image_encoder_forward.1} parent=11 // pred_check
        %p631 = pneg %p434
      $region82: #{clip_image_encoder_forward.1} parent=11 // pred_check_branch
        %633 = sbr.rel (%p631) target = $region84
      $region83: #{clip_image_encoder_forward.1} parent=11 // pred_region
        _
      $region84: #{clip_image_encoder_forward.1} parent=11 // pred_fallthru
        _
      // Predicated region
      $region85: #{clip_image_encoder_forward.1} parent=11 // pred_check
        %p634 = pneg %p455
      $region86: #{clip_image_encoder_forward.1} parent=11 // pred_check_branch
        %636 = sbr.rel (%p634) target = $region88
      $region87: #{clip_image_encoder_forward.1} parent=11 // pred_region
        _
      $region88: #{clip_image_encoder_forward.1} parent=11 // pred_fallthru
        _
      // Predicated region
      $region89: #{clip_image_encoder_forward.1} parent=11 // pred_check
        %p637 = pneg %p476
      $region90: #{clip_image_encoder_forward.1} parent=11 // pred_check_branch
        %639 = sbr.rel (%p637) target = $region92
      $region91: #{clip_image_encoder_forward.1} parent=11 // pred_region
        _
      $region92: #{clip_image_encoder_forward.1} parent=11 // pred_fallthru
        _
      // Predicated region
      $region93: #{clip_image_encoder_forward.1} parent=11 // pred_check
        %p640 = pneg %p497
      $region94: #{clip_image_encoder_forward.1} parent=11 // pred_check_branch
        %642 = sbr.rel (%p640) target = $region96
      $region95: #{clip_image_encoder_forward.1} parent=11 // pred_region
        _
      $region96: #{clip_image_encoder_forward.1} parent=11 // pred_fallthru
        _
      // Predicated region
      $region97: #{clip_image_encoder_forward.1} parent=11 // pred_check
        %p643 = pneg %p518
      $region98: #{clip_image_encoder_forward.1} parent=11 // pred_check_branch
        %645 = sbr.rel (%p643) target = $region100
      $region99: #{clip_image_encoder_forward.1} parent=11 // pred_region
        _
      $region100: #{clip_image_encoder_forward.1} parent=11 // pred_fallthru
        _
      // Predicated region
      $region101: #{clip_image_encoder_forward.1} parent=11 // pred_check
        %p646 = pneg %p539
      $region102: #{clip_image_encoder_forward.1} parent=11 // pred_check_branch
        %648 = sbr.rel (%p646) target = $region104
      $region103: #{clip_image_encoder_forward.1} parent=11 // pred_region
        _
      $region104: #{clip_image_encoder_forward.1} parent=11 // pred_fallthru
        _
    $region12: #{clip_image_encoder_forward.1} parent=5 // pred_fallthru
      _
    %p649 = scmp.lt.s32.totalorder %s30, 2
    // Predicated region
    $region105: #{clip_image_encoder_forward.1} parent=5 // pred_check
      %p650 = pneg %p649
    $region106: #{clip_image_encoder_forward.1} parent=5 // pred_check_branch
      %652 = sbr.rel (%p650) target = $region108
    $region107: #{clip_image_encoder_forward.1} parent=5 // pred_region
      // Predicated region
      $region109: #{clip_image_encoder_forward.1} parent=107 // pred_check
        %p653 = pneg %p50
      $region110: #{clip_image_encoder_forward.1} parent=107 // pred_check_branch
        %655 = sbr.rel (%p653) target = $region112
      $region111: #{clip_image_encoder_forward.1} parent=107 // pred_region
        %p656 = scmp.lt.s32.totalorder %s30, 1
        %s657 = scalar_select %p656, %s30, 1
        %s658 = smul.addr %s657, 2
        %s659 = smul.addr %s658, 8
        %s660 = scalar_lea.vmem %s0, %s659
      $region112: #{clip_image_encoder_forward.1} parent=107 // pred_fallthru
        _
    $region108: #{clip_image_encoder_forward.1} parent=5 // pred_fallthru
      _
    %p661 = scmp.le.s32.totalorder 1, %s30
    %p662 = scmp.lt.s32.totalorder %s30, 3
    %p663 = pnand %p661, %p662
    %p664 = pneg %p663
    // Predicated region
    $region113: #{clip_image_encoder_forward.1} parent=5 // pred_check
      _
    $region114: #{clip_image_encoder_forward.1} parent=5 // pred_check_branch
      %666 = sbr.rel (%p663) target = $region116
    $region115: #{clip_image_encoder_forward.1} parent=5 // pred_region
      %s667 = ssub.s32 %s30, 1
      %p668 = scmp.lt.s32.totalorder %s35, 1
      %s669 = scalar_select %p668, %s35, 1
      %s670 = smul.addr %s669, 2
      %s671 = smul.addr %s670, 8
      %s672 = scalar_lea.vmem %s0, %s671
      %p673 = pneg %p56
      %p674 = pneg %p53
      %p675 = pneg %p77
      %p676 = pneg %p74
      %p677 = pneg %p98
      %p678 = pneg %p95
      %p679 = pneg %p119
      %p680 = pneg %p116
      %p681 = pneg %p140
      %p682 = pneg %p137
      %p683 = pneg %p161
      %p684 = pneg %p158
      %p685 = pneg %p182
      %p686 = pneg %p179
      %p687 = pneg %p203
      %p688 = pneg %p200
      %p689 = pneg %p224
      %p690 = pneg %p221
      %p691 = pneg %p245
      %p692 = pneg %p242
      %p693 = pneg %p266
      %p694 = pneg %p263
      %p695 = pneg %p287
      %p696 = pneg %p284
      %p697 = pneg %p308
      %p698 = pneg %p305
      %p699 = pneg %p329
      %p700 = pneg %p326
      %p701 = pneg %p350
      %p702 = pneg %p347
      %p703 = pneg %p371
      %p704 = pneg %p368
      %p705 = pneg %p392
      %p706 = pneg %p389
      %p707 = pneg %p413
      %p708 = pneg %p410
      %p709 = pneg %p434
      %p710 = pneg %p431
      %p711 = pneg %p455
      %p712 = pneg %p452
      %p713 = pneg %p476
      %p714 = pneg %p473
      %p715 = pneg %p497
      %p716 = pneg %p494
      %p717 = pneg %p518
      %p718 = pneg %p515
      %p719 = pneg %p539
      %p720 = pneg %p536
      %p721 = pneg %p565
      %p722 = pneg %p562
      %p723 = scmp.lt.s32.totalorder %s35, 1
      %s724 = scalar_select %p723, %s35, 1
      %s725 = scalar_lea.vmem %s24, %s724
      %p726 = scmp.lt.s32.totalorder %s35, 1
      %s727 = scalar_select %p726, %s35, 1
      %s728 = smul.addr %s727, 2
      %s729 = smul.addr %s728, 8
      %s730 = scalar_lea.vmem %s0, %s729
      %p731 = scmp.lt.s32.totalorder %s35, 1
      %s732 = scalar_select %p731, %s35, 1
      %s733 = scalar_lea.vmem %s24, %s732
      %v735 = vld [vmem:[%s730] sm:$0x1f]
      %v736 = vld [vmem:[%s730 + $0x8] sm:$0x1f]
      %v737 = vld [vmem:[%s1] sm:$0xff]
      %v738 = vld [vmem:[%s1 + $0x8] sm:$0xff]
      %v739 = vld [vmem:[%s1 + $0x10] sm:$0xff]
      %v740 = vld [vmem:[%s1 + $0x18] sm:$0xff]
      %v741 = vld [vmem:[%s1 + $0x20] sm:$0xff]
      %v742 = vld [vmem:[%s1 + $0x28] sm:$0xff]
      %v743 = vld [vmem:[%s1 + $0x30] sm:$0xff]
      %v744 = vld [vmem:[%s1 + $0x38] sm:$0xff]
      %v745 = vld [vmem:[%s1 + $0x40] sm:$0xff]
      %v746 = vld [vmem:[%s1 + $0x48] sm:$0xff]
      %v747 = vld [vmem:[%s1 + $0x50] sm:$0xff]
      %v748 = vld [vmem:[%s1 + $0x58] sm:$0xff]
      %v749 = vld [vmem:[%s1 + $0x60] sm:$0xff]
      %v750 = vld [vmem:[%s1 + $0x68] sm:$0xff]
      %v751 = vld [vmem:[%s1 + $0x70] sm:$0xff]
      %v752 = vld [vmem:[%s1 + $0x78] sm:$0xff]
      %v753 = vld [vmem:[%s1 + $0x80] sm:$0xff]
      %v754 = vld [vmem:[%s1 + $0x88] sm:$0xff]
      %v755 = vld [vmem:[%s1 + $0x90] sm:$0xff]
      %v756 = vld [vmem:[%s1 + $0x98] sm:$0xff]
      %v757 = vld [vmem:[%s1 + $0xa0] sm:$0xff]
      %v758 = vld [vmem:[%s1 + $0xa8] sm:$0xff]
      %v759 = vld [vmem:[%s1 + $0xb0] sm:$0xff]
      %v760 = vld [vmem:[%s1 + $0xb8] sm:$0xff]
      %v761 = vpack.c.bf16 %v735, %v735
      %v762 = vpack.c.bf16 %v736, %v736
      %v763 = vpack.c.bf16 %v738, %v737
      %v764 = vpack.c.bf16 %v740, %v739
      %v765 = vpack.c.bf16 %v742, %v741
      %v766 = vpack.c.bf16 %v744, %v743
      %v767 = vpack.c.bf16 %v746, %v745
      %v768 = vpack.c.bf16 %v748, %v747
      %v769 = vpack.c.bf16 %v750, %v749
      %v770 = vpack.c.bf16 %v752, %v751
      %v771 = vpack.c.bf16 %v754, %v753
      %v772 = vpack.c.bf16 %v756, %v755
      %v773 = vpack.c.bf16 %v758, %v757
      %v774 = vpack.c.bf16 %v760, %v759
      %v775 = vld [vmem:[%s2] sm:$0x1f]
      %vm776 = vcmask 523264
      %v778 = vsel %vm776, %v762, 0
      %780 = vmatpush.bf16.msra.mxu0 %v770
      %781 = vmatpush.bf16.msra.mxu0 %v769
      %782 = vmatpush.bf16.msra.mxu0 %v768
      %783 = vmatpush.bf16.msra.mxu0 %v767
      %784 = vmatpush.bf16.msra.mxu0 %v766
      %785 = vmatpush.bf16.msra.mxu0 %v765
      %786 = vmatpush.bf16.msra.mxu0 %v764
      %787 = vmatpush.bf16.msra.mxu0 %v763
      %788 = vmatmul.bf16.gmra.mxu0 %v761
      %v789 = vpop.f32.mrf.mxu0
      %v790 = vadd.f32 %v775, %v789
      %v791 = vpop.f32.mrf.mxu0
      %792 = vdwg.mxu0
      %793 = vmatpush.bf16.msra.mxu0 0
      %794 = vmatpush.bf16.msra.mxu0 0
      %795 = vmatpush.bf16.msra.mxu0 0
      %796 = vmatpush.bf16.msra.mxu0 0
      %797 = vmatpush.bf16.msra.mxu0 %v774
      %798 = vmatpush.bf16.msra.mxu0 %v773
      %799 = vmatpush.bf16.msra.mxu0 %v772
      %800 = vmatpush.bf16.msra.mxu0 %v771
      %801 = vmatmul.bf16.gmra.mxu0 %v778
      %v802 = vpop.f32.mrf.mxu0
      %v803 = vadd.f32 %v790, %v802
      %v804 = vpop.f32.mrf.mxu0
      %805 = vdwg.mxu0
      %v806 = vld [vmem:[%s3] sm:$0x1]
      %v807 = vld [vmem:[%s4] sm:$0x1]
      %vm808 = vcmask 520192
      %v809 = vsel %vm808, %v803, 0.0
      %810 = vadd.xlane.f32.xlu0 %v809
      %v811 = vpop.xlane.xlu0 %810
      %v812 = vrcp.pop 64.0
      %v813 = vmul.f32 64.0, %v812
      %v814 = vsub.f32 1.0, %v813
      %v815 = vmul.f32 %v812, %v814
      %v816 = vadd.f32 %v812, %v815
      %vm817 = vweird.f32 %v812
      %v818 = vsel %vm817, %v812, %v816
      %v819 = vmul.f32 %v811, %v818
      %v820 = vsub.f32 %v803, %v819
      %v821 = vmul.f32 %v820, %v820
      %v822 = vsel %vm808, %v821, 0.0
      %823 = vadd.xlane.f32.xlu0 %v822
      %v824 = vpop.xlane.xlu0 %823
      %v825 = vmul.f32 %v824, %v818
      %v826 = vadd.f32 %v825, 1e-05
      %v827 = vrsqrt.pop %v826
      %v828 = vmul.f32 %v827, %v826
      %v829 = vmul.f32 %v828, %v827
      %v830 = vmul.f32 0.5, %v829
      %v831 = vsub.f32 1.5, %v830
      %v832 = vmul.f32 %v827, %v831
      %vm833 = vweird.f32 %v826
      %vm834 = vweird.f32 %v827
      %vm835 = vmor %vm833, %vm834
      %v836 = vsel %vm835, %v827, %v832
      %v837 = vmul.f32 %v820, %v836
      %v839 = vperm.slane %v806, 0
      %v841 = vmul.f32 %v837, %v839
      %v843 = vperm.slane %v807, 0
      %v845 = vadd.f32 %v841, %v843
      %v846 = vld [vmem:[%s5] sm:$0x1]
      %v847 = vld [vmem:[%s6] sm:$0x1]
      %v848 = vsel %vm808, %v845, 0.0
      %849 = vadd.xlane.f32.xlu0 %v848
      %v850 = vpop.xlane.xlu0 %849
      %v851 = vmul.f32 %v850, %v818
      %v852 = vsub.f32 %v845, %v851
      %v853 = vmul.f32 %v852, %v852
      %v854 = vsel %vm808, %v853, 0.0
      %855 = vadd.xlane.f32.xlu0 %v854
      %v856 = vpop.xlane.xlu0 %855
      %v857 = vmul.f32 %v856, %v818
      %v858 = vadd.f32 %v857, 1e-05
      %v859 = vrsqrt.pop %v858
      %v860 = vmul.f32 %v859, %v858
      %v861 = vmul.f32 %v860, %v859
      %v862 = vmul.f32 0.5, %v861
      %v863 = vsub.f32 1.5, %v862
      %v864 = vmul.f32 %v859, %v863
      %vm865 = vweird.f32 %v858
      %vm866 = vweird.f32 %v859
      %vm867 = vmor %vm865, %vm866
      %v868 = vsel %vm867, %v859, %v864
      %v869 = vmul.f32 %v852, %v868
      %v871 = vperm.slane %v846, 0
      %v873 = vmul.f32 %v869, %v871
      %v875 = vperm.slane %v847, 0
      %v877 = vadd.f32 %v873, %v875
      %v878 = vld [vmem:[%s7] sm:$0xff]
      %v879 = vld [vmem:[%s7 + $0x8] sm:$0xff]
      %v880 = vld [vmem:[%s7 + $0x10] sm:$0xff]
      %v881 = vld [vmem:[%s7 + $0x18] sm:$0xff]
      %v882 = vld [vmem:[%s7 + $0x20] sm:$0xff]
      %v883 = vld [vmem:[%s7 + $0x28] sm:$0xff]
      %v884 = vld [vmem:[%s7 + $0x30] sm:$0xff]
      %v885 = vld [vmem:[%s7 + $0x38] sm:$0xff]
      %v886 = vpack.c.bf16 %v877, %v877
      %v887 = vpack.c.bf16 %v879, %v878
      %v888 = vpack.c.bf16 %v881, %v880
      %v889 = vpack.c.bf16 %v883, %v882
      %v890 = vpack.c.bf16 %v885, %v884
      %v891 = vld [vmem:[%s8] sm:$0x1]
      %v893 = vperm.slane %v891, 0
      %v896 = vsel %vm776, %v886, 0
      %898 = vmatpush.bf16.msra.mxu0 0
      %899 = vmatpush.bf16.msra.mxu0 0
      %900 = vmatpush.bf16.msra.mxu0 0
      %901 = vmatpush.bf16.msra.mxu0 0
      %902 = vmatpush.bf16.msra.mxu0 %v890
      %903 = vmatpush.bf16.msra.mxu0 %v889
      %904 = vmatpush.bf16.msra.mxu0 %v888
      %905 = vmatpush.bf16.msra.mxu0 %v887
      %906 = vmatmul.bf16.gmra.mxu0 %v896
      %v907 = vpop.f32.mrf.mxu0
      %v908 = vadd.f32 %v893, %v907
      %v909 = vpop.f32.mrf.mxu0
      %910 = vdwg.mxu0
      %v911 = vmul.f32 %v908, 0.17677669
      %v912 = vld [vmem:[%s9] sm:$0xff]
      %v913 = vld [vmem:[%s9 + $0x8] sm:$0xff]
      %v914 = vld [vmem:[%s9 + $0x10] sm:$0xff]
      %v915 = vld [vmem:[%s9 + $0x18] sm:$0xff]
      %v916 = vld [vmem:[%s9 + $0x20] sm:$0xff]
      %v917 = vld [vmem:[%s9 + $0x28] sm:$0xff]
      %v918 = vld [vmem:[%s9 + $0x30] sm:$0xff]
      %v919 = vld [vmem:[%s9 + $0x38] sm:$0xff]
      %v920 = vpack.c.bf16 %v913, %v912
      %v921 = vpack.c.bf16 %v915, %v914
      %v922 = vpack.c.bf16 %v917, %v916
      %v923 = vpack.c.bf16 %v919, %v918
      %v924 = vld [vmem:[%s10] sm:$0x1]
      %v926 = vperm.slane %v924, 0
      %928 = vmatpush.bf16.msra.mxu0 0
      %929 = vmatpush.bf16.msra.mxu0 0
      %930 = vmatpush.bf16.msra.mxu0 0
      %931 = vmatpush.bf16.msra.mxu0 0
      %932 = vmatpush.bf16.msra.mxu0 %v923
      %933 = vmatpush.bf16.msra.mxu0 %v922
      %934 = vmatpush.bf16.msra.mxu0 %v921
      %935 = vmatpush.bf16.msra.mxu0 %v920
      %936 = vmatmul.bf16.gmra.mxu0 %v896
      %v937 = vpop.f32.mrf.mxu0
      %v938 = vadd.f32 %v926, %v937
      %v939 = vpop.f32.mrf.mxu0
      %940 = vdwg.mxu0
      %v941 = vld [vmem:[%s11] sm:$0xff]
      %v942 = vld [vmem:[%s11 + $0x8] sm:$0xff]
      %v943 = vld [vmem:[%s11 + $0x10] sm:$0xff]
      %v944 = vld [vmem:[%s11 + $0x18] sm:$0xff]
      %v945 = vld [vmem:[%s11 + $0x20] sm:$0xff]
      %v946 = vld [vmem:[%s11 + $0x28] sm:$0xff]
      %v947 = vld [vmem:[%s11 + $0x30] sm:$0xff]
      %v948 = vld [vmem:[%s11 + $0x38] sm:$0xff]
      %v949 = vpack.c.bf16 %v942, %v941
      %v950 = vpack.c.bf16 %v944, %v943
      %v951 = vpack.c.bf16 %v946, %v945
      %v952 = vpack.c.bf16 %v948, %v947
      %v953 = vld [vmem:[%s12] sm:$0x1]
      %v955 = vperm.slane %v953, 0
      %957 = vmatpush.bf16.msra.mxu0 0
      %958 = vmatpush.bf16.msra.mxu0 0
      %959 = vmatpush.bf16.msra.mxu0 0
      %960 = vmatpush.bf16.msra.mxu0 0
      %961 = vmatpush.bf16.msra.mxu0 %v952
      %962 = vmatpush.bf16.msra.mxu0 %v951
      %963 = vmatpush.bf16.msra.mxu0 %v950
      %964 = vmatpush.bf16.msra.mxu0 %v949
      %965 = vmatmul.bf16.gmra.mxu0 %v896
      %v966 = vpop.f32.mrf.mxu0
      %v967 = vadd.f32 %v955, %v966
      %v968 = vpop.f32.mrf.mxu0
      %969 = vdwg.mxu0
      %970 = vxpose.xlu0.b32.start [1/16] %v938, 128
      %971 = vxpose.xlu0.b32.cont [2/16] 0.0, 128
      %972 = vxpose.xlu0.b32.cont [3/16] 0.0, 128
      %973 = vxpose.xlu0.b32.cont [4/16] 0.0, 128
      %974 = vxpose.xlu0.b32.cont [5/16] 0.0, 128
      %975 = vxpose.xlu0.b32.cont [6/16] 0.0, 128
      %976 = vxpose.xlu0.b32.cont [7/16] 0.0, 128
      %977 = vxpose.xlu0.b32.cont [8/16] 0.0, 128
      %978 = vxpose.xlu0.b32.cont [9/16] 0.0, 128
      %979 = vxpose.xlu0.b32.cont [10/16] 0.0, 128
      %980 = vxpose.xlu0.b32.cont [11/16] 0.0, 128
      %981 = vxpose.xlu0.b32.cont [12/16] 0.0, 128
      %982 = vxpose.xlu0.b32.cont [13/16] 0.0, 128
      %983 = vxpose.xlu0.b32.cont [14/16] 0.0, 128
      %984 = vxpose.xlu0.b32.cont [15/16] 0.0, 128
      %985 = vxpose.xlu0.b32.end [16/16] 0.0, 128
      %v986 = vpop.trf.xlu0
      %v987 = vpop.trf.xlu0
      %v988 = vpop.trf.xlu0
      %v989 = vpop.trf.xlu0
      %v990 = vpop.trf.xlu0
      %v991 = vpop.trf.xlu0
      %v992 = vpop.trf.xlu0
      %v993 = vpop.trf.xlu0
      %v994 = vpop.trf.xlu0
      %v995 = vpop.trf.xlu0
      %v996 = vpop.trf.xlu0
      %v997 = vpop.trf.xlu0
      %v998 = vpop.trf.xlu0
      %v999 = vpop.trf.xlu0
      %v1000 = vpop.trf.xlu0
      %v1001 = vpop.trf.xlu0
      %v1002 = vpack.c.bf16 %v911, %v911
      %v1003 = vpack.c.bf16 %v987, %v986
      %v1004 = vpack.c.bf16 %v989, %v988
      %vm1005 = vcmask 261120
      %v1007 = vsel %vm1005, %v1002, 0
      %1009 = vmatpush.bf16.msra.mxu0 0
      %1010 = vmatpush.bf16.msra.mxu0 0
      %1011 = vmatpush.bf16.msra.mxu0 0
      %1012 = vmatpush.bf16.msra.mxu0 0
      %1013 = vmatpush.bf16.msra.mxu0 0
      %1014 = vmatpush.bf16.msra.mxu0 0
      %1015 = vmatpush.bf16.msra.mxu0 %v1004
      %1016 = vmatpush.bf16.msra.mxu0 %v1003
      %1017 = vmatmul.bf16.gmra.mxu0 %v1007
      %v1018 = vpop.f32.mrf.mxu0
      %v1019 = vadd.f32 0.0, %v1018
      %v1020 = vpop.f32.mrf.mxu0
      %1021 = vdwg.mxu0
      %vm1022 = vcmask 36864
      %v1023 = vsel %vm1022, %v1019, -inf
      %1024 = vmax.xlane.f32.xlu0 %v1023
      %v1025 = vpop.xlane.xlu0 %1024
      %v1026 = vsub.f32 %v1019, %v1025
      %v1027 = vmul.f32 %v1026, 1.442695
      %v1028 = vpow.pop %v1027
      %v1029 = vsel %vm1022, %v1028, 0.0
      %1030 = vadd.xlane.f32.xlu0 %v1029
      %v1031 = vpop.xlane.xlu0 %1030
      %v1032 = vrcp.pop %v1031
      %v1033 = vmul.f32 %v1028, %v1032
      %v1034 = vpack.c.bf16 %v1033, %v1033
      %v1035 = vpack.c.bf16 %v967, %v967
      %vm1036 = vcmask 39936
      %v1038 = vsel %vm1036, %v1034, 0
      %vm1040 = vcmask 1041408
      %vm1041 = vcmask 1042432
      %v1042 = vsel %vm1040, 4294967295, 65535
      %v1043 = vsel %vm1041, %v1042, 0
      %v1045 = vand.u32 %v1035, %v1043
      %1047 = vmatpush.bf16.msra.mxu0 0
      %1048 = vmatpush.bf16.msra.mxu0 0
      %1049 = vmatpush.bf16.msra.mxu0 0
      %1050 = vmatpush.bf16.msra.mxu0 0
      %1051 = vmatpush.bf16.msra.mxu0 0
      %1052 = vmatpush.bf16.msra.mxu0 0
      %1053 = vmatpush.bf16.msra.mxu0 0
      %1054 = vmatpush.bf16.msra.mxu0 %v1045
      %1055 = vmatmul.bf16.gmra.mxu0 %v1038
      %v1056 = vpop.f32.mrf.mxu0
      %v1057 = vadd.f32 0.0, %v1056
      %v1058 = vpop.f32.mrf.mxu0
      %1059 = vdwg.mxu0
      %v1060 = vld [vmem:[%s13] sm:$0xff]
      %v1061 = vld [vmem:[%s13 + $0x8] sm:$0xff]
      %v1062 = vld [vmem:[%s13 + $0x10] sm:$0xff]
      %v1063 = vld [vmem:[%s13 + $0x18] sm:$0xff]
      %v1064 = vpack.c.bf16 %v1057, %v1057
      %v1065 = vpack.c.bf16 %v1061, %v1060
      %v1066 = vpack.c.bf16 %v1063, %v1062
      %s1067 = scalar_lea.vmem %s7, 64
      %v1068 = vld [vmem:[%s1067] sm:$0xff]
      %v1069 = vld [vmem:[%s1067 + $0x8] sm:$0xff]
      %v1070 = vld [vmem:[%s1067 + $0x10] sm:$0xff]
      %v1071 = vld [vmem:[%s1067 + $0x18] sm:$0xff]
      %v1072 = vld [vmem:[%s1067 + $0x20] sm:$0xff]
      %v1073 = vld [vmem:[%s1067 + $0x28] sm:$0xff]
      %v1074 = vld [vmem:[%s1067 + $0x30] sm:$0xff]
      %v1075 = vld [vmem:[%s1067 + $0x38] sm:$0xff]
      %v1076 = vpack.c.bf16 %v1069, %v1068
      %v1077 = vpack.c.bf16 %v1071, %v1070
      %v1078 = vpack.c.bf16 %v1073, %v1072
      %v1079 = vpack.c.bf16 %v1075, %v1074
      %s1080 = scalar_lea.vmem %s8, 1
      %v1081 = vld [vmem:[%s1080] sm:$0x1]
      %v1083 = vperm.slane %v1081, 0
      %1085 = vmatpush.bf16.msra.mxu0 0
      %1086 = vmatpush.bf16.msra.mxu0 0
      %1087 = vmatpush.bf16.msra.mxu0 0
      %1088 = vmatpush.bf16.msra.mxu0 0
      %1089 = vmatpush.bf16.msra.mxu0 %v1079
      %1090 = vmatpush.bf16.msra.mxu0 %v1078
      %1091 = vmatpush.bf16.msra.mxu0 %v1077
      %1092 = vmatpush.bf16.msra.mxu0 %v1076
      %1093 = vmatmul.bf16.gmra.mxu0 %v896
      %v1094 = vpop.f32.mrf.mxu0
      %v1095 = vadd.f32 %v1083, %v1094
      %v1096 = vpop.f32.mrf.mxu0
      %1097 = vdwg.mxu0
      %v1098 = vmul.f32 %v1095, 0.17677669
      %s1099 = scalar_lea.vmem %s9, 64
      %v1100 = vld [vmem:[%s1099] sm:$0xff]
      %v1101 = vld [vmem:[%s1099 + $0x8] sm:$0xff]
      %v1102 = vld [vmem:[%s1099 + $0x10] sm:$0xff]
      %v1103 = vld [vmem:[%s1099 + $0x18] sm:$0xff]
      %v1104 = vld [vmem:[%s1099 + $0x20] sm:$0xff]
      %v1105 = vld [vmem:[%s1099 + $0x28] sm:$0xff]
      %v1106 = vld [vmem:[%s1099 + $0x30] sm:$0xff]
      %v1107 = vld [vmem:[%s1099 + $0x38] sm:$0xff]
      %v1108 = vpack.c.bf16 %v1101, %v1100
      %v1109 = vpack.c.bf16 %v1103, %v1102
      %v1110 = vpack.c.bf16 %v1105, %v1104
      %v1111 = vpack.c.bf16 %v1107, %v1106
      %s1112 = scalar_lea.vmem %s10, 1
      %v1113 = vld [vmem:[%s1112] sm:$0x1]
      %v1115 = vperm.slane %v1113, 0
      %1117 = vmatpush.bf16.msra.mxu0 0
      %1118 = vmatpush.bf16.msra.mxu0 0
      %1119 = vmatpush.bf16.msra.mxu0 0
      %1120 = vmatpush.bf16.msra.mxu0 0
      %1121 = vmatpush.bf16.msra.mxu0 %v1111
      %1122 = vmatpush.bf16.msra.mxu0 %v1110
      %1123 = vmatpush.bf16.msra.mxu0 %v1109
      %1124 = vmatpush.bf16.msra.mxu0 %v1108
      %1125 = vmatmul.bf16.gmra.mxu0 %v896
      %v1126 = vpop.f32.mrf.mxu0
      %v1127 = vadd.f32 %v1115, %v1126
      %v1128 = vpop.f32.mrf.mxu0
      %1129 = vdwg.mxu0
      %s1130 = scalar_lea.vmem %s11, 64
      %v1131 = vld [vmem:[%s1130] sm:$0xff]
      %v1132 = vld [vmem:[%s1130 + $0x8] sm:$0xff]
      %v1133 = vld [vmem:[%s1130 + $0x10] sm:$0xff]
      %v1134 = vld [vmem:[%s1130 + $0x18] sm:$0xff]
      %v1135 = vld [vmem:[%s1130 + $0x20] sm:$0xff]
      %v1136 = vld [vmem:[%s1130 + $0x28] sm:$0xff]
      %v1137 = vld [vmem:[%s1130 + $0x30] sm:$0xff]
      %v1138 = vld [vmem:[%s1130 + $0x38] sm:$0xff]
      %v1139 = vpack.c.bf16 %v1132, %v1131
      %v1140 = vpack.c.bf16 %v1134, %v1133
      %v1141 = vpack.c.bf16 %v1136, %v1135
      %v1142 = vpack.c.bf16 %v1138, %v1137
      %s1143 = scalar_lea.vmem %s12, 1
      %v1144 = vld [vmem:[%s1143] sm:$0x1]
      %v1146 = vperm.slane %v1144, 0
      %1148 = vmatpush.bf16.msra.mxu0 0
      %1149 = vmatpush.bf16.msra.mxu0 0
      %1150 = vmatpush.bf16.msra.mxu0 0
      %1151 = vmatpush.bf16.msra.mxu0 0
      %1152 = vmatpush.bf16.msra.mxu0 %v1142
      %1153 = vmatpush.bf16.msra.mxu0 %v1141
      %1154 = vmatpush.bf16.msra.mxu0 %v1140
      %1155 = vmatpush.bf16.msra.mxu0 %v1139
      %1156 = vmatmul.bf16.gmra.mxu0 %v896
      %v1157 = vpop.f32.mrf.mxu0
      %v1158 = vadd.f32 %v1146, %v1157
      %v1159 = vpop.f32.mrf.mxu0
      %1160 = vdwg.mxu0
      %1161 = vxpose.xlu0.b32.start [1/16] %v1127, 128
      %1162 = vxpose.xlu0.b32.cont [2/16] 0.0, 128
      %1163 = vxpose.xlu0.b32.cont [3/16] 0.0, 128
      %1164 = vxpose.xlu0.b32.cont [4/16] 0.0, 128
      %1165 = vxpose.xlu0.b32.cont [5/16] 0.0, 128
      %1166 = vxpose.xlu0.b32.cont [6/16] 0.0, 128
      %1167 = vxpose.xlu0.b32.cont [7/16] 0.0, 128
      %1168 = vxpose.xlu0.b32.cont [8/16] 0.0, 128
      %1169 = vxpose.xlu0.b32.cont [9/16] 0.0, 128
      %1170 = vxpose.xlu0.b32.cont [10/16] 0.0, 128
      %1171 = vxpose.xlu0.b32.cont [11/16] 0.0, 128
      %1172 = vxpose.xlu0.b32.cont [12/16] 0.0, 128
      %1173 = vxpose.xlu0.b32.cont [13/16] 0.0, 128
      %1174 = vxpose.xlu0.b32.cont [14/16] 0.0, 128
      %1175 = vxpose.xlu0.b32.cont [15/16] 0.0, 128
      %1176 = vxpose.xlu0.b32.end [16/16] 0.0, 128
      %v1177 = vpop.trf.xlu0
      %v1178 = vpop.trf.xlu0
      %v1179 = vpop.trf.xlu0
      %v1180 = vpop.trf.xlu0
      %v1181 = vpop.trf.xlu0
      %v1182 = vpop.trf.xlu0
      %v1183 = vpop.trf.xlu0
      %v1184 = vpop.trf.xlu0
      %v1185 = vpop.trf.xlu0
      %v1186 = vpop.trf.xlu0
      %v1187 = vpop.trf.xlu0
      %v1188 = vpop.trf.xlu0
      %v1189 = vpop.trf.xlu0
      %v1190 = vpop.trf.xlu0
      %v1191 = vpop.trf.xlu0
      %v1192 = vpop.trf.xlu0
      %v1193 = vpack.c.bf16 %v1098, %v1098
      %v1194 = vpack.c.bf16 %v1178, %v1177
      %v1195 = vpack.c.bf16 %v1180, %v1179
      %v1197 = vsel %vm1005, %v1193, 0
      %1199 = vmatpush.bf16.msra.mxu0 0
      %1200 = vmatpush.bf16.msra.mxu0 0
      %1201 = vmatpush.bf16.msra.mxu0 0
      %1202 = vmatpush.bf16.msra.mxu0 0
      %1203 = vmatpush.bf16.msra.mxu0 0
      %1204 = vmatpush.bf16.msra.mxu0 0
      %1205 = vmatpush.bf16.msra.mxu0 %v1195
      %1206 = vmatpush.bf16.msra.mxu0 %v1194
      %1207 = vmatmul.bf16.gmra.mxu0 %v1197
      %v1208 = vpop.f32.mrf.mxu0
      %v1209 = vadd.f32 0.0, %v1208
      %v1210 = vpop.f32.mrf.mxu0
      %1211 = vdwg.mxu0
      %v1212 = vsel %vm1022, %v1209, -inf
      %1213 = vmax.xlane.f32.xlu0 %v1212
      %v1214 = vpop.xlane.xlu0 %1213
      %v1215 = vsub.f32 %v1209, %v1214
      %v1216 = vmul.f32 %v1215, 1.442695
      %v1217 = vpow.pop %v1216
      %v1218 = vsel %vm1022, %v1217, 0.0
      %1219 = vadd.xlane.f32.xlu0 %v1218
      %v1220 = vpop.xlane.xlu0 %1219
      %v1221 = vrcp.pop %v1220
      %v1222 = vmul.f32 %v1217, %v1221
      %v1223 = vpack.c.bf16 %v1222, %v1222
      %v1224 = vpack.c.bf16 %v1158, %v1158
      %v1226 = vsel %vm1036, %v1223, 0
      %v1229 = vand.u32 %v1224, %v1043
      %1231 = vmatpush.bf16.msra.mxu0 0
      %1232 = vmatpush.bf16.msra.mxu0 0
      %1233 = vmatpush.bf16.msra.mxu0 0
      %1234 = vmatpush.bf16.msra.mxu0 0
      %1235 = vmatpush.bf16.msra.mxu0 0
      %1236 = vmatpush.bf16.msra.mxu0 0
      %1237 = vmatpush.bf16.msra.mxu0 0
      %1238 = vmatpush.bf16.msra.mxu0 %v1229
      %1239 = vmatmul.bf16.gmra.mxu0 %v1226
      %v1240 = vpop.f32.mrf.mxu0
      %v1241 = vadd.f32 0.0, %v1240
      %v1242 = vpop.f32.mrf.mxu0
      %1243 = vdwg.mxu0
      %s1244 = scalar_lea.vmem %s13, 32
      %v1245 = vld [vmem:[%s1244] sm:$0xff]
      %v1246 = vld [vmem:[%s1244 + $0x8] sm:$0xff]
      %v1247 = vld [vmem:[%s1244 + $0x10] sm:$0xff]
      %v1248 = vld [vmem:[%s1244 + $0x18] sm:$0xff]
      %v1249 = vpack.c.bf16 %v1241, %v1241
      %v1250 = vpack.c.bf16 %v1246, %v1245
      %v1251 = vpack.c.bf16 %v1248, %v1247
      %v1253 = vsel %vm1005, %v1249, 0
      %1255 = vmatpush.bf16.msra.mxu0 0
      %1256 = vmatpush.bf16.msra.mxu0 0
      %1257 = vmatpush.bf16.msra.mxu0 0
      %1258 = vmatpush.bf16.msra.mxu0 0
      %1259 = vmatpush.bf16.msra.mxu0 0
      %1260 = vmatpush.bf16.msra.mxu0 0
      %1261 = vmatpush.bf16.msra.mxu0 %v1251
      %1262 = vmatpush.bf16.msra.mxu0 %v1250
      %1263 = vmatmul.bf16.gmra.mxu0 %v1253
      %v1264 = vpop.f32.mrf.mxu0
      %v1265 = vadd.f32 0.0, %v1264
      %v1266 = vpop.f32.mrf.mxu0
      %1267 = vdwg.mxu0
      %v1269 = vsel %vm1005, %v1064, 0
      %1271 = vmatpush.bf16.msra.mxu0 0
      %1272 = vmatpush.bf16.msra.mxu0 0
      %1273 = vmatpush.bf16.msra.mxu0 0
      %1274 = vmatpush.bf16.msra.mxu0 0
      %1275 = vmatpush.bf16.msra.mxu0 0
      %1276 = vmatpush.bf16.msra.mxu0 0
      %1277 = vmatpush.bf16.msra.mxu0 %v1066
      %1278 = vmatpush.bf16.msra.mxu0 %v1065
      %1279 = vmatmul.bf16.gmra.mxu0 %v1269
      %v1280 = vpop.f32.mrf.mxu0
      %v1281 = vadd.f32 %v1265, %v1280
      %v1282 = vpop.f32.mrf.mxu0
      %1283 = vdwg.mxu0
      %v1284 = vadd.f32 %v845, %v1281
      %v1285 = vld [vmem:[%s14] sm:$0x1]
      %v1287 = vperm.slane %v1285, 0
      %v1289 = vadd.f32 %v1284, %v1287
      %v1290 = vld [vmem:[%s15] sm:$0x1]
      %v1291 = vld [vmem:[%s16] sm:$0x1]
      %v1292 = vsel %vm808, %v1289, 0.0
      %1293 = vadd.xlane.f32.xlu0 %v1292
      %v1294 = vpop.xlane.xlu0 %1293
      %v1295 = vmul.f32 %v1294, %v818
      %v1296 = vsub.f32 %v1289, %v1295
      %v1297 = vmul.f32 %v1296, %v1296
      %v1298 = vsel %vm808, %v1297, 0.0
      %1299 = vadd.xlane.f32.xlu0 %v1298
      %v1300 = vpop.xlane.xlu0 %1299
      %v1301 = vmul.f32 %v1300, %v818
      %v1302 = vadd.f32 %v1301, 1e-05
      %v1303 = vrsqrt.pop %v1302
      %v1304 = vmul.f32 %v1303, %v1302
      %v1305 = vmul.f32 %v1304, %v1303
      %v1306 = vmul.f32 0.5, %v1305
      %v1307 = vsub.f32 1.5, %v1306
      %v1308 = vmul.f32 %v1303, %v1307
      %vm1309 = vweird.f32 %v1302
      %vm1310 = vweird.f32 %v1303
      %vm1311 = vmor %vm1309, %vm1310
      %v1312 = vsel %vm1311, %v1303, %v1308
      %v1313 = vmul.f32 %v1296, %v1312
      %v1315 = vperm.slane %v1290, 0
      %v1317 = vmul.f32 %v1313, %v1315
      %v1319 = vperm.slane %v1291, 0
      %v1321 = vadd.f32 %v1317, %v1319
      %v1322 = vld [vmem:[%s17] sm:$0xff]
      %v1323 = vld [vmem:[%s17 + $0x8] sm:$0xff]
      %v1324 = vld [vmem:[%s17 + $0x10] sm:$0xff]
      %v1325 = vld [vmem:[%s17 + $0x18] sm:$0xff]
      %v1326 = vld [vmem:[%s17 + $0x20] sm:$0xff]
      %v1327 = vld [vmem:[%s17 + $0x28] sm:$0xff]
      %v1328 = vld [vmem:[%s17 + $0x30] sm:$0xff]
      %v1329 = vld [vmem:[%s17 + $0x38] sm:$0xff]
      %v1330 = vpack.c.bf16 %v1321, %v1321
      %v1331 = vpack.c.bf16 %v1323, %v1322
      %v1332 = vpack.c.bf16 %v1325, %v1324
      %v1333 = vpack.c.bf16 %v1327, %v1326
      %v1334 = vpack.c.bf16 %v1329, %v1328
      %v1335 = vld [vmem:[%s18] sm:$0x1]
      %v1337 = vperm.slane %v1335, 0
      %v1340 = vsel %vm776, %v1330, 0
      %1342 = vmatpush.bf16.msra.mxu0 0
      %1343 = vmatpush.bf16.msra.mxu0 0
      %1344 = vmatpush.bf16.msra.mxu0 0
      %1345 = vmatpush.bf16.msra.mxu0 0
      %1346 = vmatpush.bf16.msra.mxu0 %v1334
      %1347 = vmatpush.bf16.msra.mxu0 %v1333
      %1348 = vmatpush.bf16.msra.mxu0 %v1332
      %1349 = vmatpush.bf16.msra.mxu0 %v1331
      %1350 = vmatmul.bf16.gmra.mxu0 %v1340
      %v1351 = vpop.f32.mrf.mxu0
      %v1352 = vadd.f32 %v1337, %v1351
      %v1353 = vpop.f32.mrf.mxu0
      %1354 = vdwg.mxu0
      %v1355 = vmul.f32 %v1352, 1.702
      %v1356 = vxor.u32 %v1355, 2147483648
      %v1357 = vmul.f32 %v1356, 1.442695
      %v1358 = vpow.pop %v1357
      %v1359 = vadd.f32 %v1358, 1.0
      %v1360 = vrcp.pop %v1359
      %v1361 = vmul.f32 %v1359, %v1360
      %v1362 = vsub.f32 1.0, %v1361
      %v1363 = vmul.f32 %v1360, %v1362
      %v1364 = vadd.f32 %v1360, %v1363
      %vm1365 = vweird.f32 %v1359
      %vm1366 = vweird.f32 %v1360
      %vm1367 = vmor %vm1365, %vm1366
      %v1368 = vsel %vm1367, %v1360, %v1364
      %v1369 = vand.u32 2147483647, %v1359
      %vm1370 = vcmp.eq.f32.partialorder %v1369, 8.507059e+37
      %v1371 = vand.u32 %v1359, 2147483648
      %v1372 = vor.u32 1.1754944e-38, %v1371
      %v1373 = vsel %vm1370, %v1372, %v1368
      %v1374 = vmul.f32 1.0, %v1373
      %v1375 = vmul.f32 %v1352, %v1374
      %v1376 = vld [vmem:[%s19] sm:$0xff]
      %v1377 = vld [vmem:[%s19 + $0x8] sm:$0xff]
      %v1378 = vld [vmem:[%s19 + $0x10] sm:$0xff]
      %v1379 = vld [vmem:[%s19 + $0x18] sm:$0xff]
      %v1380 = vld [vmem:[%s19 + $0x20] sm:$0xff]
      %v1381 = vld [vmem:[%s19 + $0x28] sm:$0xff]
      %v1382 = vld [vmem:[%s19 + $0x30] sm:$0xff]
      %v1383 = vld [vmem:[%s19 + $0x38] sm:$0xff]
      %v1384 = vld [vmem:[%s19 + $0x40] sm:$0xff]
      %v1385 = vld [vmem:[%s19 + $0x48] sm:$0xff]
      %v1386 = vld [vmem:[%s19 + $0x50] sm:$0xff]
      %v1387 = vld [vmem:[%s19 + $0x58] sm:$0xff]
      %v1388 = vld [vmem:[%s19 + $0x60] sm:$0xff]
      %v1389 = vld [vmem:[%s19 + $0x68] sm:$0xff]
      %v1390 = vld [vmem:[%s19 + $0x70] sm:$0xff]
      %v1391 = vld [vmem:[%s19 + $0x78] sm:$0xff]
      %v1392 = vpack.c.bf16 %v1375, %v1375
      %v1393 = vpack.c.bf16 %v1377, %v1376
      %v1394 = vpack.c.bf16 %v1379, %v1378
      %v1395 = vpack.c.bf16 %v1381, %v1380
      %v1396 = vpack.c.bf16 %v1383, %v1382
      %v1397 = vpack.c.bf16 %v1385, %v1384
      %v1398 = vpack.c.bf16 %v1387, %v1386
      %v1399 = vpack.c.bf16 %v1389, %v1388
      %v1400 = vpack.c.bf16 %v1391, %v1390
      %v1401 = vld [vmem:[%s20] sm:$0x1]
      %v1403 = vperm.slane %v1401, 0
      %1405 = vmatpush.bf16.msra.mxu0 %v1400
      %1406 = vmatpush.bf16.msra.mxu0 %v1399
      %1407 = vmatpush.bf16.msra.mxu0 %v1398
      %1408 = vmatpush.bf16.msra.mxu0 %v1397
      %1409 = vmatpush.bf16.msra.mxu0 %v1396
      %1410 = vmatpush.bf16.msra.mxu0 %v1395
      %1411 = vmatpush.bf16.msra.mxu0 %v1394
      %1412 = vmatpush.bf16.msra.mxu0 %v1393
      %1413 = vmatmul.bf16.gmra.mxu0 %v1392
      %v1414 = vpop.f32.mrf.mxu0
      %v1415 = vadd.f32 %v1403, %v1414
      %v1416 = vpop.f32.mrf.mxu0
      %1417 = vdwg.mxu0
      %v1418 = vadd.f32 %v1289, %v1415
      %s1419 = scalar_lea.vmem %s5, 1
      %v1420 = vld [vmem:[%s1419] sm:$0x1]
      %s1421 = scalar_lea.vmem %s6, 1
      %v1422 = vld [vmem:[%s1421] sm:$0x1]
      %v1423 = vsel %vm808, %v1418, 0.0
      %1424 = vadd.xlane.f32.xlu0 %v1423
      %v1425 = vpop.xlane.xlu0 %1424
      %v1426 = vmul.f32 %v1425, %v818
      %v1427 = vsub.f32 %v1418, %v1426
      %v1428 = vmul.f32 %v1427, %v1427
      %v1429 = vsel %vm808, %v1428, 0.0
      %1430 = vadd.xlane.f32.xlu0 %v1429
      %v1431 = vpop.xlane.xlu0 %1430
      %v1432 = vmul.f32 %v1431, %v818
      %v1433 = vadd.f32 %v1432, 1e-05
      %v1434 = vrsqrt.pop %v1433
      %v1435 = vmul.f32 %v1434, %v1433
      %v1436 = vmul.f32 %v1435, %v1434
      %v1437 = vmul.f32 0.5, %v1436
      %v1438 = vsub.f32 1.5, %v1437
      %v1439 = vmul.f32 %v1434, %v1438
      %vm1440 = vweird.f32 %v1433
      %vm1441 = vweird.f32 %v1434
      %vm1442 = vmor %vm1440, %vm1441
      %v1443 = vsel %vm1442, %v1434, %v1439
      %v1444 = vmul.f32 %v1427, %v1443
      %v1446 = vperm.slane %v1420, 0
      %v1448 = vmul.f32 %v1444, %v1446
      %v1450 = vperm.slane %v1422, 0
      %v1452 = vadd.f32 %v1448, %v1450
      %s1453 = scalar_lea.vmem %s7, 128
      %v1454 = vld [vmem:[%s1453] sm:$0xff]
      %v1455 = vld [vmem:[%s1453 + $0x8] sm:$0xff]
      %v1456 = vld [vmem:[%s1453 + $0x10] sm:$0xff]
      %v1457 = vld [vmem:[%s1453 + $0x18] sm:$0xff]
      %v1458 = vld [vmem:[%s1453 + $0x20] sm:$0xff]
      %v1459 = vld [vmem:[%s1453 + $0x28] sm:$0xff]
      %v1460 = vld [vmem:[%s1453 + $0x30] sm:$0xff]
      %v1461 = vld [vmem:[%s1453 + $0x38] sm:$0xff]
      %v1462 = vpack.c.bf16 %v1452, %v1452
      %v1463 = vpack.c.bf16 %v1455, %v1454
      %v1464 = vpack.c.bf16 %v1457, %v1456
      %v1465 = vpack.c.bf16 %v1459, %v1458
      %v1466 = vpack.c.bf16 %v1461, %v1460
      %s1467 = scalar_lea.vmem %s8, 2
      %v1468 = vld [vmem:[%s1467] sm:$0x1]
      %v1470 = vperm.slane %v1468, 0
      %v1473 = vsel %vm776, %v1462, 0
      %1475 = vmatpush.bf16.msra.mxu0 0
      %1476 = vmatpush.bf16.msra.mxu0 0
      %1477 = vmatpush.bf16.msra.mxu0 0
      %1478 = vmatpush.bf16.msra.mxu0 0
      %1479 = vmatpush.bf16.msra.mxu0 %v1466
      %1480 = vmatpush.bf16.msra.mxu0 %v1465
      %1481 = vmatpush.bf16.msra.mxu0 %v1464
      %1482 = vmatpush.bf16.msra.mxu0 %v1463
      %1483 = vmatmul.bf16.gmra.mxu0 %v1473
      %v1484 = vpop.f32.mrf.mxu0
      %v1485 = vadd.f32 %v1470, %v1484
      %v1486 = vpop.f32.mrf.mxu0
      %1487 = vdwg.mxu0
      %v1488 = vmul.f32 %v1485, 0.17677669
      %s1489 = scalar_lea.vmem %s9, 128
      %v1490 = vld [vmem:[%s1489] sm:$0xff]
      %v1491 = vld [vmem:[%s1489 + $0x8] sm:$0xff]
      %v1492 = vld [vmem:[%s1489 + $0x10] sm:$0xff]
      %v1493 = vld [vmem:[%s1489 + $0x18] sm:$0xff]
      %v1494 = vld [vmem:[%s1489 + $0x20] sm:$0xff]
      %v1495 = vld [vmem:[%s1489 + $0x28] sm:$0xff]
      %v1496 = vld [vmem:[%s1489 + $0x30] sm:$0xff]
      %v1497 = vld [vmem:[%s1489 + $0x38] sm:$0xff]
      %v1498 = vpack.c.bf16 %v1491, %v1490
      %v1499 = vpack.c.bf16 %v1493, %v1492
      %v1500 = vpack.c.bf16 %v1495, %v1494
      %v1501 = vpack.c.bf16 %v1497, %v1496
      %s1502 = scalar_lea.vmem %s10, 2
      %v1503 = vld [vmem:[%s1502] sm:$0x1]
      %v1505 = vperm.slane %v1503, 0
      %1507 = vmatpush.bf16.msra.mxu0 0
      %1508 = vmatpush.bf16.msra.mxu0 0
      %1509 = vmatpush.bf16.msra.mxu0 0
      %1510 = vmatpush.bf16.msra.mxu0 0
      %1511 = vmatpush.bf16.msra.mxu0 %v1501
      %1512 = vmatpush.bf16.msra.mxu0 %v1500
      %1513 = vmatpush.bf16.msra.mxu0 %v1499
      %1514 = vmatpush.bf16.msra.mxu0 %v1498
      %1515 = vmatmul.bf16.gmra.mxu0 %v1473
      %v1516 = vpop.f32.mrf.mxu0
      %v1517 = vadd.f32 %v1505, %v1516
      %v1518 = vpop.f32.mrf.mxu0
      %1519 = vdwg.mxu0
      %s1520 = scalar_lea.vmem %s11, 128
      %v1521 = vld [vmem:[%s1520] sm:$0xff]
      %v1522 = vld [vmem:[%s1520 + $0x8] sm:$0xff]
      %v1523 = vld [vmem:[%s1520 + $0x10] sm:$0xff]
      %v1524 = vld [vmem:[%s1520 + $0x18] sm:$0xff]
      %v1525 = vld [vmem:[%s1520 + $0x20] sm:$0xff]
      %v1526 = vld [vmem:[%s1520 + $0x28] sm:$0xff]
      %v1527 = vld [vmem:[%s1520 + $0x30] sm:$0xff]
      %v1528 = vld [vmem:[%s1520 + $0x38] sm:$0xff]
      %v1529 = vpack.c.bf16 %v1522, %v1521
      %v1530 = vpack.c.bf16 %v1524, %v1523
      %v1531 = vpack.c.bf16 %v1526, %v1525
      %v1532 = vpack.c.bf16 %v1528, %v1527
      %s1533 = scalar_lea.vmem %s12, 2
      %v1534 = vld [vmem:[%s1533] sm:$0x1]
      %v1536 = vperm.slane %v1534, 0
      %1538 = vmatpush.bf16.msra.mxu0 0
      %1539 = vmatpush.bf16.msra.mxu0 0
      %1540 = vmatpush.bf16.msra.mxu0 0
      %1541 = vmatpush.bf16.msra.mxu0 0
      %1542 = vmatpush.bf16.msra.mxu0 %v1532
      %1543 = vmatpush.bf16.msra.mxu0 %v1531
      %1544 = vmatpush.bf16.msra.mxu0 %v1530
      %1545 = vmatpush.bf16.msra.mxu0 %v1529
      %1546 = vmatmul.bf16.gmra.mxu0 %v1473
      %v1547 = vpop.f32.mrf.mxu0
      %v1548 = vadd.f32 %v1536, %v1547
      %v1549 = vpop.f32.mrf.mxu0
      %1550 = vdwg.mxu0
      %1551 = vxpose.xlu0.b32.start [1/16] %v1517, 128
      %1552 = vxpose.xlu0.b32.cont [2/16] 0.0, 128
      %1553 = vxpose.xlu0.b32.cont [3/16] 0.0, 128
      %1554 = vxpose.xlu0.b32.cont [4/16] 0.0, 128
      %1555 = vxpose.xlu0.b32.cont [5/16] 0.0, 128
      %1556 = vxpose.xlu0.b32.cont [6/16] 0.0, 128
      %1557 = vxpose.xlu0.b32.cont [7/16] 0.0, 128
      %1558 = vxpose.xlu0.b32.cont [8/16] 0.0, 128
      %1559 = vxpose.xlu0.b32.cont [9/16] 0.0, 128
      %1560 = vxpose.xlu0.b32.cont [10/16] 0.0, 128
      %1561 = vxpose.xlu0.b32.cont [11/16] 0.0, 128
      %1562 = vxpose.xlu0.b32.cont [12/16] 0.0, 128
      %1563 = vxpose.xlu0.b32.cont [13/16] 0.0, 128
      %1564 = vxpose.xlu0.b32.cont [14/16] 0.0, 128
      %1565 = vxpose.xlu0.b32.cont [15/16] 0.0, 128
      %1566 = vxpose.xlu0.b32.end [16/16] 0.0, 128
      %v1567 = vpop.trf.xlu0
      %v1568 = vpop.trf.xlu0
      %v1569 = vpop.trf.xlu0
      %v1570 = vpop.trf.xlu0
      %v1571 = vpop.trf.xlu0
      %v1572 = vpop.trf.xlu0
      %v1573 = vpop.trf.xlu0
      %v1574 = vpop.trf.xlu0
      %v1575 = vpop.trf.xlu0
      %v1576 = vpop.trf.xlu0
      %v1577 = vpop.trf.xlu0
      %v1578 = vpop.trf.xlu0
      %v1579 = vpop.trf.xlu0
      %v1580 = vpop.trf.xlu0
      %v1581 = vpop.trf.xlu0
      %v1582 = vpop.trf.xlu0
      %v1583 = vpack.c.bf16 %v1488, %v1488
      %v1584 = vpack.c.bf16 %v1568, %v1567
      %v1585 = vpack.c.bf16 %v1570, %v1569
      %v1587 = vsel %vm1005, %v1583, 0
      %1589 = vmatpush.bf16.msra.mxu0 0
      %1590 = vmatpush.bf16.msra.mxu0 0
      %1591 = vmatpush.bf16.msra.mxu0 0
      %1592 = vmatpush.bf16.msra.mxu0 0
      %1593 = vmatpush.bf16.msra.mxu0 0
      %1594 = vmatpush.bf16.msra.mxu0 0
      %1595 = vmatpush.bf16.msra.mxu0 %v1585
      %1596 = vmatpush.bf16.msra.mxu0 %v1584
      %1597 = vmatmul.bf16.gmra.mxu0 %v1587
      %v1598 = vpop.f32.mrf.mxu0
      %v1599 = vadd.f32 0.0, %v1598
      %v1600 = vpop.f32.mrf.mxu0
      %1601 = vdwg.mxu0
      %v1602 = vsel %vm1022, %v1599, -inf
      %1603 = vmax.xlane.f32.xlu0 %v1602
      %v1604 = vpop.xlane.xlu0 %1603
      %v1605 = vsub.f32 %v1599, %v1604
      %v1606 = vmul.f32 %v1605, 1.442695
      %v1607 = vpow.pop %v1606
      %v1608 = vsel %vm1022, %v1607, 0.0
      %1609 = vadd.xlane.f32.xlu0 %v1608
      %v1610 = vpop.xlane.xlu0 %1609
      %v1611 = vrcp.pop %v1610
      %v1612 = vmul.f32 %v1607, %v1611
      %v1613 = vpack.c.bf16 %v1612, %v1612
      %v1614 = vpack.c.bf16 %v1548, %v1548
      %v1616 = vsel %vm1036, %v1613, 0
      %v1619 = vand.u32 %v1614, %v1043
      %1621 = vmatpush.bf16.msra.mxu0 0
      %1622 = vmatpush.bf16.msra.mxu0 0
      %1623 = vmatpush.bf16.msra.mxu0 0
      %1624 = vmatpush.bf16.msra.mxu0 0
      %1625 = vmatpush.bf16.msra.mxu0 0
      %1626 = vmatpush.bf16.msra.mxu0 0
      %1627 = vmatpush.bf16.msra.mxu0 0
      %1628 = vmatpush.bf16.msra.mxu0 %v1619
      %1629 = vmatmul.bf16.gmra.mxu0 %v1616
      %v1630 = vpop.f32.mrf.mxu0
      %v1631 = vadd.f32 0.0, %v1630
      %v1632 = vpop.f32.mrf.mxu0
      %1633 = vdwg.mxu0
      %s1634 = scalar_lea.vmem %s13, 64
      %v1635 = vld [vmem:[%s1634] sm:$0xff]
      %v1636 = vld [vmem:[%s1634 + $0x8] sm:$0xff]
      %v1637 = vld [vmem:[%s1634 + $0x10] sm:$0xff]
      %v1638 = vld [vmem:[%s1634 + $0x18] sm:$0xff]
      %v1639 = vpack.c.bf16 %v1631, %v1631
      %v1640 = vpack.c.bf16 %v1636, %v1635
      %v1641 = vpack.c.bf16 %v1638, %v1637
      %s1642 = scalar_lea.vmem %s7, 192
      %v1643 = vld [vmem:[%s1642] sm:$0xff]
      %v1644 = vld [vmem:[%s1642 + $0x8] sm:$0xff]
      %v1645 = vld [vmem:[%s1642 + $0x10] sm:$0xff]
      %v1646 = vld [vmem:[%s1642 + $0x18] sm:$0xff]
      %v1647 = vld [vmem:[%s1642 + $0x20] sm:$0xff]
      %v1648 = vld [vmem:[%s1642 + $0x28] sm:$0xff]
      %v1649 = vld [vmem:[%s1642 + $0x30] sm:$0xff]
      %v1650 = vld [vmem:[%s1642 + $0x38] sm:$0xff]
      %v1651 = vpack.c.bf16 %v1644, %v1643
      %v1652 = vpack.c.bf16 %v1646, %v1645
      %v1653 = vpack.c.bf16 %v1648, %v1647
      %v1654 = vpack.c.bf16 %v1650, %v1649
      %s1655 = scalar_lea.vmem %s8, 3
      %v1656 = vld [vmem:[%s1655] sm:$0x1]
      %v1658 = vperm.slane %v1656, 0
      %1660 = vmatpush.bf16.msra.mxu0 0
      %1661 = vmatpush.bf16.msra.mxu0 0
      %1662 = vmatpush.bf16.msra.mxu0 0
      %1663 = vmatpush.bf16.msra.mxu0 0
      %1664 = vmatpush.bf16.msra.mxu0 %v1654
      %1665 = vmatpush.bf16.msra.mxu0 %v1653
      %1666 = vmatpush.bf16.msra.mxu0 %v1652
      %1667 = vmatpush.bf16.msra.mxu0 %v1651
      %1668 = vmatmul.bf16.gmra.mxu0 %v1473
      %v1669 = vpop.f32.mrf.mxu0
      %v1670 = vadd.f32 %v1658, %v1669
      %v1671 = vpop.f32.mrf.mxu0
      %1672 = vdwg.mxu0
      %v1673 = vmul.f32 %v1670, 0.17677669
      %s1674 = scalar_lea.vmem %s9, 192
      %v1675 = vld [vmem:[%s1674] sm:$0xff]
      %v1676 = vld [vmem:[%s1674 + $0x8] sm:$0xff]
      %v1677 = vld [vmem:[%s1674 + $0x10] sm:$0xff]
      %v1678 = vld [vmem:[%s1674 + $0x18] sm:$0xff]
      %v1679 = vld [vmem:[%s1674 + $0x20] sm:$0xff]
      %v1680 = vld [vmem:[%s1674 + $0x28] sm:$0xff]
      %v1681 = vld [vmem:[%s1674 + $0x30] sm:$0xff]
      %v1682 = vld [vmem:[%s1674 + $0x38] sm:$0xff]
      %v1683 = vpack.c.bf16 %v1676, %v1675
      %v1684 = vpack.c.bf16 %v1678, %v1677
      %v1685 = vpack.c.bf16 %v1680, %v1679
      %v1686 = vpack.c.bf16 %v1682, %v1681
      %s1687 = scalar_lea.vmem %s10, 3
      %v1688 = vld [vmem:[%s1687] sm:$0x1]
      %v1690 = vperm.slane %v1688, 0
      %1692 = vmatpush.bf16.msra.mxu0 0
      %1693 = vmatpush.bf16.msra.mxu0 0
      %1694 = vmatpush.bf16.msra.mxu0 0
      %1695 = vmatpush.bf16.msra.mxu0 0
      %1696 = vmatpush.bf16.msra.mxu0 %v1686
      %1697 = vmatpush.bf16.msra.mxu0 %v1685
      %1698 = vmatpush.bf16.msra.mxu0 %v1684
      %1699 = vmatpush.bf16.msra.mxu0 %v1683
      %1700 = vmatmul.bf16.gmra.mxu0 %v1473
      %v1701 = vpop.f32.mrf.mxu0
      %v1702 = vadd.f32 %v1690, %v1701
      %v1703 = vpop.f32.mrf.mxu0
      %1704 = vdwg.mxu0
      %s1705 = scalar_lea.vmem %s11, 192
      %v1706 = vld [vmem:[%s1705] sm:$0xff]
      %v1707 = vld [vmem:[%s1705 + $0x8] sm:$0xff]
      %v1708 = vld [vmem:[%s1705 + $0x10] sm:$0xff]
      %v1709 = vld [vmem:[%s1705 + $0x18] sm:$0xff]
      %v1710 = vld [vmem:[%s1705 + $0x20] sm:$0xff]
      %v1711 = vld [vmem:[%s1705 + $0x28] sm:$0xff]
      %v1712 = vld [vmem:[%s1705 + $0x30] sm:$0xff]
      %v1713 = vld [vmem:[%s1705 + $0x38] sm:$0xff]
      %v1714 = vpack.c.bf16 %v1707, %v1706
      %v1715 = vpack.c.bf16 %v1709, %v1708
      %v1716 = vpack.c.bf16 %v1711, %v1710
      %v1717 = vpack.c.bf16 %v1713, %v1712
      %s1718 = scalar_lea.vmem %s12, 3
      %v1719 = vld [vmem:[%s1718] sm:$0x1]
      %v1721 = vperm.slane %v1719, 0
      %1723 = vmatpush.bf16.msra.mxu0 0
      %1724 = vmatpush.bf16.msra.mxu0 0
      %1725 = vmatpush.bf16.msra.mxu0 0
      %1726 = vmatpush.bf16.msra.mxu0 0
      %1727 = vmatpush.bf16.msra.mxu0 %v1717
      %1728 = vmatpush.bf16.msra.mxu0 %v1716
      %1729 = vmatpush.bf16.msra.mxu0 %v1715
      %1730 = vmatpush.bf16.msra.mxu0 %v1714
      %1731 = vmatmul.bf16.gmra.mxu0 %v1473
      %v1732 = vpop.f32.mrf.mxu0
      %v1733 = vadd.f32 %v1721, %v1732
      %v1734 = vpop.f32.mrf.mxu0
      %1735 = vdwg.mxu0
      %1736 = vxpose.xlu0.b32.start [1/16] %v1702, 128
      %1737 = vxpose.xlu0.b32.cont [2/16] 0.0, 128
      %1738 = vxpose.xlu0.b32.cont [3/16] 0.0, 128
      %1739 = vxpose.xlu0.b32.cont [4/16] 0.0, 128
      %1740 = vxpose.xlu0.b32.cont [5/16] 0.0, 128
      %1741 = vxpose.xlu0.b32.cont [6/16] 0.0, 128
      %1742 = vxpose.xlu0.b32.cont [7/16] 0.0, 128
      %1743 = vxpose.xlu0.b32.cont [8/16] 0.0, 128
      %1744 = vxpose.xlu0.b32.cont [9/16] 0.0, 128
      %1745 = vxpose.xlu0.b32.cont [10/16] 0.0, 128
      %1746 = vxpose.xlu0.b32.cont [11/16] 0.0, 128
      %1747 = vxpose.xlu0.b32.cont [12/16] 0.0, 128
      %1748 = vxpose.xlu0.b32.cont [13/16] 0.0, 128
      %1749 = vxpose.xlu0.b32.cont [14/16] 0.0, 128
      %1750 = vxpose.xlu0.b32.cont [15/16] 0.0, 128
      %1751 = vxpose.xlu0.b32.end [16/16] 0.0, 128
      %v1752 = vpop.trf.xlu0
      %v1753 = vpop.trf.xlu0
      %v1754 = vpop.trf.xlu0
      %v1755 = vpop.trf.xlu0
      %v1756 = vpop.trf.xlu0
      %v1757 = vpop.trf.xlu0
      %v1758 = vpop.trf.xlu0
      %v1759 = vpop.trf.xlu0
      %v1760 = vpop.trf.xlu0
      %v1761 = vpop.trf.xlu0
      %v1762 = vpop.trf.xlu0
      %v1763 = vpop.trf.xlu0
      %v1764 = vpop.trf.xlu0
      %v1765 = vpop.trf.xlu0
      %v1766 = vpop.trf.xlu0
      %v1767 = vpop.trf.xlu0
      %v1768 = vpack.c.bf16 %v1673, %v1673
      %v1769 = vpack.c.bf16 %v1753, %v1752
      %v1770 = vpack.c.bf16 %v1755, %v1754
      %v1772 = vsel %vm1005, %v1768, 0
      %1774 = vmatpush.bf16.msra.mxu0 0
      %1775 = vmatpush.bf16.msra.mxu0 0
      %1776 = vmatpush.bf16.msra.mxu0 0
      %1777 = vmatpush.bf16.msra.mxu0 0
      %1778 = vmatpush.bf16.msra.mxu0 0
      %1779 = vmatpush.bf16.msra.mxu0 0
      %1780 = vmatpush.bf16.msra.mxu0 %v1770
      %1781 = vmatpush.bf16.msra.mxu0 %v1769
      %1782 = vmatmul.bf16.gmra.mxu0 %v1772
      %v1783 = vpop.f32.mrf.mxu0
      %v1784 = vadd.f32 0.0, %v1783
      %v1785 = vpop.f32.mrf.mxu0
      %1786 = vdwg.mxu0
      %v1787 = vsel %vm1022, %v1784, -inf
      %1788 = vmax.xlane.f32.xlu0 %v1787
      %v1789 = vpop.xlane.xlu0 %1788
      %v1790 = vsub.f32 %v1784, %v1789
      %v1791 = vmul.f32 %v1790, 1.442695
      %v1792 = vpow.pop %v1791
      %v1793 = vsel %vm1022, %v1792, 0.0
      %1794 = vadd.xlane.f32.xlu0 %v1793
      %v1795 = vpop.xlane.xlu0 %1794
      %v1796 = vrcp.pop %v1795
      %v1797 = vmul.f32 %v1792, %v1796
      %v1798 = vpack.c.bf16 %v1797, %v1797
      %v1799 = vpack.c.bf16 %v1733, %v1733
      %v1801 = vsel %vm1036, %v1798, 0
      %v1804 = vand.u32 %v1799, %v1043
      %1806 = vmatpush.bf16.msra.mxu0 0
      %1807 = vmatpush.bf16.msra.mxu0 0
      %1808 = vmatpush.bf16.msra.mxu0 0
      %1809 = vmatpush.bf16.msra.mxu0 0
      %1810 = vmatpush.bf16.msra.mxu0 0
      %1811 = vmatpush.bf16.msra.mxu0 0
      %1812 = vmatpush.bf16.msra.mxu0 0
      %1813 = vmatpush.bf16.msra.mxu0 %v1804
      %1814 = vmatmul.bf16.gmra.mxu0 %v1801
      %v1815 = vpop.f32.mrf.mxu0
      %v1816 = vadd.f32 0.0, %v1815
      %v1817 = vpop.f32.mrf.mxu0
      %1818 = vdwg.mxu0
      %s1819 = scalar_lea.vmem %s13, 96
      %v1820 = vld [vmem:[%s1819] sm:$0xff]
      %v1821 = vld [vmem:[%s1819 + $0x8] sm:$0xff]
      %v1822 = vld [vmem:[%s1819 + $0x10] sm:$0xff]
      %v1823 = vld [vmem:[%s1819 + $0x18] sm:$0xff]
      %v1824 = vpack.c.bf16 %v1816, %v1816
      %v1825 = vpack.c.bf16 %v1821, %v1820
      %v1826 = vpack.c.bf16 %v1823, %v1822
      %v1828 = vsel %vm1005, %v1824, 0
      %1830 = vmatpush.bf16.msra.mxu0 0
      %1831 = vmatpush.bf16.msra.mxu0 0
      %1832 = vmatpush.bf16.msra.mxu0 0
      %1833 = vmatpush.bf16.msra.mxu0 0
      %1834 = vmatpush.bf16.msra.mxu0 0
      %1835 = vmatpush.bf16.msra.mxu0 0
      %1836 = vmatpush.bf16.msra.mxu0 %v1826
      %1837 = vmatpush.bf16.msra.mxu0 %v1825
      %1838 = vmatmul.bf16.gmra.mxu0 %v1828
      %v1839 = vpop.f32.mrf.mxu0
      %v1840 = vadd.f32 0.0, %v1839
      %v1841 = vpop.f32.mrf.mxu0
      %1842 = vdwg.mxu0
      %v1844 = vsel %vm1005, %v1639, 0
      %1846 = vmatpush.bf16.msra.mxu0 0
      %1847 = vmatpush.bf16.msra.mxu0 0
      %1848 = vmatpush.bf16.msra.mxu0 0
      %1849 = vmatpush.bf16.msra.mxu0 0
      %1850 = vmatpush.bf16.msra.mxu0 0
      %1851 = vmatpush.bf16.msra.mxu0 0
      %1852 = vmatpush.bf16.msra.mxu0 %v1641
      %1853 = vmatpush.bf16.msra.mxu0 %v1640
      %1854 = vmatmul.bf16.gmra.mxu0 %v1844
      %v1855 = vpop.f32.mrf.mxu0
      %v1856 = vadd.f32 %v1840, %v1855
      %v1857 = vpop.f32.mrf.mxu0
      %1858 = vdwg.mxu0
      %v1859 = vadd.f32 %v1418, %v1856
      %s1860 = scalar_lea.vmem %s14, 1
      %v1861 = vld [vmem:[%s1860] sm:$0x1]
      %v1863 = vperm.slane %v1861, 0
      %v1865 = vadd.f32 %v1859, %v1863
      %s1866 = scalar_lea.vmem %s15, 1
      %v1867 = vld [vmem:[%s1866] sm:$0x1]
      %s1868 = scalar_lea.vmem %s16, 1
      %v1869 = vld [vmem:[%s1868] sm:$0x1]
      %v1870 = vsel %vm808, %v1865, 0.0
      %1871 = vadd.xlane.f32.xlu0 %v1870
      %v1872 = vpop.xlane.xlu0 %1871
      %v1873 = vmul.f32 %v1872, %v818
      %v1874 = vsub.f32 %v1865, %v1873
      %v1875 = vmul.f32 %v1874, %v1874
      %v1876 = vsel %vm808, %v1875, 0.0
      %1877 = vadd.xlane.f32.xlu0 %v1876
      %v1878 = vpop.xlane.xlu0 %1877
      %v1879 = vmul.f32 %v1878, %v818
      %v1880 = vadd.f32 %v1879, 1e-05
      %v1881 = vrsqrt.pop %v1880
      %v1882 = vmul.f32 %v1881, %v1880
      %v1883 = vmul.f32 %v1882, %v1881
      %v1884 = vmul.f32 0.5, %v1883
      %v1885 = vsub.f32 1.5, %v1884
      %v1886 = vmul.f32 %v1881, %v1885
      %vm1887 = vweird.f32 %v1880
      %vm1888 = vweird.f32 %v1881
      %vm1889 = vmor %vm1887, %vm1888
      %v1890 = vsel %vm1889, %v1881, %v1886
      %v1891 = vmul.f32 %v1874, %v1890
      %v1893 = vperm.slane %v1867, 0
      %v1895 = vmul.f32 %v1891, %v1893
      %v1897 = vperm.slane %v1869, 0
      %v1899 = vadd.f32 %v1895, %v1897
      %s1900 = scalar_lea.vmem %s17, 64
      %v1901 = vld [vmem:[%s1900] sm:$0xff]
      %v1902 = vld [vmem:[%s1900 + $0x8] sm:$0xff]
      %v1903 = vld [vmem:[%s1900 + $0x10] sm:$0xff]
      %v1904 = vld [vmem:[%s1900 + $0x18] sm:$0xff]
      %v1905 = vld [vmem:[%s1900 + $0x20] sm:$0xff]
      %v1906 = vld [vmem:[%s1900 + $0x28] sm:$0xff]
      %v1907 = vld [vmem:[%s1900 + $0x30] sm:$0xff]
      %v1908 = vld [vmem:[%s1900 + $0x38] sm:$0xff]
      %v1909 = vpack.c.bf16 %v1899, %v1899
      %v1910 = vpack.c.bf16 %v1902, %v1901
      %v1911 = vpack.c.bf16 %v1904, %v1903
      %v1912 = vpack.c.bf16 %v1906, %v1905
      %v1913 = vpack.c.bf16 %v1908, %v1907
      %s1914 = scalar_lea.vmem %s18, 1
      %v1915 = vld [vmem:[%s1914] sm:$0x1]
      %v1917 = vperm.slane %v1915, 0
      %v1920 = vsel %vm776, %v1909, 0
      %1922 = vmatpush.bf16.msra.mxu0 0
      %1923 = vmatpush.bf16.msra.mxu0 0
      %1924 = vmatpush.bf16.msra.mxu0 0
      %1925 = vmatpush.bf16.msra.mxu0 0
      %1926 = vmatpush.bf16.msra.mxu0 %v1913
      %1927 = vmatpush.bf16.msra.mxu0 %v1912
      %1928 = vmatpush.bf16.msra.mxu0 %v1911
      %1929 = vmatpush.bf16.msra.mxu0 %v1910
      %1930 = vmatmul.bf16.gmra.mxu0 %v1920
      %v1931 = vpop.f32.mrf.mxu0
      %v1932 = vadd.f32 %v1917, %v1931
      %v1933 = vpop.f32.mrf.mxu0
      %1934 = vdwg.mxu0
      %v1935 = vmul.f32 %v1932, 1.702
      %v1936 = vxor.u32 %v1935, 2147483648
      %v1937 = vmul.f32 %v1936, 1.442695
      %v1938 = vpow.pop %v1937
      %v1939 = vadd.f32 %v1938, 1.0
      %v1940 = vrcp.pop %v1939
      %v1941 = vmul.f32 %v1939, %v1940
      %v1942 = vsub.f32 1.0, %v1941
      %v1943 = vmul.f32 %v1940, %v1942
      %v1944 = vadd.f32 %v1940, %v1943
      %vm1945 = vweird.f32 %v1939
      %vm1946 = vweird.f32 %v1940
      %vm1947 = vmor %vm1945, %vm1946
      %v1948 = vsel %vm1947, %v1940, %v1944
      %v1949 = vand.u32 2147483647, %v1939
      %vm1950 = vcmp.eq.f32.partialorder %v1949, 8.507059e+37
      %v1951 = vand.u32 %v1939, 2147483648
      %v1952 = vor.u32 1.1754944e-38, %v1951
      %v1953 = vsel %vm1950, %v1952, %v1948
      %v1954 = vmul.f32 1.0, %v1953
      %v1955 = vmul.f32 %v1932, %v1954
      %s1956 = scalar_lea.vmem %s19, 128
      %v1957 = vld [vmem:[%s1956] sm:$0xff]
      %v1958 = vld [vmem:[%s1956 + $0x8] sm:$0xff]
      %v1959 = vld [vmem:[%s1956 + $0x10] sm:$0xff]
      %v1960 = vld [vmem:[%s1956 + $0x18] sm:$0xff]
      %v1961 = vld [vmem:[%s1956 + $0x20] sm:$0xff]
      %v1962 = vld [vmem:[%s1956 + $0x28] sm:$0xff]
      %v1963 = vld [vmem:[%s1956 + $0x30] sm:$0xff]
      %v1964 = vld [vmem:[%s1956 + $0x38] sm:$0xff]
      %v1965 = vld [vmem:[%s1956 + $0x40] sm:$0xff]
      %v1966 = vld [vmem:[%s1956 + $0x48] sm:$0xff]
      %v1967 = vld [vmem:[%s1956 + $0x50] sm:$0xff]
      %v1968 = vld [vmem:[%s1956 + $0x58] sm:$0xff]
      %v1969 = vld [vmem:[%s1956 + $0x60] sm:$0xff]
      %v1970 = vld [vmem:[%s1956 + $0x68] sm:$0xff]
      %v1971 = vld [vmem:[%s1956 + $0x70] sm:$0xff]
      %v1972 = vld [vmem:[%s1956 + $0x78] sm:$0xff]
      %v1973 = vpack.c.bf16 %v1955, %v1955
      %v1974 = vpack.c.bf16 %v1958, %v1957
      %v1975 = vpack.c.bf16 %v1960, %v1959
      %v1976 = vpack.c.bf16 %v1962, %v1961
      %v1977 = vpack.c.bf16 %v1964, %v1963
      %v1978 = vpack.c.bf16 %v1966, %v1965
      %v1979 = vpack.c.bf16 %v1968, %v1967
      %v1980 = vpack.c.bf16 %v1970, %v1969
      %v1981 = vpack.c.bf16 %v1972, %v1971
      %s1982 = scalar_lea.vmem %s20, 1
      %v1983 = vld [vmem:[%s1982] sm:$0x1]
      %v1985 = vperm.slane %v1983, 0
      %1987 = vmatpush.bf16.msra.mxu0 %v1981
      %1988 = vmatpush.bf16.msra.mxu0 %v1980
      %1989 = vmatpush.bf16.msra.mxu0 %v1979
      %1990 = vmatpush.bf16.msra.mxu0 %v1978
      %1991 = vmatpush.bf16.msra.mxu0 %v1977
      %1992 = vmatpush.bf16.msra.mxu0 %v1976
      %1993 = vmatpush.bf16.msra.mxu0 %v1975
      %1994 = vmatpush.bf16.msra.mxu0 %v1974
      %1995 = vmatmul.bf16.gmra.mxu0 %v1973
      %v1996 = vpop.f32.mrf.mxu0
      %v1997 = vadd.f32 %v1985, %v1996
      %v1998 = vpop.f32.mrf.mxu0
      %1999 = vdwg.mxu0
      %v2000 = vadd.f32 %v1865, %v1997
      %v2001 = vld [vmem:[%s21] sm:$0x1]
      %v2002 = vld [vmem:[%s22] sm:$0x1]
      %vm2003 = vcmask 516096
      %v2004 = vsel %vm2003, %v2000, 0.0
      %2005 = vadd.xlane.f32.xlu0 %v2004
      %v2006 = vpop.xlane.xlu0 %2005
      %v2007 = vmul.f32 %v2006, %v818
      %v2008 = vsub.f32 %v2000, %v2007
      %v2009 = vmul.f32 %v2008, %v2008
      %v2010 = vsel %vm2003, %v2009, 0.0
      %2011 = vadd.xlane.f32.xlu0 %v2010
      %v2012 = vpop.xlane.xlu0 %2011
      %v2013 = vmul.f32 %v2012, %v818
      %v2014 = vadd.f32 %v2013, 1e-05
      %v2015 = vrsqrt.pop %v2014
      %v2016 = vmul.f32 %v2015, %v2014
      %v2017 = vmul.f32 %v2016, %v2015
      %v2018 = vmul.f32 0.5, %v2017
      %v2019 = vsub.f32 1.5, %v2018
      %v2020 = vmul.f32 %v2015, %v2019
      %vm2021 = vweird.f32 %v2014
      %vm2022 = vweird.f32 %v2015
      %vm2023 = vmor %vm2021, %vm2022
      %v2024 = vsel %vm2023, %v2015, %v2020
      %v2025 = vmul.f32 %v2008, %v2024
      %v2026 = vmul.f32 %v2025, %v2001
      %v2027 = vadd.f32 %v2026, %v2002
      %v2028 = vld [vmem:[%s23] sm:$0xff]
      %v2029 = vld [vmem:[%s23 + $0x8] sm:$0xff]
      %v2030 = vld [vmem:[%s23 + $0x10] sm:$0xff]
      %v2031 = vld [vmem:[%s23 + $0x18] sm:$0xff]
      %v2032 = vld [vmem:[%s23 + $0x20] sm:$0xff]
      %v2033 = vld [vmem:[%s23 + $0x28] sm:$0xff]
      %v2034 = vld [vmem:[%s23 + $0x30] sm:$0xff]
      %v2035 = vld [vmem:[%s23 + $0x38] sm:$0xff]
      %v2036 = vpack.c.bf16 %v2027, %v2027
      %v2037 = vpack.c.bf16 %v2029, %v2028
      %v2038 = vpack.c.bf16 %v2031, %v2030
      %v2039 = vpack.c.bf16 %v2033, %v2032
      %v2040 = vpack.c.bf16 %v2035, %v2034
      %v2042 = vsel %vm776, %v2036, 0
      %2044 = vmatpush.bf16.msra.mxu0 0
      %2045 = vmatpush.bf16.msra.mxu0 0
      %2046 = vmatpush.bf16.msra.mxu0 0
      %2047 = vmatpush.bf16.msra.mxu0 0
      %2048 = vmatpush.bf16.msra.mxu0 %v2040
      %2049 = vmatpush.bf16.msra.mxu0 %v2039
      %2050 = vmatpush.bf16.msra.mxu0 %v2038
      %2051 = vmatpush.bf16.msra.mxu0 %v2037
      %2052 = vmatmul.bf16.gmra.mxu0 %v2042
      %v2053 = vpop.f32.mrf.mxu0
      %v2054 = vadd.f32 0.0, %v2053
      %v2055 = vpop.f32.mrf.mxu0
      %2056 = vdwg.mxu0
      %2057 = vst.msk [vmem:[%s733] sm:$0x1] %vm2003, %v2054
      %p2058 = scmp.lt.s32.totalorder %s35, 1
      %s2059 = scalar_select %p2058, %s35, 1
      %s2060 = scalar_lea.vmem %s24, %s2059
      // Predicated region
      $region117: #{clip_image_encoder_forward.1} parent=115 // pred_check
        %p2061 = pneg %p562
      $region118: #{clip_image_encoder_forward.1} parent=115 // pred_check_branch
        %2063 = sbr.rel (%p2061) target = $region120
      $region119: #{clip_image_encoder_forward.1} parent=115 // pred_region
        _
      $region120: #{clip_image_encoder_forward.1} parent=115 // pred_fallthru
        _
    $region116: #{clip_image_encoder_forward.1} parent=5 // pred_fallthru
      _
    %p2064 = scmp.le.s32.totalorder 2, %s30
    // Predicated region
    $region121: #{clip_image_encoder_forward.1} parent=5 // pred_check
      %p2065 = pneg %p2064
    $region122: #{clip_image_encoder_forward.1} parent=5 // pred_check_branch
      %2067 = sbr.rel (%p2065) target = $region124
    $region123: #{clip_image_encoder_forward.1} parent=5 // pred_region
      %s2068 = ssub.s32 %s30, 2
      // Predicated region
      $region125: #{clip_image_encoder_forward.1} parent=123 // pred_check
        %p2069 = pneg %p568
      $region126: #{clip_image_encoder_forward.1} parent=123 // pred_check_branch
        %2071 = sbr.rel (%p2069) target = $region128
      $region127: #{clip_image_encoder_forward.1} parent=123 // pred_region
        %p2072 = scmp.lt.s32.totalorder %s36, 1
        %s2073 = scalar_select %p2072, %s36, 1
        %s2074 = scalar_lea.vmem %s24, %s2073
      $region128: #{clip_image_encoder_forward.1} parent=123 // pred_fallthru
        _
    $region124: #{clip_image_encoder_forward.1} parent=5 // pred_fallthru
      _
  $region6: #{clip_image_encoder_forward.1} parent=0 // loop_footer
    %s34 = sadd.s32 1, %s30
  $region7: #{clip_image_encoder_forward.1} parent=0 // loop_footer_branch
    %29 = sbr.rel target = $region3
  $region8: #{clip_image_encoder_forward.1} parent=0 // loop_exit
    _

</llo_original>
